<compile_context>
chip_gen: v7x
topology: tpu7x:2x2x1
jax: 0.10.0
libtpu: 0.0.40
codegen_flags: <defaults>
</compile_context>

<pallas_src>
import functools

import jax
import jax.numpy as jnp
import numpy as np
from jax.experimental import pallas as pl

# ----------------------------- config -----------------------------
ELMO_DIM = 1024      # fixed by the module (self.input_size = 1024)
INPUT_SIZE = 128     # nn.Linear(1024, input_size) target dim
HIDDEN = 32          # hidden_size
N_LAYERS = 2
N_OUTPUTS = 1
T = 8                # max sequence length
B = 4                # batch


# ----------------------- fused Pallas kernel -----------------------
def _fused_kernel(lens_ref, emb_ref, projw_ref, projb_ref,
                  wih0_ref, bih0_ref, whh0_ref, bhn0_ref,
                  wih1_ref, bih1_ref, whh1_ref, bhn1_ref,
                  linw2_ref, linb_ref,
                  out_ref, hidden_ref, *, T, B, H):
    f32 = jnp.float32
    H2, H6 = 2 * H, 6 * H
    lens = lens_ref[...]                                       # (B, 1) int32

    # ---- lane-direction selectors and per-step masks (hoisted, off the
    # ---- recurrence critical path; computed ONCE at full (B,2H) width) ----
    lane2 = jax.lax.broadcasted_iota(jnp.int32, (1, H2), 1)
    fwd2 = lane2 < H                                            # fwd lanes of a (.,2H) slab
    lane6 = jax.lax.broadcasted_iota(jnp.int32, (1, H6), 1)
    fwd6 = (lane6 % H2) < H                                     # fwd lanes of interleaved gates

    mask_cat, keep_cat, onehot_cat = [], [], []
    for s in range(T):
        # fwd half looks at timestep s, bwd half at timestep T-1-s
        tstep = jnp.where(fwd2, s, T - 1 - s)                   # (1, 2H) int32
        m = (lens > tstep).astype(f32)                          # (B, 2H): 1 iff t < length
        mask_cat.append(m)
        keep_cat.append(jnp.where(fwd2, 1.0 - m, 0.0))          # fwd freezes, bwd stays 0
        onehot_cat.append((lens == tstep + 1).astype(f32))      # 1 iff t == length-1

    # ---- ELMo -> input_size projection: ONE batched matmul (bf16 MXU) ----
    x_flat = (jnp.dot(emb_ref[...], projw_ref[...], preferred_element_type=f32)
              + projb_ref[...])                                 # (T*B, 128) f32

    def run_layer(x_in, wih_ref, bih_ref, whh_ref, bhn_ref):
        whh = whh_ref[...]                                      # (2H, 6H) block-diagonal
        bhn = bhn_ref[...]                                      # (1, 2H) [b_hn_f | b_hn_b]
        # batched input-to-hidden gates for ALL timesteps, both directions
        gx_flat = (jnp.dot(x_in, wih_ref[...], preferred_element_type=f32)
                   + bih_ref[...])                              # (T*B, 6H)
        # per step: fwd lanes from timestep s, bwd lanes from timestep T-1-s
        gx_steps = []
        for s in range(T):
            gf = gx_flat[s * B:(s + 1) * B, :]                  # 8-row aligned slices
            gb = gx_flat[(T - 1 - s) * B:(T - s) * B, :]
            gx_steps.append(jnp.where(fwd6, gf, gb))            # (B, 6H)

        h = jnp.zeros((B, H2), f32)                             # [h_fwd | h_bwd], h0 = 0
        outs = [None] * T
        for s in range(T):                                      # unrolled recurrence
            gh = jnp.dot(h, whh, preferred_element_type=f32)    # ONE MXU push per step
            gx = gx_steps[s]
            r = jax.nn.sigmoid(gx[:, 0:H2] + gh[:, 0:H2])
            z = jax.nn.sigmoid(gx[:, H2:2 * H2] + gh[:, H2:2 * H2])
            n = jnp.tanh(gx[:, 2 * H2:3 * H2] + r * (gh[:, 2 * H2:3 * H2] + bhn))
            hc = (1.0 - z) * n + z * h
            o = mask_cat[s] * hc                                # padded positions -> 0
            h = o + keep_cat[s] * h                             # fwd freeze / bwd masked
            outs[s] = o
        return outs, h

    layer_refs = ((wih0_ref, bih0_ref, whh0_ref, bhn0_ref),
                  (wih1_ref, bih1_ref, whh1_ref, bhn1_ref))
    outs = None
    for l, refs in enumerate(layer_refs):
        outs, hfin = run_layer(x_flat, *refs)
        hidden_ref[2 * l] = hfin[:, 0:H]                        # final hidden, fwd
        hidden_ref[2 * l + 1] = hfin[:, H:H2]                   # final hidden, bwd
        if l + 1 < len(layer_refs):
            # next-layer input per timestep t = [fwd(t) | bwd(t)];
            # bwd(t) lives in recurrence step T-1-t.  Lane select + one
            # aligned sublane concat (replaces 8 lane concats).
            # TODO(synk): nn.GRU inter-layer dropout is train-time only; no-op here.
            x_flat = jnp.concatenate(
                [jnp.where(fwd2, outs[t], outs[T - 1 - t]) for t in range(T)],
                axis=0)                                         # (T*B, 2H)

    # gather outputs at t = length-1 (one-hot sum), fwd+bwd summed via the
    # duplicated (1,2H) linear weight, then the final nn.Linear epilogue.
    acc = jnp.zeros((B, H2), f32)
    for s in range(T):
        acc = acc + onehot_cat[s] * outs[s]
    out_ref[...] = (jnp.sum(acc * linw2_ref[...], axis=1, keepdims=True)
                    + linb_ref[...])                            # (B, 1)


# --------------------- host-side weight prep ------------------------
def _prep_layer(params, layer):
    """Interleaved-gate packing for one bidirectional GRU layer:
       W_ih -> (d_in, 6H) cols [r_f r_b z_f z_b n_f n_b],
       folded b_ih (+ b_hr, b_hz) -> (1, 6H),
       block-diagonal W_hh -> (2H, 6H),  b_hn -> (1, 2H)."""
    H = HIDDEN
    w = [params[f'w_ih_l{layer}_d{d}'].astype(jnp.float32) for d in range(2)]   # (3H, d_in)
    bi = [params[f'b_ih_l{layer}_d{d}'].astype(jnp.float32) for d in range(2)]  # (3H,)
    u = [params[f'w_hh_l{layer}_d{d}'].astype(jnp.float32) for d in range(2)]   # (3H, H)
    bh = [params[f'b_hh_l{layer}_d{d}'].astype(jnp.float32) for d in range(2)]  # (3H,)

    def g(a, i):                       # gate block i (r/z/n) of a (3H, .) matrix, transposed
        return a[i * H:(i + 1) * H, :].T

    wih = jnp.concatenate([g(w[0], 0), g(w[1], 0), g(w[0], 1), g(w[1], 1),
                           g(w[0], 2), g(w[1], 2)], axis=1)                      # (d_in, 6H)
    bih = jnp.concatenate([bi[0][0:H] + bh[0][0:H], bi[1][0:H] + bh[1][0:H],
                           bi[0][H:2 * H] + bh[0][H:2 * H],
                           bi[1][H:2 * H] + bh[1][H:2 * H],
                           bi[0][2 * H:], bi[1][2 * H:]]).reshape(1, 6 * H)
    z = jnp.zeros((H, H), jnp.float32)
    whh = jnp.concatenate([
        jnp.concatenate([g(u[0], 0), z, g(u[0], 1), z, g(u[0], 2), z], axis=1),
        jnp.concatenate([z, g(u[1], 0), z, g(u[1], 1), z, g(u[1], 2)], axis=1)],
        axis=0)                                                                  # (2H, 6H)
    bhn = jnp.concatenate([bh[0][2 * H:], bh[1][2 * H:]]).reshape(1, 2 * H)
    return wih, bih, whh, bhn


# --------------------------- forward --------------------------------
def embedding_gru_forward(embedded, lengths, params):
    # TODO(synk): batch_to_ids + AllenNLP ELMo have no Pallas equivalent; the
    # kernel starts from the (T, B, 1024) ELMo representation the PyTorch
    # module calls `embedded` (already transposed to seq-major).
    Tt, Bb, E = embedded.shape
    H = HIDDEN

    # Pad batch to the f32 sublane tile (8): aligned per-step row slices and
    # full vreg occupancy.  Pad rows get length 0 and are fully masked.
    Bp = ((Bb + 7) // 8) * 8
    lengths_i = lengths.astype(jnp.int32)
    if Bp != Bb:
        embedded = jnp.pad(embedded, ((0, 0), (0, Bp - Bb), (0, 0)))
        lengths_i = jnp.pad(lengths_i, (0, Bp - Bb))

    emb_flat = embedded.reshape(Tt * Bp, E).astype(jnp.bfloat16)     # (T*B, 1024)
    projw_t = params['proj_w'].T.astype(jnp.bfloat16)                # (1024, 128)
    projb = params['proj_b'].reshape(1, INPUT_SIZE).astype(jnp.float32)
    lens_col = lengths_i.reshape(Bp, 1)                              # (B, 1) int32
    wih0, bih0, whh0, bhn0 = _prep_layer(params, 0)
    wih1, bih1, whh1, bhn1 = _prep_layer(params, 1)
    lin_w = params['lin_w'].reshape(N_OUTPUTS, H).astype(jnp.float32)
    linw2 = jnp.concatenate([lin_w, lin_w], axis=1)                  # (1, 2H): fwd+bwd sum folded
    linb = params['lin_b'].reshape(1, N_OUTPUTS).astype(jnp.float32)

    out, hidden = pl.pallas_call(
        functools.partial(_fused_kernel, T=Tt, B=Bp, H=H),
        out_shape=[jax.ShapeDtypeStruct((Bp, 1), jnp.float32),
                   jax.ShapeDtypeStruct((2 * N_LAYERS, Bp, H), jnp.float32)],
    )(lens_col, emb_flat, projw_t, projb,
      wih0, bih0, whh0, bhn0, wih1, bih1, whh1, bhn1, linw2, linb)

    return jnp.squeeze(out[:Bb]), hidden[:, :Bb, :]   # ((B,), (2*n_layers, B, H))


# --------------------- parameters (deterministic) ------------------
def init_params(key):
    def u(k, shape, fan_in):
        bound = 1.0 / float(np.sqrt(fan_in))
        return jax.random.uniform(k, shape, jnp.float32, -bound, bound)

    keys = iter(jax.random.split(key, 64))
    p = {}
    p['proj_w'] = u(next(keys), (INPUT_SIZE, ELMO_DIM), ELMO_DIM)
    p['proj_b'] = u(next(keys), (INPUT_SIZE,), ELMO_DIM)
    for l in range(N_LAYERS):
        d_in = INPUT_SIZE if l == 0 else 2 * HIDDEN
        for d in range(2):
            p[f'w_ih_l{l}_d{d}'] = u(next(keys), (3 * HIDDEN, d_in), HIDDEN)
            p[f'b_ih_l{l}_d{d}'] = u(next(keys), (3 * HIDDEN,), HIDDEN)
            p[f'w_hh_l{l}_d{d}'] = u(next(keys), (3 * HIDDEN, HIDDEN), HIDDEN)
            p[f'b_hh_l{l}_d{d}'] = u(next(keys), (3 * HIDDEN,), HIDDEN)
    p['lin_w'] = u(next(keys), (N_OUTPUTS, HIDDEN), HIDDEN)
    p['lin_b'] = u(next(keys), (N_OUTPUTS,), HIDDEN)
    return p


# ----------------------- pure-JAX reference --------------------------
def _ref_gru_direction(x, lengths, w_ih, b_ih, w_hh, b_hh, reverse):
    Tt, Bb, _ = x.shape
    H = HIDDEN
    mask = (jnp.arange(Tt)[:, None] < lengths[None, :]).astype(jnp.float32)
    mask = mask[:, :, None]

    def cell(h, inp):
        x_t, m = inp
        gi = x_t @ w_ih.T + b_ih
        gh = h @ w_hh.T + b_hh
        ir, iz, inn = gi[:, :H], gi[:, H:2 * H], gi[:, 2 * H:]
        hr, hz, hn = gh[:, :H], gh[:, H:2 * H], gh[:, 2 * H:]
        r = jax.nn.sigmoid(ir + hr)
        z = jax.nn.sigmoid(iz + hz)
        n = jnp.tanh(inn + r * hn)
        h_new = (1.0 - z) * n + z * h
        h_upd = h_new * m if reverse else m * h_new + (1.0 - m) * h
        return h_upd, h_upd * m

    xs = (x[::-1], mask[::-1]) if reverse else (x, mask)
    h0 = jnp.zeros((Bb, H), jnp.float32)
    h_fin, outs = jax.lax.scan(cell, h0, xs)
    if reverse:
        outs = outs[::-1]
    return outs, h_fin


def reference_forward(embedded, lengths, params):
    Tt, Bb, E = embedded.shape
    H = HIDDEN
    proj = (embedded.reshape(Tt * Bb, E) @ params['proj_w'].T + params['proj_b'])
    layer_in = proj.reshape(Tt, Bb, INPUT_SIZE)
    h_finals = []
    for l in range(N_LAYERS):
        dir_outs = []
        for d, reverse in enumerate((False, True)):
            outs, hfin = _ref_gru_direction(
                layer_in, lengths,
                params[f'w_ih_l{l}_d{d}'], params[f'b_ih_l{l}_d{d}'],
                params[f'w_hh_l{l}_d{d}'], params[f'b_hh_l{l}_d{d}'], reverse)
            dir_outs.append(outs)
            h_finals.append(hfin)
        layer_in = jnp.concatenate(dir_outs, axis=-1)
    summed = layer_in[:, :, :H] + layer_in[:, :, H:]
    last = summed[lengths - 1, jnp.arange(Bb), :]
    final = last @ params['lin_w'].T + params['lin_b']
    return jnp.squeeze(final), jnp.stack(h_finals, axis=0)


# ------------------------------ main ---------------------------------
if __name__ == "__main__":
    key = jax.random.PRNGKey(0)
    k_emb, k_par = jax.random.split(key)

    embedded = jax.random.normal(k_emb, (T, B, ELMO_DIM), jnp.float32)
    # pack_padded_sequence default requires descending lengths (all >= 1)
    lengths = jnp.array([8, 6, 5, 3], dtype=jnp.int32)
    params = init_params(k_par)

    fwd = jax.jit(embedding_gru_forward)
    out, hidden = fwd(embedded, lengths, params)
    out = jax.block_until_ready(out)
    hidden = jax.block_until_ready(hidden)

    assert out.shape == (B,)
    assert hidden.shape == (2 * N_LAYERS, B, HIDDEN)
    assert bool(jnp.all(jnp.isfinite(out)))

    ref_out, ref_hidden = reference_forward(embedded, lengths, params)
    np.testing.assert_allclose(np.asarray(out), np.asarray(ref_out),
                               rtol=5e-2, atol=5e-2)
    np.testing.assert_allclose(np.asarray(hidden), np.asarray(ref_hidden),
                               rtol=5e-2, atol=5e-2)

    print("KERNEL_OK")
</pallas_src>

<mosaic_0001>
module attributes {stable_mosaic.version = 11 : i64} {
  func.func @_fused_kernel(%arg0: memref<8x1xi32, #tpu.memory_space<vmem>>, %arg1: memref<64x1024xbf16, #tpu.memory_space<vmem>>, %arg2: memref<1024x128xbf16, #tpu.memory_space<vmem>>, %arg3: memref<1x128xf32, #tpu.memory_space<vmem>>, %arg4: memref<128x192xf32, #tpu.memory_space<vmem>>, %arg5: memref<1x192xf32, #tpu.memory_space<vmem>>, %arg6: memref<64x192xf32, #tpu.memory_space<vmem>>, %arg7: memref<1x64xf32, #tpu.memory_space<vmem>>, %arg8: memref<64x192xf32, #tpu.memory_space<vmem>>, %arg9: memref<1x192xf32, #tpu.memory_space<vmem>>, %arg10: memref<64x192xf32, #tpu.memory_space<vmem>>, %arg11: memref<1x64xf32, #tpu.memory_space<vmem>>, %arg12: memref<1x64xf32, #tpu.memory_space<vmem>>, %arg13: memref<1x1xf32, #tpu.memory_space<vmem>>, %arg14: memref<8x1xf32, #tpu.memory_space<vmem>>, %arg15: memref<4x8x32xf32, #tpu.memory_space<vmem>>) attributes {dimension_semantics = [], scalar_prefetch = 0 : i64, scratch_operands = 0 : i64, tpu.core_type = #tpu.core_type<tc>} {
    %c0 = arith.constant 0 : index
    %c0_0 = arith.constant 0 : index
    %0 = vector.load %arg0[%c0, %c0_0] : memref<8x1xi32, #tpu.memory_space<vmem>>, vector<8x1xi32>
    %1 = tpu.iota {dimensions = array<i32: 1>} : vector<1x64xi32>
    %c32_i32 = arith.constant 32 : i32
    %2 = vector.broadcast %c32_i32 : i32 to vector<1x64xi32>
    %3 = arith.cmpi slt, %1, %2 : vector<1x64xi32>
    %4 = tpu.iota {dimensions = array<i32: 1>} : vector<1x192xi32>
    %c64_i32 = arith.constant 64 : i32
    %c0_i32 = arith.constant 0 : i32
    %5 = arith.cmpi eq, %c64_i32, %c0_i32 : i32
    %c1_i32 = arith.constant 1 : i32
    %6 = arith.select %5, %c1_i32, %c64_i32 : i32
    %7 = vector.broadcast %6 : i32 to vector<1x192xi32>
    %8 = arith.remsi %4, %7 : vector<1x192xi32>
    %c0_i32_1 = arith.constant 0 : i32
    %9 = vector.broadcast %c0_i32_1 : i32 to vector<1x192xi32>
    %10 = arith.cmpi ne, %8, %9 : vector<1x192xi32>
    %c0_i32_2 = arith.constant 0 : i32
    %11 = vector.broadcast %c0_i32_2 : i32 to vector<1x192xi32>
    %12 = arith.cmpi slt, %8, %11 : vector<1x192xi32>
    %c0_i32_3 = arith.constant 0 : i32
    %13 = arith.cmpi slt, %6, %c0_i32_3 : i32
    %14 = vector.broadcast %13 : i1 to vector<1x192xi1>
    %15 = vector.broadcast %14 : vector<1x192xi1> to vector<1x192xi1>
    %16 = arith.xori %12, %15 : vector<1x192xi1>
    %17 = arith.andi %16, %10 : vector<1x192xi1>
    %18 = vector.broadcast %6 : i32 to vector<1x192xi32>
    %19 = arith.addi %8, %18 : vector<1x192xi32>
    %20 = arith.select %17, %19, %8 : vector<1x192xi1>, vector<1x192xi32>
    %c32_i32_4 = arith.constant 32 : i32
    %21 = vector.broadcast %c32_i32_4 : i32 to vector<1x192xi32>
    %22 = arith.cmpi slt, %20, %21 : vector<1x192xi32>
    %c0_i32_5 = arith.constant 0 : i32
    %c7_i32 = arith.constant 7 : i32
    %23 = vector.broadcast %c0_i32_5 : i32 to vector<1x64xi32>
    %24 = vector.broadcast %c7_i32 : i32 to vector<1x64xi32>
    %25 = arith.select %3, %23, %24 : vector<1x64xi1>, vector<1x64xi32>
    %26 = vector.broadcast %0 : vector<8x1xi32> to vector<8x64xi32>
    %27 = vector.broadcast %25 : vector<1x64xi32> to vector<8x64xi32>
    %28 = arith.cmpi sgt, %26, %27 : vector<8x64xi32>
    %29 = arith.extui %28 : vector<8x64xi1> to vector<8x64xi32>
    %30 = arith.sitofp %29 : vector<8x64xi32> to vector<8x64xf32>
    %cst = arith.constant 1.000000e+00 : f32
    %31 = vector.broadcast %cst : f32 to vector<8x64xf32>
    %32 = arith.subf %31, %30 : vector<8x64xf32>
    %cst_6 = arith.constant 0.000000e+00 : f32
    %33 = vector.shape_cast %3 : vector<1x64xi1> to vector<1x64xi1>
    %34 = vector.broadcast %33 : vector<1x64xi1> to vector<8x64xi1>
    %35 = vector.broadcast %cst_6 : f32 to vector<8x64xf32>
    %36 = arith.select %34, %32, %35 : vector<8x64xi1>, vector<8x64xf32>
    %c1_i32_7 = arith.constant 1 : i32
    %37 = vector.broadcast %c1_i32_7 : i32 to vector<1x64xi32>
    %38 = arith.addi %25, %37 : vector<1x64xi32>
    %39 = vector.broadcast %0 : vector<8x1xi32> to vector<8x64xi32>
    %40 = vector.broadcast %38 : vector<1x64xi32> to vector<8x64xi32>
    %41 = arith.cmpi eq, %39, %40 : vector<8x64xi32>
    %42 = arith.extui %41 : vector<8x64xi1> to vector<8x64xi32>
    %43 = arith.sitofp %42 : vector<8x64xi32> to vector<8x64xf32>
    %c1_i32_8 = arith.constant 1 : i32
    %c6_i32 = arith.constant 6 : i32
    %44 = vector.broadcast %c1_i32_8 : i32 to vector<1x64xi32>
    %45 = vector.broadcast %c6_i32 : i32 to vector<1x64xi32>
    %46 = arith.select %3, %44, %45 : vector<1x64xi1>, vector<1x64xi32>
    %47 = vector.broadcast %0 : vector<8x1xi32> to vector<8x64xi32>
    %48 = vector.broadcast %46 : vector<1x64xi32> to vector<8x64xi32>
    %49 = arith.cmpi sgt, %47, %48 : vector<8x64xi32>
    %50 = arith.extui %49 : vector<8x64xi1> to vector<8x64xi32>
    %51 = arith.sitofp %50 : vector<8x64xi32> to vector<8x64xf32>
    %cst_9 = arith.constant 1.000000e+00 : f32
    %52 = vector.broadcast %cst_9 : f32 to vector<8x64xf32>
    %53 = arith.subf %52, %51 : vector<8x64xf32>
    %cst_10 = arith.constant 0.000000e+00 : f32
    %54 = vector.shape_cast %3 : vector<1x64xi1> to vector<1x64xi1>
    %55 = vector.broadcast %54 : vector<1x64xi1> to vector<8x64xi1>
    %56 = vector.broadcast %cst_10 : f32 to vector<8x64xf32>
    %57 = arith.select %55, %53, %56 : vector<8x64xi1>, vector<8x64xf32>
    %c1_i32_11 = arith.constant 1 : i32
    %58 = vector.broadcast %c1_i32_11 : i32 to vector<1x64xi32>
    %59 = arith.addi %46, %58 : vector<1x64xi32>
    %60 = vector.broadcast %0 : vector<8x1xi32> to vector<8x64xi32>
    %61 = vector.broadcast %59 : vector<1x64xi32> to vector<8x64xi32>
    %62 = arith.cmpi eq, %60, %61 : vector<8x64xi32>
    %63 = arith.extui %62 : vector<8x64xi1> to vector<8x64xi32>
    %64 = arith.sitofp %63 : vector<8x64xi32> to vector<8x64xf32>
    %c2_i32 = arith.constant 2 : i32
    %c5_i32 = arith.constant 5 : i32
    %65 = vector.broadcast %c2_i32 : i32 to vector<1x64xi32>
    %66 = vector.broadcast %c5_i32 : i32 to vector<1x64xi32>
    %67 = arith.select %3, %65, %66 : vector<1x64xi1>, vector<1x64xi32>
    %68 = vector.broadcast %0 : vector<8x1xi32> to vector<8x64xi32>
    %69 = vector.broadcast %67 : vector<1x64xi32> to vector<8x64xi32>
    %70 = arith.cmpi sgt, %68, %69 : vector<8x64xi32>
    %71 = arith.extui %70 : vector<8x64xi1> to vector<8x64xi32>
    %72 = arith.sitofp %71 : vector<8x64xi32> to vector<8x64xf32>
    %cst_12 = arith.constant 1.000000e+00 : f32
    %73 = vector.broadcast %cst_12 : f32 to vector<8x64xf32>
    %74 = arith.subf %73, %72 : vector<8x64xf32>
    %cst_13 = arith.constant 0.000000e+00 : f32
    %75 = vector.shape_cast %3 : vector<1x64xi1> to vector<1x64xi1>
    %76 = vector.broadcast %75 : vector<1x64xi1> to vector<8x64xi1>
    %77 = vector.broadcast %cst_13 : f32 to vector<8x64xf32>
    %78 = arith.select %76, %74, %77 : vector<8x64xi1>, vector<8x64xf32>
    %c1_i32_14 = arith.constant 1 : i32
    %79 = vector.broadcast %c1_i32_14 : i32 to vector<1x64xi32>
    %80 = arith.addi %67, %79 : vector<1x64xi32>
    %81 = vector.broadcast %0 : vector<8x1xi32> to vector<8x64xi32>
    %82 = vector.broadcast %80 : vector<1x64xi32> to vector<8x64xi32>
    %83 = arith.cmpi eq, %81, %82 : vector<8x64xi32>
    %84 = arith.extui %83 : vector<8x64xi1> to vector<8x64xi32>
    %85 = arith.sitofp %84 : vector<8x64xi32> to vector<8x64xf32>
    %c3_i32 = arith.constant 3 : i32
    %c4_i32 = arith.constant 4 : i32
    %86 = vector.broadcast %c3_i32 : i32 to vector<1x64xi32>
    %87 = vector.broadcast %c4_i32 : i32 to vector<1x64xi32>
    %88 = arith.select %3, %86, %87 : vector<1x64xi1>, vector<1x64xi32>
    %89 = vector.broadcast %0 : vector<8x1xi32> to vector<8x64xi32>
    %90 = vector.broadcast %88 : vector<1x64xi32> to vector<8x64xi32>
    %91 = arith.cmpi sgt, %89, %90 : vector<8x64xi32>
    %92 = arith.extui %91 : vector<8x64xi1> to vector<8x64xi32>
    %93 = arith.sitofp %92 : vector<8x64xi32> to vector<8x64xf32>
    %cst_15 = arith.constant 1.000000e+00 : f32
    %94 = vector.broadcast %cst_15 : f32 to vector<8x64xf32>
    %95 = arith.subf %94, %93 : vector<8x64xf32>
    %cst_16 = arith.constant 0.000000e+00 : f32
    %96 = vector.shape_cast %3 : vector<1x64xi1> to vector<1x64xi1>
    %97 = vector.broadcast %96 : vector<1x64xi1> to vector<8x64xi1>
    %98 = vector.broadcast %cst_16 : f32 to vector<8x64xf32>
    %99 = arith.select %97, %95, %98 : vector<8x64xi1>, vector<8x64xf32>
    %c1_i32_17 = arith.constant 1 : i32
    %100 = vector.broadcast %c1_i32_17 : i32 to vector<1x64xi32>
    %101 = arith.addi %88, %100 : vector<1x64xi32>
    %102 = vector.broadcast %0 : vector<8x1xi32> to vector<8x64xi32>
    %103 = vector.broadcast %101 : vector<1x64xi32> to vector<8x64xi32>
    %104 = arith.cmpi eq, %102, %103 : vector<8x64xi32>
    %105 = arith.extui %104 : vector<8x64xi1> to vector<8x64xi32>
    %106 = arith.sitofp %105 : vector<8x64xi32> to vector<8x64xf32>
    %c4_i32_18 = arith.constant 4 : i32
    %c3_i32_19 = arith.constant 3 : i32
    %107 = vector.broadcast %c4_i32_18 : i32 to vector<1x64xi32>
    %108 = vector.broadcast %c3_i32_19 : i32 to vector<1x64xi32>
    %109 = arith.select %3, %107, %108 : vector<1x64xi1>, vector<1x64xi32>
    %110 = vector.broadcast %0 : vector<8x1xi32> to vector<8x64xi32>
    %111 = vector.broadcast %109 : vector<1x64xi32> to vector<8x64xi32>
    %112 = arith.cmpi sgt, %110, %111 : vector<8x64xi32>
    %113 = arith.extui %112 : vector<8x64xi1> to vector<8x64xi32>
    %114 = arith.sitofp %113 : vector<8x64xi32> to vector<8x64xf32>
    %cst_20 = arith.constant 1.000000e+00 : f32
    %115 = vector.broadcast %cst_20 : f32 to vector<8x64xf32>
    %116 = arith.subf %115, %114 : vector<8x64xf32>
    %cst_21 = arith.constant 0.000000e+00 : f32
    %117 = vector.shape_cast %3 : vector<1x64xi1> to vector<1x64xi1>
    %118 = vector.broadcast %117 : vector<1x64xi1> to vector<8x64xi1>
    %119 = vector.broadcast %cst_21 : f32 to vector<8x64xf32>
    %120 = arith.select %118, %116, %119 : vector<8x64xi1>, vector<8x64xf32>
    %c1_i32_22 = arith.constant 1 : i32
    %121 = vector.broadcast %c1_i32_22 : i32 to vector<1x64xi32>
    %122 = arith.addi %109, %121 : vector<1x64xi32>
    %123 = vector.broadcast %0 : vector<8x1xi32> to vector<8x64xi32>
    %124 = vector.broadcast %122 : vector<1x64xi32> to vector<8x64xi32>
    %125 = arith.cmpi eq, %123, %124 : vector<8x64xi32>
    %126 = arith.extui %125 : vector<8x64xi1> to vector<8x64xi32>
    %127 = arith.sitofp %126 : vector<8x64xi32> to vector<8x64xf32>
    %c5_i32_23 = arith.constant 5 : i32
    %c2_i32_24 = arith.constant 2 : i32
    %128 = vector.broadcast %c5_i32_23 : i32 to vector<1x64xi32>
    %129 = vector.broadcast %c2_i32_24 : i32 to vector<1x64xi32>
    %130 = arith.select %3, %128, %129 : vector<1x64xi1>, vector<1x64xi32>
    %131 = vector.broadcast %0 : vector<8x1xi32> to vector<8x64xi32>
    %132 = vector.broadcast %130 : vector<1x64xi32> to vector<8x64xi32>
    %133 = arith.cmpi sgt, %131, %132 : vector<8x64xi32>
    %134 = arith.extui %133 : vector<8x64xi1> to vector<8x64xi32>
    %135 = arith.sitofp %134 : vector<8x64xi32> to vector<8x64xf32>
    %cst_25 = arith.constant 1.000000e+00 : f32
    %136 = vector.broadcast %cst_25 : f32 to vector<8x64xf32>
    %137 = arith.subf %136, %135 : vector<8x64xf32>
    %cst_26 = arith.constant 0.000000e+00 : f32
    %138 = vector.shape_cast %3 : vector<1x64xi1> to vector<1x64xi1>
    %139 = vector.broadcast %138 : vector<1x64xi1> to vector<8x64xi1>
    %140 = vector.broadcast %cst_26 : f32 to vector<8x64xf32>
    %141 = arith.select %139, %137, %140 : vector<8x64xi1>, vector<8x64xf32>
    %c1_i32_27 = arith.constant 1 : i32
    %142 = vector.broadcast %c1_i32_27 : i32 to vector<1x64xi32>
    %143 = arith.addi %130, %142 : vector<1x64xi32>
    %144 = vector.broadcast %0 : vector<8x1xi32> to vector<8x64xi32>
    %145 = vector.broadcast %143 : vector<1x64xi32> to vector<8x64xi32>
    %146 = arith.cmpi eq, %144, %145 : vector<8x64xi32>
    %147 = arith.extui %146 : vector<8x64xi1> to vector<8x64xi32>
    %148 = arith.sitofp %147 : vector<8x64xi32> to vector<8x64xf32>
    %c6_i32_28 = arith.constant 6 : i32
    %c1_i32_29 = arith.constant 1 : i32
    %149 = vector.broadcast %c6_i32_28 : i32 to vector<1x64xi32>
    %150 = vector.broadcast %c1_i32_29 : i32 to vector<1x64xi32>
    %151 = arith.select %3, %149, %150 : vector<1x64xi1>, vector<1x64xi32>
    %152 = vector.broadcast %0 : vector<8x1xi32> to vector<8x64xi32>
    %153 = vector.broadcast %151 : vector<1x64xi32> to vector<8x64xi32>
    %154 = arith.cmpi sgt, %152, %153 : vector<8x64xi32>
    %155 = arith.extui %154 : vector<8x64xi1> to vector<8x64xi32>
    %156 = arith.sitofp %155 : vector<8x64xi32> to vector<8x64xf32>
    %cst_30 = arith.constant 1.000000e+00 : f32
    %157 = vector.broadcast %cst_30 : f32 to vector<8x64xf32>
    %158 = arith.subf %157, %156 : vector<8x64xf32>
    %cst_31 = arith.constant 0.000000e+00 : f32
    %159 = vector.shape_cast %3 : vector<1x64xi1> to vector<1x64xi1>
    %160 = vector.broadcast %159 : vector<1x64xi1> to vector<8x64xi1>
    %161 = vector.broadcast %cst_31 : f32 to vector<8x64xf32>
    %162 = arith.select %160, %158, %161 : vector<8x64xi1>, vector<8x64xf32>
    %c1_i32_32 = arith.constant 1 : i32
    %163 = vector.broadcast %c1_i32_32 : i32 to vector<1x64xi32>
    %164 = arith.addi %151, %163 : vector<1x64xi32>
    %165 = vector.broadcast %0 : vector<8x1xi32> to vector<8x64xi32>
    %166 = vector.broadcast %164 : vector<1x64xi32> to vector<8x64xi32>
    %167 = arith.cmpi eq, %165, %166 : vector<8x64xi32>
    %168 = arith.extui %167 : vector<8x64xi1> to vector<8x64xi32>
    %169 = arith.sitofp %168 : vector<8x64xi32> to vector<8x64xf32>
    %c7_i32_33 = arith.constant 7 : i32
    %c0_i32_34 = arith.constant 0 : i32
    %170 = vector.broadcast %c7_i32_33 : i32 to vector<1x64xi32>
    %171 = vector.broadcast %c0_i32_34 : i32 to vector<1x64xi32>
    %172 = arith.select %3, %170, %171 : vector<1x64xi1>, vector<1x64xi32>
    %173 = vector.broadcast %0 : vector<8x1xi32> to vector<8x64xi32>
    %174 = vector.broadcast %172 : vector<1x64xi32> to vector<8x64xi32>
    %175 = arith.cmpi sgt, %173, %174 : vector<8x64xi32>
    %176 = arith.extui %175 : vector<8x64xi1> to vector<8x64xi32>
    %177 = arith.sitofp %176 : vector<8x64xi32> to vector<8x64xf32>
    %cst_35 = arith.constant 1.000000e+00 : f32
    %178 = vector.broadcast %cst_35 : f32 to vector<8x64xf32>
    %179 = arith.subf %178, %177 : vector<8x64xf32>
    %cst_36 = arith.constant 0.000000e+00 : f32
    %180 = vector.shape_cast %3 : vector<1x64xi1> to vector<1x64xi1>
    %181 = vector.broadcast %180 : vector<1x64xi1> to vector<8x64xi1>
    %182 = vector.broadcast %cst_36 : f32 to vector<8x64xf32>
    %183 = arith.select %181, %179, %182 : vector<8x64xi1>, vector<8x64xf32>
    %c1_i32_37 = arith.constant 1 : i32
    %184 = vector.broadcast %c1_i32_37 : i32 to vector<1x64xi32>
    %185 = arith.addi %172, %184 : vector<1x64xi32>
    %186 = vector.broadcast %0 : vector<8x1xi32> to vector<8x64xi32>
    %187 = vector.broadcast %185 : vector<1x64xi32> to vector<8x64xi32>
    %188 = arith.cmpi eq, %186, %187 : vector<8x64xi32>
    %189 = arith.extui %188 : vector<8x64xi1> to vector<8x64xi32>
    %190 = arith.sitofp %189 : vector<8x64xi32> to vector<8x64xf32>
    %c0_38 = arith.constant 0 : index
    %c0_39 = arith.constant 0 : index
    %191 = vector.load %arg1[%c0_38, %c0_39] : memref<64x1024xbf16, #tpu.memory_space<vmem>>, vector<64x1024xbf16>
    %c0_40 = arith.constant 0 : index
    %c0_41 = arith.constant 0 : index
    %192 = vector.load %arg2[%c0_40, %c0_41] : memref<1024x128xbf16, #tpu.memory_space<vmem>>, vector<1024x128xbf16>
    %cst_42 = arith.constant dense<0.000000e+00> : vector<64x128xf32>
    %193 = tpu.matmul %191, %192, %cst_42 {dimension_numbers = #tpu.dot_dimension_numbers<[1], [0], [0], [1], [0, 0, 1, 1], [], []>} : vector<64x1024xbf16>, vector<1024x128xbf16>, vector<64x128xf32> -> vector<64x128xf32>
    %c0_43 = arith.constant 0 : index
    %c0_44 = arith.constant 0 : index
    %194 = vector.load %arg3[%c0_43, %c0_44] : memref<1x128xf32, #tpu.memory_space<vmem>>, vector<1x128xf32>
    %195 = vector.broadcast %194 : vector<1x128xf32> to vector<64x128xf32>
    %196 = arith.addf %193, %195 : vector<64x128xf32>
    %c0_45 = arith.constant 0 : index
    %c0_46 = arith.constant 0 : index
    %197 = vector.load %arg6[%c0_45, %c0_46] : memref<64x192xf32, #tpu.memory_space<vmem>>, vector<64x192xf32>
    %c0_47 = arith.constant 0 : index
    %c0_48 = arith.constant 0 : index
    %198 = vector.load %arg7[%c0_47, %c0_48] : memref<1x64xf32, #tpu.memory_space<vmem>>, vector<1x64xf32>
    %c0_49 = arith.constant 0 : index
    %c0_50 = arith.constant 0 : index
    %199 = vector.load %arg4[%c0_49, %c0_50] : memref<128x192xf32, #tpu.memory_space<vmem>>, vector<128x192xf32>
    %cst_51 = arith.constant dense<0.000000e+00> : vector<64x192xf32>
    %200 = tpu.matmul %196, %199, %cst_51 {dimension_numbers = #tpu.dot_dimension_numbers<[1], [0], [0], [1], [0, 0, 1, 1], [], []>} : vector<64x128xf32>, vector<128x192xf32>, vector<64x192xf32> -> vector<64x192xf32>
    %c0_52 = arith.constant 0 : index
    %c0_53 = arith.constant 0 : index
    %201 = vector.load %arg5[%c0_52, %c0_53] : memref<1x192xf32, #tpu.memory_space<vmem>>, vector<1x192xf32>
    %202 = vector.broadcast %201 : vector<1x192xf32> to vector<64x192xf32>
    %203 = arith.addf %200, %202 : vector<64x192xf32>
    %204 = vector.extract_strided_slice %203 {offsets = [0, 0], sizes = [8, 192], strides = [1, 1]} : vector<64x192xf32> to vector<8x192xf32>
    %205 = vector.extract_strided_slice %203 {offsets = [56, 0], sizes = [8, 192], strides = [1, 1]} : vector<64x192xf32> to vector<8x192xf32>
    %206 = vector.shape_cast %22 : vector<1x192xi1> to vector<1x192xi1>
    %207 = vector.broadcast %206 : vector<1x192xi1> to vector<8x192xi1>
    %208 = arith.select %207, %204, %205 : vector<8x192xi1>, vector<8x192xf32>
    %209 = vector.extract_strided_slice %203 {offsets = [8, 0], sizes = [8, 192], strides = [1, 1]} : vector<64x192xf32> to vector<8x192xf32>
    %210 = vector.extract_strided_slice %203 {offsets = [48, 0], sizes = [8, 192], strides = [1, 1]} : vector<64x192xf32> to vector<8x192xf32>
    %211 = vector.shape_cast %22 : vector<1x192xi1> to vector<1x192xi1>
    %212 = vector.broadcast %211 : vector<1x192xi1> to vector<8x192xi1>
    %213 = arith.select %212, %209, %210 : vector<8x192xi1>, vector<8x192xf32>
    %214 = vector.extract_strided_slice %203 {offsets = [16, 0], sizes = [8, 192], strides = [1, 1]} : vector<64x192xf32> to vector<8x192xf32>
    %215 = vector.extract_strided_slice %203 {offsets = [40, 0], sizes = [8, 192], strides = [1, 1]} : vector<64x192xf32> to vector<8x192xf32>
    %216 = vector.shape_cast %22 : vector<1x192xi1> to vector<1x192xi1>
    %217 = vector.broadcast %216 : vector<1x192xi1> to vector<8x192xi1>
    %218 = arith.select %217, %214, %215 : vector<8x192xi1>, vector<8x192xf32>
    %219 = vector.extract_strided_slice %203 {offsets = [24, 0], sizes = [8, 192], strides = [1, 1]} : vector<64x192xf32> to vector<8x192xf32>
    %220 = vector.extract_strided_slice %203 {offsets = [32, 0], sizes = [8, 192], strides = [1, 1]} : vector<64x192xf32> to vector<8x192xf32>
    %221 = vector.shape_cast %22 : vector<1x192xi1> to vector<1x192xi1>
    %222 = vector.broadcast %221 : vector<1x192xi1> to vector<8x192xi1>
    %223 = arith.select %222, %219, %220 : vector<8x192xi1>, vector<8x192xf32>
    %224 = vector.extract_strided_slice %203 {offsets = [32, 0], sizes = [8, 192], strides = [1, 1]} : vector<64x192xf32> to vector<8x192xf32>
    %225 = vector.extract_strided_slice %203 {offsets = [24, 0], sizes = [8, 192], strides = [1, 1]} : vector<64x192xf32> to vector<8x192xf32>
    %226 = vector.shape_cast %22 : vector<1x192xi1> to vector<1x192xi1>
    %227 = vector.broadcast %226 : vector<1x192xi1> to vector<8x192xi1>
    %228 = arith.select %227, %224, %225 : vector<8x192xi1>, vector<8x192xf32>
    %229 = vector.extract_strided_slice %203 {offsets = [40, 0], sizes = [8, 192], strides = [1, 1]} : vector<64x192xf32> to vector<8x192xf32>
    %230 = vector.extract_strided_slice %203 {offsets = [16, 0], sizes = [8, 192], strides = [1, 1]} : vector<64x192xf32> to vector<8x192xf32>
    %231 = vector.shape_cast %22 : vector<1x192xi1> to vector<1x192xi1>
    %232 = vector.broadcast %231 : vector<1x192xi1> to vector<8x192xi1>
    %233 = arith.select %232, %229, %230 : vector<8x192xi1>, vector<8x192xf32>
    %234 = vector.extract_strided_slice %203 {offsets = [48, 0], sizes = [8, 192], strides = [1, 1]} : vector<64x192xf32> to vector<8x192xf32>
    %235 = vector.extract_strided_slice %203 {offsets = [8, 0], sizes = [8, 192], strides = [1, 1]} : vector<64x192xf32> to vector<8x192xf32>
    %236 = vector.shape_cast %22 : vector<1x192xi1> to vector<1x192xi1>
    %237 = vector.broadcast %236 : vector<1x192xi1> to vector<8x192xi1>
    %238 = arith.select %237, %234, %235 : vector<8x192xi1>, vector<8x192xf32>
    %239 = vector.extract_strided_slice %203 {offsets = [56, 0], sizes = [8, 192], strides = [1, 1]} : vector<64x192xf32> to vector<8x192xf32>
    %240 = vector.extract_strided_slice %203 {offsets = [0, 0], sizes = [8, 192], strides = [1, 1]} : vector<64x192xf32> to vector<8x192xf32>
    %241 = vector.shape_cast %22 : vector<1x192xi1> to vector<1x192xi1>
    %242 = vector.broadcast %241 : vector<1x192xi1> to vector<8x192xi1>
    %243 = arith.select %242, %239, %240 : vector<8x192xi1>, vector<8x192xf32>
    %cst_54 = arith.constant 0.000000e+00 : f32
    %244 = vector.broadcast %cst_54 : f32 to vector<8x64xf32>
    %cst_55 = arith.constant dense<0.000000e+00> : vector<8x192xf32>
    %245 = tpu.matmul %244, %197, %cst_55 {dimension_numbers = #tpu.dot_dimension_numbers<[1], [0], [0], [1], [0, 0, 1, 1], [], []>} : vector<8x64xf32>, vector<64x192xf32>, vector<8x192xf32> -> vector<8x192xf32>
    %246 = vector.extract_strided_slice %208 {offsets = [0, 0], sizes = [8, 64], strides = [1, 1]} : vector<8x192xf32> to vector<8x64xf32>
    %247 = vector.extract_strided_slice %245 {offsets = [0, 0], sizes = [8, 64], strides = [1, 1]} : vector<8x192xf32> to vector<8x64xf32>
    %248 = arith.addf %246, %247 : vector<8x64xf32>
    %249 = arith.negf %248 : vector<8x64xf32>
    %250 = math.exp %249 : vector<8x64xf32>
    %cst_56 = arith.constant 1.000000e+00 : f32
    %251 = vector.broadcast %cst_56 : f32 to vector<8x64xf32>
    %252 = arith.addf %251, %250 : vector<8x64xf32>
    %253 = arith.divf %251, %252 : vector<8x64xf32>
    %254 = vector.extract_strided_slice %208 {offsets = [0, 64], sizes = [8, 64], strides = [1, 1]} : vector<8x192xf32> to vector<8x64xf32>
    %255 = vector.extract_strided_slice %245 {offsets = [0, 64], sizes = [8, 64], strides = [1, 1]} : vector<8x192xf32> to vector<8x64xf32>
    %256 = arith.addf %254, %255 : vector<8x64xf32>
    %257 = arith.negf %256 : vector<8x64xf32>
    %258 = math.exp %257 : vector<8x64xf32>
    %cst_57 = arith.constant 1.000000e+00 : f32
    %259 = vector.broadcast %cst_57 : f32 to vector<8x64xf32>
    %260 = arith.addf %259, %258 : vector<8x64xf32>
    %261 = arith.divf %259, %260 : vector<8x64xf32>
    %262 = vector.extract_strided_slice %208 {offsets = [0, 128], sizes = [8, 64], strides = [1, 1]} : vector<8x192xf32> to vector<8x64xf32>
    %263 = vector.extract_strided_slice %245 {offsets = [0, 128], sizes = [8, 64], strides = [1, 1]} : vector<8x192xf32> to vector<8x64xf32>
    %264 = vector.broadcast %198 : vector<1x64xf32> to vector<8x64xf32>
    %265 = arith.addf %263, %264 : vector<8x64xf32>
    %266 = arith.mulf %253, %265 : vector<8x64xf32>
    %267 = arith.addf %262, %266 : vector<8x64xf32>
    %268 = math.tanh %267 : vector<8x64xf32>
    %cst_58 = arith.constant 1.000000e+00 : f32
    %269 = vector.broadcast %cst_58 : f32 to vector<8x64xf32>
    %270 = arith.subf %269, %261 : vector<8x64xf32>
    %271 = arith.mulf %270, %268 : vector<8x64xf32>
    %272 = arith.mulf %261, %244 : vector<8x64xf32>
    %273 = arith.addf %271, %272 : vector<8x64xf32>
    %274 = arith.mulf %30, %273 : vector<8x64xf32>
    %275 = arith.mulf %36, %244 : vector<8x64xf32>
    %276 = arith.addf %274, %275 : vector<8x64xf32>
    %cst_59 = arith.constant dense<0.000000e+00> : vector<8x192xf32>
    %277 = tpu.matmul %276, %197, %cst_59 {dimension_numbers = #tpu.dot_dimension_numbers<[1], [0], [0], [1], [0, 0, 1, 1], [], []>} : vector<8x64xf32>, vector<64x192xf32>, vector<8x192xf32> -> vector<8x192xf32>
    %278 = vector.extract_strided_slice %213 {offsets = [0, 0], sizes = [8, 64], strides = [1, 1]} : vector<8x192xf32> to vector<8x64xf32>
    %279 = vector.extract_strided_slice %277 {offsets = [0, 0], sizes = [8, 64], strides = [1, 1]} : vector<8x192xf32> to vector<8x64xf32>
    %280 = arith.addf %278, %279 : vector<8x64xf32>
    %281 = arith.negf %280 : vector<8x64xf32>
    %282 = math.exp %281 : vector<8x64xf32>
    %cst_60 = arith.constant 1.000000e+00 : f32
    %283 = vector.broadcast %cst_60 : f32 to vector<8x64xf32>
    %284 = arith.addf %283, %282 : vector<8x64xf32>
    %285 = arith.divf %283, %284 : vector<8x64xf32>
    %286 = vector.extract_strided_slice %213 {offsets = [0, 64], sizes = [8, 64], strides = [1, 1]} : vector<8x192xf32> to vector<8x64xf32>
    %287 = vector.extract_strided_slice %277 {offsets = [0, 64], sizes = [8, 64], strides = [1, 1]} : vector<8x192xf32> to vector<8x64xf32>
    %288 = arith.addf %286, %287 : vector<8x64xf32>
    %289 = arith.negf %288 : vector<8x64xf32>
    %290 = math.exp %289 : vector<8x64xf32>
    %cst_61 = arith.constant 1.000000e+00 : f32
    %291 = vector.broadcast %cst_61 : f32 to vector<8x64xf32>
    %292 = arith.addf %291, %290 : vector<8x64xf32>
    %293 = arith.divf %291, %292 : vector<8x64xf32>
    %294 = vector.extract_strided_slice %213 {offsets = [0, 128], sizes = [8, 64], strides = [1, 1]} : vector<8x192xf32> to vector<8x64xf32>
    %295 = vector.extract_strided_slice %277 {offsets = [0, 128], sizes = [8, 64], strides = [1, 1]} : vector<8x192xf32> to vector<8x64xf32>
    %296 = vector.broadcast %198 : vector<1x64xf32> to vector<8x64xf32>
    %297 = arith.addf %295, %296 : vector<8x64xf32>
    %298 = arith.mulf %285, %297 : vector<8x64xf32>
    %299 = arith.addf %294, %298 : vector<8x64xf32>
    %300 = math.tanh %299 : vector<8x64xf32>
    %cst_62 = arith.constant 1.000000e+00 : f32
    %301 = vector.broadcast %cst_62 : f32 to vector<8x64xf32>
    %302 = arith.subf %301, %293 : vector<8x64xf32>
    %303 = arith.mulf %302, %300 : vector<8x64xf32>
    %304 = arith.mulf %293, %276 : vector<8x64xf32>
    %305 = arith.addf %303, %304 : vector<8x64xf32>
    %306 = arith.mulf %51, %305 : vector<8x64xf32>
    %307 = arith.mulf %57, %276 : vector<8x64xf32>
    %308 = arith.addf %306, %307 : vector<8x64xf32>
    %cst_63 = arith.constant dense<0.000000e+00> : vector<8x192xf32>
    %309 = tpu.matmul %308, %197, %cst_63 {dimension_numbers = #tpu.dot_dimension_numbers<[1], [0], [0], [1], [0, 0, 1, 1], [], []>} : vector<8x64xf32>, vector<64x192xf32>, vector<8x192xf32> -> vector<8x192xf32>
    %310 = vector.extract_strided_slice %218 {offsets = [0, 0], sizes = [8, 64], strides = [1, 1]} : vector<8x192xf32> to vector<8x64xf32>
    %311 = vector.extract_strided_slice %309 {offsets = [0, 0], sizes = [8, 64], strides = [1, 1]} : vector<8x192xf32> to vector<8x64xf32>
    %312 = arith.addf %310, %311 : vector<8x64xf32>
    %313 = arith.negf %312 : vector<8x64xf32>
    %314 = math.exp %313 : vector<8x64xf32>
    %cst_64 = arith.constant 1.000000e+00 : f32
    %315 = vector.broadcast %cst_64 : f32 to vector<8x64xf32>
    %316 = arith.addf %315, %314 : vector<8x64xf32>
    %317 = arith.divf %315, %316 : vector<8x64xf32>
    %318 = vector.extract_strided_slice %218 {offsets = [0, 64], sizes = [8, 64], strides = [1, 1]} : vector<8x192xf32> to vector<8x64xf32>
    %319 = vector.extract_strided_slice %309 {offsets = [0, 64], sizes = [8, 64], strides = [1, 1]} : vector<8x192xf32> to vector<8x64xf32>
    %320 = arith.addf %318, %319 : vector<8x64xf32>
    %321 = arith.negf %320 : vector<8x64xf32>
    %322 = math.exp %321 : vector<8x64xf32>
    %cst_65 = arith.constant 1.000000e+00 : f32
    %323 = vector.broadcast %cst_65 : f32 to vector<8x64xf32>
    %324 = arith.addf %323, %322 : vector<8x64xf32>
    %325 = arith.divf %323, %324 : vector<8x64xf32>
    %326 = vector.extract_strided_slice %218 {offsets = [0, 128], sizes = [8, 64], strides = [1, 1]} : vector<8x192xf32> to vector<8x64xf32>
    %327 = vector.extract_strided_slice %309 {offsets = [0, 128], sizes = [8, 64], strides = [1, 1]} : vector<8x192xf32> to vector<8x64xf32>
    %328 = vector.broadcast %198 : vector<1x64xf32> to vector<8x64xf32>
    %329 = arith.addf %327, %328 : vector<8x64xf32>
    %330 = arith.mulf %317, %329 : vector<8x64xf32>
    %331 = arith.addf %326, %330 : vector<8x64xf32>
    %332 = math.tanh %331 : vector<8x64xf32>
    %cst_66 = arith.constant 1.000000e+00 : f32
    %333 = vector.broadcast %cst_66 : f32 to vector<8x64xf32>
    %334 = arith.subf %333, %325 : vector<8x64xf32>
    %335 = arith.mulf %334, %332 : vector<8x64xf32>
    %336 = arith.mulf %325, %308 : vector<8x64xf32>
    %337 = arith.addf %335, %336 : vector<8x64xf32>
    %338 = arith.mulf %72, %337 : vector<8x64xf32>
    %339 = arith.mulf %78, %308 : vector<8x64xf32>
    %340 = arith.addf %338, %339 : vector<8x64xf32>
    %cst_67 = arith.constant dense<0.000000e+00> : vector<8x192xf32>
    %341 = tpu.matmul %340, %197, %cst_67 {dimension_numbers = #tpu.dot_dimension_numbers<[1], [0], [0], [1], [0, 0, 1, 1], [], []>} : vector<8x64xf32>, vector<64x192xf32>, vector<8x192xf32> -> vector<8x192xf32>
    %342 = vector.extract_strided_slice %223 {offsets = [0, 0], sizes = [8, 64], strides = [1, 1]} : vector<8x192xf32> to vector<8x64xf32>
    %343 = vector.extract_strided_slice %341 {offsets = [0, 0], sizes = [8, 64], strides = [1, 1]} : vector<8x192xf32> to vector<8x64xf32>
    %344 = arith.addf %342, %343 : vector<8x64xf32>
    %345 = arith.negf %344 : vector<8x64xf32>
    %346 = math.exp %345 : vector<8x64xf32>
    %cst_68 = arith.constant 1.000000e+00 : f32
    %347 = vector.broadcast %cst_68 : f32 to vector<8x64xf32>
    %348 = arith.addf %347, %346 : vector<8x64xf32>
    %349 = arith.divf %347, %348 : vector<8x64xf32>
    %350 = vector.extract_strided_slice %223 {offsets = [0, 64], sizes = [8, 64], strides = [1, 1]} : vector<8x192xf32> to vector<8x64xf32>
    %351 = vector.extract_strided_slice %341 {offsets = [0, 64], sizes = [8, 64], strides = [1, 1]} : vector<8x192xf32> to vector<8x64xf32>
    %352 = arith.addf %350, %351 : vector<8x64xf32>
    %353 = arith.negf %352 : vector<8x64xf32>
    %354 = math.exp %353 : vector<8x64xf32>
    %cst_69 = arith.constant 1.000000e+00 : f32
    %355 = vector.broadcast %cst_69 : f32 to vector<8x64xf32>
    %356 = arith.addf %355, %354 : vector<8x64xf32>
    %357 = arith.divf %355, %356 : vector<8x64xf32>
    %358 = vector.extract_strided_slice %223 {offsets = [0, 128], sizes = [8, 64], strides = [1, 1]} : vector<8x192xf32> to vector<8x64xf32>
    %359 = vector.extract_strided_slice %341 {offsets = [0, 128], sizes = [8, 64], strides = [1, 1]} : vector<8x192xf32> to vector<8x64xf32>
    %360 = vector.broadcast %198 : vector<1x64xf32> to vector<8x64xf32>
    %361 = arith.addf %359, %360 : vector<8x64xf32>
    %362 = arith.mulf %349, %361 : vector<8x64xf32>
    %363 = arith.addf %358, %362 : vector<8x64xf32>
    %364 = math.tanh %363 : vector<8x64xf32>
    %cst_70 = arith.constant 1.000000e+00 : f32
    %365 = vector.broadcast %cst_70 : f32 to vector<8x64xf32>
    %366 = arith.subf %365, %357 : vector<8x64xf32>
    %367 = arith.mulf %366, %364 : vector<8x64xf32>
    %368 = arith.mulf %357, %340 : vector<8x64xf32>
    %369 = arith.addf %367, %368 : vector<8x64xf32>
    %370 = arith.mulf %93, %369 : vector<8x64xf32>
    %371 = arith.mulf %99, %340 : vector<8x64xf32>
    %372 = arith.addf %370, %371 : vector<8x64xf32>
    %cst_71 = arith.constant dense<0.000000e+00> : vector<8x192xf32>
    %373 = tpu.matmul %372, %197, %cst_71 {dimension_numbers = #tpu.dot_dimension_numbers<[1], [0], [0], [1], [0, 0, 1, 1], [], []>} : vector<8x64xf32>, vector<64x192xf32>, vector<8x192xf32> -> vector<8x192xf32>
    %374 = vector.extract_strided_slice %228 {offsets = [0, 0], sizes = [8, 64], strides = [1, 1]} : vector<8x192xf32> to vector<8x64xf32>
    %375 = vector.extract_strided_slice %373 {offsets = [0, 0], sizes = [8, 64], strides = [1, 1]} : vector<8x192xf32> to vector<8x64xf32>
    %376 = arith.addf %374, %375 : vector<8x64xf32>
    %377 = arith.negf %376 : vector<8x64xf32>
    %378 = math.exp %377 : vector<8x64xf32>
    %cst_72 = arith.constant 1.000000e+00 : f32
    %379 = vector.broadcast %cst_72 : f32 to vector<8x64xf32>
    %380 = arith.addf %379, %378 : vector<8x64xf32>
    %381 = arith.divf %379, %380 : vector<8x64xf32>
    %382 = vector.extract_strided_slice %228 {offsets = [0, 64], sizes = [8, 64], strides = [1, 1]} : vector<8x192xf32> to vector<8x64xf32>
    %383 = vector.extract_strided_slice %373 {offsets = [0, 64], sizes = [8, 64], strides = [1, 1]} : vector<8x192xf32> to vector<8x64xf32>
    %384 = arith.addf %382, %383 : vector<8x64xf32>
    %385 = arith.negf %384 : vector<8x64xf32>
    %386 = math.exp %385 : vector<8x64xf32>
    %cst_73 = arith.constant 1.000000e+00 : f32
    %387 = vector.broadcast %cst_73 : f32 to vector<8x64xf32>
    %388 = arith.addf %387, %386 : vector<8x64xf32>
    %389 = arith.divf %387, %388 : vector<8x64xf32>
    %390 = vector.extract_strided_slice %228 {offsets = [0, 128], sizes = [8, 64], strides = [1, 1]} : vector<8x192xf32> to vector<8x64xf32>
    %391 = vector.extract_strided_slice %373 {offsets = [0, 128], sizes = [8, 64], strides = [1, 1]} : vector<8x192xf32> to vector<8x64xf32>
    %392 = vector.broadcast %198 : vector<1x64xf32> to vector<8x64xf32>
    %393 = arith.addf %391, %392 : vector<8x64xf32>
    %394 = arith.mulf %381, %393 : vector<8x64xf32>
    %395 = arith.addf %390, %394 : vector<8x64xf32>
    %396 = math.tanh %395 : vector<8x64xf32>
    %cst_74 = arith.constant 1.000000e+00 : f32
    %397 = vector.broadcast %cst_74 : f32 to vector<8x64xf32>
    %398 = arith.subf %397, %389 : vector<8x64xf32>
    %399 = arith.mulf %398, %396 : vector<8x64xf32>
    %400 = arith.mulf %389, %372 : vector<8x64xf32>
    %401 = arith.addf %399, %400 : vector<8x64xf32>
    %402 = arith.mulf %114, %401 : vector<8x64xf32>
    %403 = arith.mulf %120, %372 : vector<8x64xf32>
    %404 = arith.addf %402, %403 : vector<8x64xf32>
    %cst_75 = arith.constant dense<0.000000e+00> : vector<8x192xf32>
    %405 = tpu.matmul %404, %197, %cst_75 {dimension_numbers = #tpu.dot_dimension_numbers<[1], [0], [0], [1], [0, 0, 1, 1], [], []>} : vector<8x64xf32>, vector<64x192xf32>, vector<8x192xf32> -> vector<8x192xf32>
    %406 = vector.extract_strided_slice %233 {offsets = [0, 0], sizes = [8, 64], strides = [1, 1]} : vector<8x192xf32> to vector<8x64xf32>
    %407 = vector.extract_strided_slice %405 {offsets = [0, 0], sizes = [8, 64], strides = [1, 1]} : vector<8x192xf32> to vector<8x64xf32>
    %408 = arith.addf %406, %407 : vector<8x64xf32>
    %409 = arith.negf %408 : vector<8x64xf32>
    %410 = math.exp %409 : vector<8x64xf32>
    %cst_76 = arith.constant 1.000000e+00 : f32
    %411 = vector.broadcast %cst_76 : f32 to vector<8x64xf32>
    %412 = arith.addf %411, %410 : vector<8x64xf32>
    %413 = arith.divf %411, %412 : vector<8x64xf32>
    %414 = vector.extract_strided_slice %233 {offsets = [0, 64], sizes = [8, 64], strides = [1, 1]} : vector<8x192xf32> to vector<8x64xf32>
    %415 = vector.extract_strided_slice %405 {offsets = [0, 64], sizes = [8, 64], strides = [1, 1]} : vector<8x192xf32> to vector<8x64xf32>
    %416 = arith.addf %414, %415 : vector<8x64xf32>
    %417 = arith.negf %416 : vector<8x64xf32>
    %418 = math.exp %417 : vector<8x64xf32>
    %cst_77 = arith.constant 1.000000e+00 : f32
    %419 = vector.broadcast %cst_77 : f32 to vector<8x64xf32>
    %420 = arith.addf %419, %418 : vector<8x64xf32>
    %421 = arith.divf %419, %420 : vector<8x64xf32>
    %422 = vector.extract_strided_slice %233 {offsets = [0, 128], sizes = [8, 64], strides = [1, 1]} : vector<8x192xf32> to vector<8x64xf32>
    %423 = vector.extract_strided_slice %405 {offsets = [0, 128], sizes = [8, 64], strides = [1, 1]} : vector<8x192xf32> to vector<8x64xf32>
    %424 = vector.broadcast %198 : vector<1x64xf32> to vector<8x64xf32>
    %425 = arith.addf %423, %424 : vector<8x64xf32>
    %426 = arith.mulf %413, %425 : vector<8x64xf32>
    %427 = arith.addf %422, %426 : vector<8x64xf32>
    %428 = math.tanh %427 : vector<8x64xf32>
    %cst_78 = arith.constant 1.000000e+00 : f32
    %429 = vector.broadcast %cst_78 : f32 to vector<8x64xf32>
    %430 = arith.subf %429, %421 : vector<8x64xf32>
    %431 = arith.mulf %430, %428 : vector<8x64xf32>
    %432 = arith.mulf %421, %404 : vector<8x64xf32>
    %433 = arith.addf %431, %432 : vector<8x64xf32>
    %434 = arith.mulf %135, %433 : vector<8x64xf32>
    %435 = arith.mulf %141, %404 : vector<8x64xf32>
    %436 = arith.addf %434, %435 : vector<8x64xf32>
    %cst_79 = arith.constant dense<0.000000e+00> : vector<8x192xf32>
    %437 = tpu.matmul %436, %197, %cst_79 {dimension_numbers = #tpu.dot_dimension_numbers<[1], [0], [0], [1], [0, 0, 1, 1], [], []>} : vector<8x64xf32>, vector<64x192xf32>, vector<8x192xf32> -> vector<8x192xf32>
    %438 = vector.extract_strided_slice %238 {offsets = [0, 0], sizes = [8, 64], strides = [1, 1]} : vector<8x192xf32> to vector<8x64xf32>
    %439 = vector.extract_strided_slice %437 {offsets = [0, 0], sizes = [8, 64], strides = [1, 1]} : vector<8x192xf32> to vector<8x64xf32>
    %440 = arith.addf %438, %439 : vector<8x64xf32>
    %441 = arith.negf %440 : vector<8x64xf32>
    %442 = math.exp %441 : vector<8x64xf32>
    %cst_80 = arith.constant 1.000000e+00 : f32
    %443 = vector.broadcast %cst_80 : f32 to vector<8x64xf32>
    %444 = arith.addf %443, %442 : vector<8x64xf32>
    %445 = arith.divf %443, %444 : vector<8x64xf32>
    %446 = vector.extract_strided_slice %238 {offsets = [0, 64], sizes = [8, 64], strides = [1, 1]} : vector<8x192xf32> to vector<8x64xf32>
    %447 = vector.extract_strided_slice %437 {offsets = [0, 64], sizes = [8, 64], strides = [1, 1]} : vector<8x192xf32> to vector<8x64xf32>
    %448 = arith.addf %446, %447 : vector<8x64xf32>
    %449 = arith.negf %448 : vector<8x64xf32>
    %450 = math.exp %449 : vector<8x64xf32>
    %cst_81 = arith.constant 1.000000e+00 : f32
    %451 = vector.broadcast %cst_81 : f32 to vector<8x64xf32>
    %452 = arith.addf %451, %450 : vector<8x64xf32>
    %453 = arith.divf %451, %452 : vector<8x64xf32>
    %454 = vector.extract_strided_slice %238 {offsets = [0, 128], sizes = [8, 64], strides = [1, 1]} : vector<8x192xf32> to vector<8x64xf32>
    %455 = vector.extract_strided_slice %437 {offsets = [0, 128], sizes = [8, 64], strides = [1, 1]} : vector<8x192xf32> to vector<8x64xf32>
    %456 = vector.broadcast %198 : vector<1x64xf32> to vector<8x64xf32>
    %457 = arith.addf %455, %456 : vector<8x64xf32>
    %458 = arith.mulf %445, %457 : vector<8x64xf32>
    %459 = arith.addf %454, %458 : vector<8x64xf32>
    %460 = math.tanh %459 : vector<8x64xf32>
    %cst_82 = arith.constant 1.000000e+00 : f32
    %461 = vector.broadcast %cst_82 : f32 to vector<8x64xf32>
    %462 = arith.subf %461, %453 : vector<8x64xf32>
    %463 = arith.mulf %462, %460 : vector<8x64xf32>
    %464 = arith.mulf %453, %436 : vector<8x64xf32>
    %465 = arith.addf %463, %464 : vector<8x64xf32>
    %466 = arith.mulf %156, %465 : vector<8x64xf32>
    %467 = arith.mulf %162, %436 : vector<8x64xf32>
    %468 = arith.addf %466, %467 : vector<8x64xf32>
    %cst_83 = arith.constant dense<0.000000e+00> : vector<8x192xf32>
    %469 = tpu.matmul %468, %197, %cst_83 {dimension_numbers = #tpu.dot_dimension_numbers<[1], [0], [0], [1], [0, 0, 1, 1], [], []>} : vector<8x64xf32>, vector<64x192xf32>, vector<8x192xf32> -> vector<8x192xf32>
    %470 = vector.extract_strided_slice %243 {offsets = [0, 0], sizes = [8, 64], strides = [1, 1]} : vector<8x192xf32> to vector<8x64xf32>
    %471 = vector.extract_strided_slice %469 {offsets = [0, 0], sizes = [8, 64], strides = [1, 1]} : vector<8x192xf32> to vector<8x64xf32>
    %472 = arith.addf %470, %471 : vector<8x64xf32>
    %473 = arith.negf %472 : vector<8x64xf32>
    %474 = math.exp %473 : vector<8x64xf32>
    %cst_84 = arith.constant 1.000000e+00 : f32
    %475 = vector.broadcast %cst_84 : f32 to vector<8x64xf32>
    %476 = arith.addf %475, %474 : vector<8x64xf32>
    %477 = arith.divf %475, %476 : vector<8x64xf32>
    %478 = vector.extract_strided_slice %243 {offsets = [0, 64], sizes = [8, 64], strides = [1, 1]} : vector<8x192xf32> to vector<8x64xf32>
    %479 = vector.extract_strided_slice %469 {offsets = [0, 64], sizes = [8, 64], strides = [1, 1]} : vector<8x192xf32> to vector<8x64xf32>
    %480 = arith.addf %478, %479 : vector<8x64xf32>
    %481 = arith.negf %480 : vector<8x64xf32>
    %482 = math.exp %481 : vector<8x64xf32>
    %cst_85 = arith.constant 1.000000e+00 : f32
    %483 = vector.broadcast %cst_85 : f32 to vector<8x64xf32>
    %484 = arith.addf %483, %482 : vector<8x64xf32>
    %485 = arith.divf %483, %484 : vector<8x64xf32>
    %486 = vector.extract_strided_slice %243 {offsets = [0, 128], sizes = [8, 64], strides = [1, 1]} : vector<8x192xf32> to vector<8x64xf32>
    %487 = vector.extract_strided_slice %469 {offsets = [0, 128], sizes = [8, 64], strides = [1, 1]} : vector<8x192xf32> to vector<8x64xf32>
    %488 = vector.broadcast %198 : vector<1x64xf32> to vector<8x64xf32>
    %489 = arith.addf %487, %488 : vector<8x64xf32>
    %490 = arith.mulf %477, %489 : vector<8x64xf32>
    %491 = arith.addf %486, %490 : vector<8x64xf32>
    %492 = math.tanh %491 : vector<8x64xf32>
    %cst_86 = arith.constant 1.000000e+00 : f32
    %493 = vector.broadcast %cst_86 : f32 to vector<8x64xf32>
    %494 = arith.subf %493, %485 : vector<8x64xf32>
    %495 = arith.mulf %494, %492 : vector<8x64xf32>
    %496 = arith.mulf %485, %468 : vector<8x64xf32>
    %497 = arith.addf %495, %496 : vector<8x64xf32>
    %498 = arith.mulf %177, %497 : vector<8x64xf32>
    %499 = arith.mulf %183, %468 : vector<8x64xf32>
    %500 = arith.addf %498, %499 : vector<8x64xf32>
    %501 = vector.extract_strided_slice %500 {offsets = [0, 0], sizes = [8, 32], strides = [1, 1]} : vector<8x64xf32> to vector<8x32xf32>
    %c0_87 = arith.constant 0 : index
    %c0_88 = arith.constant 0 : index
    %c0_89 = arith.constant 0 : index
    %502 = vector.load %arg15[%c0_87, %c0_88, %c0_89] : memref<4x8x32xf32, #tpu.memory_space<vmem>>, vector<1x8x32xf32>
    %503 = vector.shape_cast %502 : vector<1x8x32xf32> to vector<8x32xf32>
    %504 = vector.shape_cast %501 : vector<8x32xf32> to vector<1x8x32xf32>
    tpu.vector_store %arg15[%c0_87, %c0_88, %c0_89], %504 {strides = array<i32>} : memref<4x8x32xf32, #tpu.memory_space<vmem>>, vector<1x8x32xf32>,
    %505 = vector.extract_strided_slice %500 {offsets = [0, 32], sizes = [8, 32], strides = [1, 1]} : vector<8x64xf32> to vector<8x32xf32>
    %c1 = arith.constant 1 : index
    %c0_90 = arith.constant 0 : index
    %c0_91 = arith.constant 0 : index
    %506 = vector.load %arg15[%c1, %c0_90, %c0_91] : memref<4x8x32xf32, #tpu.memory_space<vmem>>, vector<1x8x32xf32>
    %507 = vector.shape_cast %506 : vector<1x8x32xf32> to vector<8x32xf32>
    %508 = vector.shape_cast %505 : vector<8x32xf32> to vector<1x8x32xf32>
    tpu.vector_store %arg15[%c1, %c0_90, %c0_91], %508 {strides = array<i32>} : memref<4x8x32xf32, #tpu.memory_space<vmem>>, vector<1x8x32xf32>,
    %509 = vector.shape_cast %3 : vector<1x64xi1> to vector<1x64xi1>
    %510 = vector.broadcast %509 : vector<1x64xi1> to vector<8x64xi1>
    %511 = arith.select %510, %274, %498 : vector<8x64xi1>, vector<8x64xf32>
    %512 = vector.shape_cast %3 : vector<1x64xi1> to vector<1x64xi1>
    %513 = vector.broadcast %512 : vector<1x64xi1> to vector<8x64xi1>
    %514 = arith.select %513, %306, %466 : vector<8x64xi1>, vector<8x64xf32>
    %515 = vector.shape_cast %3 : vector<1x64xi1> to vector<1x64xi1>
    %516 = vector.broadcast %515 : vector<1x64xi1> to vector<8x64xi1>
    %517 = arith.select %516, %338, %434 : vector<8x64xi1>, vector<8x64xf32>
    %518 = vector.shape_cast %3 : vector<1x64xi1> to vector<1x64xi1>
    %519 = vector.broadcast %518 : vector<1x64xi1> to vector<8x64xi1>
    %520 = arith.select %519, %370, %402 : vector<8x64xi1>, vector<8x64xf32>
    %521 = vector.shape_cast %3 : vector<1x64xi1> to vector<1x64xi1>
    %522 = vector.broadcast %521 : vector<1x64xi1> to vector<8x64xi1>
    %523 = arith.select %522, %402, %370 : vector<8x64xi1>, vector<8x64xf32>
    %524 = vector.shape_cast %3 : vector<1x64xi1> to vector<1x64xi1>
    %525 = vector.broadcast %524 : vector<1x64xi1> to vector<8x64xi1>
    %526 = arith.select %525, %434, %338 : vector<8x64xi1>, vector<8x64xf32>
    %527 = vector.shape_cast %3 : vector<1x64xi1> to vector<1x64xi1>
    %528 = vector.broadcast %527 : vector<1x64xi1> to vector<8x64xi1>
    %529 = arith.select %528, %466, %306 : vector<8x64xi1>, vector<8x64xf32>
    %530 = vector.shape_cast %3 : vector<1x64xi1> to vector<1x64xi1>
    %531 = vector.broadcast %530 : vector<1x64xi1> to vector<8x64xi1>
    %532 = arith.select %531, %498, %274 : vector<8x64xi1>, vector<8x64xf32>
    %533 = tpu.concatenate %511, %514, %517, %520, %523, %526, %529, %532 in 0 : vector<8x64xf32>, vector<8x64xf32>, vector<8x64xf32>, vector<8x64xf32>, vector<8x64xf32>, vector<8x64xf32>, vector<8x64xf32>, vector<8x64xf32> -> vector<64x64xf32>
    %c0_92 = arith.constant 0 : index
    %c0_93 = arith.constant 0 : index
    %534 = vector.load %arg10[%c0_92, %c0_93] : memref<64x192xf32, #tpu.memory_space<vmem>>, vector<64x192xf32>
    %c0_94 = arith.constant 0 : index
    %c0_95 = arith.constant 0 : index
    %535 = vector.load %arg11[%c0_94, %c0_95] : memref<1x64xf32, #tpu.memory_space<vmem>>, vector<1x64xf32>
    %c0_96 = arith.constant 0 : index
    %c0_97 = arith.constant 0 : index
    %536 = vector.load %arg8[%c0_96, %c0_97] : memref<64x192xf32, #tpu.memory_space<vmem>>, vector<64x192xf32>
    %cst_98 = arith.constant dense<0.000000e+00> : vector<64x192xf32>
    %537 = tpu.matmul %533, %536, %cst_98 {dimension_numbers = #tpu.dot_dimension_numbers<[1], [0], [0], [1], [0, 0, 1, 1], [], []>} : vector<64x64xf32>, vector<64x192xf32>, vector<64x192xf32> -> vector<64x192xf32>
    %c0_99 = arith.constant 0 : index
    %c0_100 = arith.constant 0 : index
    %538 = vector.load %arg9[%c0_99, %c0_100] : memref<1x192xf32, #tpu.memory_space<vmem>>, vector<1x192xf32>
    %539 = vector.broadcast %538 : vector<1x192xf32> to vector<64x192xf32>
    %540 = arith.addf %537, %539 : vector<64x192xf32>
    %541 = vector.extract_strided_slice %540 {offsets = [0, 0], sizes = [8, 192], strides = [1, 1]} : vector<64x192xf32> to vector<8x192xf32>
    %542 = vector.extract_strided_slice %540 {offsets = [56, 0], sizes = [8, 192], strides = [1, 1]} : vector<64x192xf32> to vector<8x192xf32>
    %543 = vector.shape_cast %22 : vector<1x192xi1> to vector<1x192xi1>
    %544 = vector.broadcast %543 : vector<1x192xi1> to vector<8x192xi1>
    %545 = arith.select %544, %541, %542 : vector<8x192xi1>, vector<8x192xf32>
    %546 = vector.extract_strided_slice %540 {offsets = [8, 0], sizes = [8, 192], strides = [1, 1]} : vector<64x192xf32> to vector<8x192xf32>
    %547 = vector.extract_strided_slice %540 {offsets = [48, 0], sizes = [8, 192], strides = [1, 1]} : vector<64x192xf32> to vector<8x192xf32>
    %548 = vector.shape_cast %22 : vector<1x192xi1> to vector<1x192xi1>
    %549 = vector.broadcast %548 : vector<1x192xi1> to vector<8x192xi1>
    %550 = arith.select %549, %546, %547 : vector<8x192xi1>, vector<8x192xf32>
    %551 = vector.extract_strided_slice %540 {offsets = [16, 0], sizes = [8, 192], strides = [1, 1]} : vector<64x192xf32> to vector<8x192xf32>
    %552 = vector.extract_strided_slice %540 {offsets = [40, 0], sizes = [8, 192], strides = [1, 1]} : vector<64x192xf32> to vector<8x192xf32>
    %553 = vector.shape_cast %22 : vector<1x192xi1> to vector<1x192xi1>
    %554 = vector.broadcast %553 : vector<1x192xi1> to vector<8x192xi1>
    %555 = arith.select %554, %551, %552 : vector<8x192xi1>, vector<8x192xf32>
    %556 = vector.extract_strided_slice %540 {offsets = [24, 0], sizes = [8, 192], strides = [1, 1]} : vector<64x192xf32> to vector<8x192xf32>
    %557 = vector.extract_strided_slice %540 {offsets = [32, 0], sizes = [8, 192], strides = [1, 1]} : vector<64x192xf32> to vector<8x192xf32>
    %558 = vector.shape_cast %22 : vector<1x192xi1> to vector<1x192xi1>
    %559 = vector.broadcast %558 : vector<1x192xi1> to vector<8x192xi1>
    %560 = arith.select %559, %556, %557 : vector<8x192xi1>, vector<8x192xf32>
    %561 = vector.extract_strided_slice %540 {offsets = [32, 0], sizes = [8, 192], strides = [1, 1]} : vector<64x192xf32> to vector<8x192xf32>
    %562 = vector.extract_strided_slice %540 {offsets = [24, 0], sizes = [8, 192], strides = [1, 1]} : vector<64x192xf32> to vector<8x192xf32>
    %563 = vector.shape_cast %22 : vector<1x192xi1> to vector<1x192xi1>
    %564 = vector.broadcast %563 : vector<1x192xi1> to vector<8x192xi1>
    %565 = arith.select %564, %561, %562 : vector<8x192xi1>, vector<8x192xf32>
    %566 = vector.extract_strided_slice %540 {offsets = [40, 0], sizes = [8, 192], strides = [1, 1]} : vector<64x192xf32> to vector<8x192xf32>
    %567 = vector.extract_strided_slice %540 {offsets = [16, 0], sizes = [8, 192], strides = [1, 1]} : vector<64x192xf32> to vector<8x192xf32>
    %568 = vector.shape_cast %22 : vector<1x192xi1> to vector<1x192xi1>
    %569 = vector.broadcast %568 : vector<1x192xi1> to vector<8x192xi1>
    %570 = arith.select %569, %566, %567 : vector<8x192xi1>, vector<8x192xf32>
    %571 = vector.extract_strided_slice %540 {offsets = [48, 0], sizes = [8, 192], strides = [1, 1]} : vector<64x192xf32> to vector<8x192xf32>
    %572 = vector.extract_strided_slice %540 {offsets = [8, 0], sizes = [8, 192], strides = [1, 1]} : vector<64x192xf32> to vector<8x192xf32>
    %573 = vector.shape_cast %22 : vector<1x192xi1> to vector<1x192xi1>
    %574 = vector.broadcast %573 : vector<1x192xi1> to vector<8x192xi1>
    %575 = arith.select %574, %571, %572 : vector<8x192xi1>, vector<8x192xf32>
    %576 = vector.extract_strided_slice %540 {offsets = [56, 0], sizes = [8, 192], strides = [1, 1]} : vector<64x192xf32> to vector<8x192xf32>
    %577 = vector.extract_strided_slice %540 {offsets = [0, 0], sizes = [8, 192], strides = [1, 1]} : vector<64x192xf32> to vector<8x192xf32>
    %578 = vector.shape_cast %22 : vector<1x192xi1> to vector<1x192xi1>
    %579 = vector.broadcast %578 : vector<1x192xi1> to vector<8x192xi1>
    %580 = arith.select %579, %576, %577 : vector<8x192xi1>, vector<8x192xf32>
    %cst_101 = arith.constant 0.000000e+00 : f32
    %581 = vector.broadcast %cst_101 : f32 to vector<8x64xf32>
    %cst_102 = arith.constant dense<0.000000e+00> : vector<8x192xf32>
    %582 = tpu.matmul %581, %534, %cst_102 {dimension_numbers = #tpu.dot_dimension_numbers<[1], [0], [0], [1], [0, 0, 1, 1], [], []>} : vector<8x64xf32>, vector<64x192xf32>, vector<8x192xf32> -> vector<8x192xf32>
    %583 = vector.extract_strided_slice %545 {offsets = [0, 0], sizes = [8, 64], strides = [1, 1]} : vector<8x192xf32> to vector<8x64xf32>
    %584 = vector.extract_strided_slice %582 {offsets = [0, 0], sizes = [8, 64], strides = [1, 1]} : vector<8x192xf32> to vector<8x64xf32>
    %585 = arith.addf %583, %584 : vector<8x64xf32>
    %586 = arith.negf %585 : vector<8x64xf32>
    %587 = math.exp %586 : vector<8x64xf32>
    %cst_103 = arith.constant 1.000000e+00 : f32
    %588 = vector.broadcast %cst_103 : f32 to vector<8x64xf32>
    %589 = arith.addf %588, %587 : vector<8x64xf32>
    %590 = arith.divf %588, %589 : vector<8x64xf32>
    %591 = vector.extract_strided_slice %545 {offsets = [0, 64], sizes = [8, 64], strides = [1, 1]} : vector<8x192xf32> to vector<8x64xf32>
    %592 = vector.extract_strided_slice %582 {offsets = [0, 64], sizes = [8, 64], strides = [1, 1]} : vector<8x192xf32> to vector<8x64xf32>
    %593 = arith.addf %591, %592 : vector<8x64xf32>
    %594 = arith.negf %593 : vector<8x64xf32>
    %595 = math.exp %594 : vector<8x64xf32>
    %cst_104 = arith.constant 1.000000e+00 : f32
    %596 = vector.broadcast %cst_104 : f32 to vector<8x64xf32>
    %597 = arith.addf %596, %595 : vector<8x64xf32>
    %598 = arith.divf %596, %597 : vector<8x64xf32>
    %599 = vector.extract_strided_slice %545 {offsets = [0, 128], sizes = [8, 64], strides = [1, 1]} : vector<8x192xf32> to vector<8x64xf32>
    %600 = vector.extract_strided_slice %582 {offsets = [0, 128], sizes = [8, 64], strides = [1, 1]} : vector<8x192xf32> to vector<8x64xf32>
    %601 = vector.broadcast %535 : vector<1x64xf32> to vector<8x64xf32>
    %602 = arith.addf %600, %601 : vector<8x64xf32>
    %603 = arith.mulf %590, %602 : vector<8x64xf32>
    %604 = arith.addf %599, %603 : vector<8x64xf32>
    %605 = math.tanh %604 : vector<8x64xf32>
    %cst_105 = arith.constant 1.000000e+00 : f32
    %606 = vector.broadcast %cst_105 : f32 to vector<8x64xf32>
    %607 = arith.subf %606, %598 : vector<8x64xf32>
    %608 = arith.mulf %607, %605 : vector<8x64xf32>
    %609 = arith.mulf %598, %581 : vector<8x64xf32>
    %610 = arith.addf %608, %609 : vector<8x64xf32>
    %611 = arith.mulf %30, %610 : vector<8x64xf32>
    %612 = arith.mulf %36, %581 : vector<8x64xf32>
    %613 = arith.addf %611, %612 : vector<8x64xf32>
    %cst_106 = arith.constant dense<0.000000e+00> : vector<8x192xf32>
    %614 = tpu.matmul %613, %534, %cst_106 {dimension_numbers = #tpu.dot_dimension_numbers<[1], [0], [0], [1], [0, 0, 1, 1], [], []>} : vector<8x64xf32>, vector<64x192xf32>, vector<8x192xf32> -> vector<8x192xf32>
    %615 = vector.extract_strided_slice %550 {offsets = [0, 0], sizes = [8, 64], strides = [1, 1]} : vector<8x192xf32> to vector<8x64xf32>
    %616 = vector.extract_strided_slice %614 {offsets = [0, 0], sizes = [8, 64], strides = [1, 1]} : vector<8x192xf32> to vector<8x64xf32>
    %617 = arith.addf %615, %616 : vector<8x64xf32>
    %618 = arith.negf %617 : vector<8x64xf32>
    %619 = math.exp %618 : vector<8x64xf32>
    %cst_107 = arith.constant 1.000000e+00 : f32
    %620 = vector.broadcast %cst_107 : f32 to vector<8x64xf32>
    %621 = arith.addf %620, %619 : vector<8x64xf32>
    %622 = arith.divf %620, %621 : vector<8x64xf32>
    %623 = vector.extract_strided_slice %550 {offsets = [0, 64], sizes = [8, 64], strides = [1, 1]} : vector<8x192xf32> to vector<8x64xf32>
    %624 = vector.extract_strided_slice %614 {offsets = [0, 64], sizes = [8, 64], strides = [1, 1]} : vector<8x192xf32> to vector<8x64xf32>
    %625 = arith.addf %623, %624 : vector<8x64xf32>
    %626 = arith.negf %625 : vector<8x64xf32>
    %627 = math.exp %626 : vector<8x64xf32>
    %cst_108 = arith.constant 1.000000e+00 : f32
    %628 = vector.broadcast %cst_108 : f32 to vector<8x64xf32>
    %629 = arith.addf %628, %627 : vector<8x64xf32>
    %630 = arith.divf %628, %629 : vector<8x64xf32>
    %631 = vector.extract_strided_slice %550 {offsets = [0, 128], sizes = [8, 64], strides = [1, 1]} : vector<8x192xf32> to vector<8x64xf32>
    %632 = vector.extract_strided_slice %614 {offsets = [0, 128], sizes = [8, 64], strides = [1, 1]} : vector<8x192xf32> to vector<8x64xf32>
    %633 = vector.broadcast %535 : vector<1x64xf32> to vector<8x64xf32>
    %634 = arith.addf %632, %633 : vector<8x64xf32>
    %635 = arith.mulf %622, %634 : vector<8x64xf32>
    %636 = arith.addf %631, %635 : vector<8x64xf32>
    %637 = math.tanh %636 : vector<8x64xf32>
    %cst_109 = arith.constant 1.000000e+00 : f32
    %638 = vector.broadcast %cst_109 : f32 to vector<8x64xf32>
    %639 = arith.subf %638, %630 : vector<8x64xf32>
    %640 = arith.mulf %639, %637 : vector<8x64xf32>
    %641 = arith.mulf %630, %613 : vector<8x64xf32>
    %642 = arith.addf %640, %641 : vector<8x64xf32>
    %643 = arith.mulf %51, %642 : vector<8x64xf32>
    %644 = arith.mulf %57, %613 : vector<8x64xf32>
    %645 = arith.addf %643, %644 : vector<8x64xf32>
    %cst_110 = arith.constant dense<0.000000e+00> : vector<8x192xf32>
    %646 = tpu.matmul %645, %534, %cst_110 {dimension_numbers = #tpu.dot_dimension_numbers<[1], [0], [0], [1], [0, 0, 1, 1], [], []>} : vector<8x64xf32>, vector<64x192xf32>, vector<8x192xf32> -> vector<8x192xf32>
    %647 = vector.extract_strided_slice %555 {offsets = [0, 0], sizes = [8, 64], strides = [1, 1]} : vector<8x192xf32> to vector<8x64xf32>
    %648 = vector.extract_strided_slice %646 {offsets = [0, 0], sizes = [8, 64], strides = [1, 1]} : vector<8x192xf32> to vector<8x64xf32>
    %649 = arith.addf %647, %648 : vector<8x64xf32>
    %650 = arith.negf %649 : vector<8x64xf32>
    %651 = math.exp %650 : vector<8x64xf32>
    %cst_111 = arith.constant 1.000000e+00 : f32
    %652 = vector.broadcast %cst_111 : f32 to vector<8x64xf32>
    %653 = arith.addf %652, %651 : vector<8x64xf32>
    %654 = arith.divf %652, %653 : vector<8x64xf32>
    %655 = vector.extract_strided_slice %555 {offsets = [0, 64], sizes = [8, 64], strides = [1, 1]} : vector<8x192xf32> to vector<8x64xf32>
    %656 = vector.extract_strided_slice %646 {offsets = [0, 64], sizes = [8, 64], strides = [1, 1]} : vector<8x192xf32> to vector<8x64xf32>
    %657 = arith.addf %655, %656 : vector<8x64xf32>
    %658 = arith.negf %657 : vector<8x64xf32>
    %659 = math.exp %658 : vector<8x64xf32>
    %cst_112 = arith.constant 1.000000e+00 : f32
    %660 = vector.broadcast %cst_112 : f32 to vector<8x64xf32>
    %661 = arith.addf %660, %659 : vector<8x64xf32>
    %662 = arith.divf %660, %661 : vector<8x64xf32>
    %663 = vector.extract_strided_slice %555 {offsets = [0, 128], sizes = [8, 64], strides = [1, 1]} : vector<8x192xf32> to vector<8x64xf32>
    %664 = vector.extract_strided_slice %646 {offsets = [0, 128], sizes = [8, 64], strides = [1, 1]} : vector<8x192xf32> to vector<8x64xf32>
    %665 = vector.broadcast %535 : vector<1x64xf32> to vector<8x64xf32>
    %666 = arith.addf %664, %665 : vector<8x64xf32>
    %667 = arith.mulf %654, %666 : vector<8x64xf32>
    %668 = arith.addf %663, %667 : vector<8x64xf32>
    %669 = math.tanh %668 : vector<8x64xf32>
    %cst_113 = arith.constant 1.000000e+00 : f32
    %670 = vector.broadcast %cst_113 : f32 to vector<8x64xf32>
    %671 = arith.subf %670, %662 : vector<8x64xf32>
    %672 = arith.mulf %671, %669 : vector<8x64xf32>
    %673 = arith.mulf %662, %645 : vector<8x64xf32>
    %674 = arith.addf %672, %673 : vector<8x64xf32>
    %675 = arith.mulf %72, %674 : vector<8x64xf32>
    %676 = arith.mulf %78, %645 : vector<8x64xf32>
    %677 = arith.addf %675, %676 : vector<8x64xf32>
    %cst_114 = arith.constant dense<0.000000e+00> : vector<8x192xf32>
    %678 = tpu.matmul %677, %534, %cst_114 {dimension_numbers = #tpu.dot_dimension_numbers<[1], [0], [0], [1], [0, 0, 1, 1], [], []>} : vector<8x64xf32>, vector<64x192xf32>, vector<8x192xf32> -> vector<8x192xf32>
    %679 = vector.extract_strided_slice %560 {offsets = [0, 0], sizes = [8, 64], strides = [1, 1]} : vector<8x192xf32> to vector<8x64xf32>
    %680 = vector.extract_strided_slice %678 {offsets = [0, 0], sizes = [8, 64], strides = [1, 1]} : vector<8x192xf32> to vector<8x64xf32>
    %681 = arith.addf %679, %680 : vector<8x64xf32>
    %682 = arith.negf %681 : vector<8x64xf32>
    %683 = math.exp %682 : vector<8x64xf32>
    %cst_115 = arith.constant 1.000000e+00 : f32
    %684 = vector.broadcast %cst_115 : f32 to vector<8x64xf32>
    %685 = arith.addf %684, %683 : vector<8x64xf32>
    %686 = arith.divf %684, %685 : vector<8x64xf32>
    %687 = vector.extract_strided_slice %560 {offsets = [0, 64], sizes = [8, 64], strides = [1, 1]} : vector<8x192xf32> to vector<8x64xf32>
    %688 = vector.extract_strided_slice %678 {offsets = [0, 64], sizes = [8, 64], strides = [1, 1]} : vector<8x192xf32> to vector<8x64xf32>
    %689 = arith.addf %687, %688 : vector<8x64xf32>
    %690 = arith.negf %689 : vector<8x64xf32>
    %691 = math.exp %690 : vector<8x64xf32>
    %cst_116 = arith.constant 1.000000e+00 : f32
    %692 = vector.broadcast %cst_116 : f32 to vector<8x64xf32>
    %693 = arith.addf %692, %691 : vector<8x64xf32>
    %694 = arith.divf %692, %693 : vector<8x64xf32>
    %695 = vector.extract_strided_slice %560 {offsets = [0, 128], sizes = [8, 64], strides = [1, 1]} : vector<8x192xf32> to vector<8x64xf32>
    %696 = vector.extract_strided_slice %678 {offsets = [0, 128], sizes = [8, 64], strides = [1, 1]} : vector<8x192xf32> to vector<8x64xf32>
    %697 = vector.broadcast %535 : vector<1x64xf32> to vector<8x64xf32>
    %698 = arith.addf %696, %697 : vector<8x64xf32>
    %699 = arith.mulf %686, %698 : vector<8x64xf32>
    %700 = arith.addf %695, %699 : vector<8x64xf32>
    %701 = math.tanh %700 : vector<8x64xf32>
    %cst_117 = arith.constant 1.000000e+00 : f32
    %702 = vector.broadcast %cst_117 : f32 to vector<8x64xf32>
    %703 = arith.subf %702, %694 : vector<8x64xf32>
    %704 = arith.mulf %703, %701 : vector<8x64xf32>
    %705 = arith.mulf %694, %677 : vector<8x64xf32>
    %706 = arith.addf %704, %705 : vector<8x64xf32>
    %707 = arith.mulf %93, %706 : vector<8x64xf32>
    %708 = arith.mulf %99, %677 : vector<8x64xf32>
    %709 = arith.addf %707, %708 : vector<8x64xf32>
    %cst_118 = arith.constant dense<0.000000e+00> : vector<8x192xf32>
    %710 = tpu.matmul %709, %534, %cst_118 {dimension_numbers = #tpu.dot_dimension_numbers<[1], [0], [0], [1], [0, 0, 1, 1], [], []>} : vector<8x64xf32>, vector<64x192xf32>, vector<8x192xf32> -> vector<8x192xf32>
    %711 = vector.extract_strided_slice %565 {offsets = [0, 0], sizes = [8, 64], strides = [1, 1]} : vector<8x192xf32> to vector<8x64xf32>
    %712 = vector.extract_strided_slice %710 {offsets = [0, 0], sizes = [8, 64], strides = [1, 1]} : vector<8x192xf32> to vector<8x64xf32>
    %713 = arith.addf %711, %712 : vector<8x64xf32>
    %714 = arith.negf %713 : vector<8x64xf32>
    %715 = math.exp %714 : vector<8x64xf32>
    %cst_119 = arith.constant 1.000000e+00 : f32
    %716 = vector.broadcast %cst_119 : f32 to vector<8x64xf32>
    %717 = arith.addf %716, %715 : vector<8x64xf32>
    %718 = arith.divf %716, %717 : vector<8x64xf32>
    %719 = vector.extract_strided_slice %565 {offsets = [0, 64], sizes = [8, 64], strides = [1, 1]} : vector<8x192xf32> to vector<8x64xf32>
    %720 = vector.extract_strided_slice %710 {offsets = [0, 64], sizes = [8, 64], strides = [1, 1]} : vector<8x192xf32> to vector<8x64xf32>
    %721 = arith.addf %719, %720 : vector<8x64xf32>
    %722 = arith.negf %721 : vector<8x64xf32>
    %723 = math.exp %722 : vector<8x64xf32>
    %cst_120 = arith.constant 1.000000e+00 : f32
    %724 = vector.broadcast %cst_120 : f32 to vector<8x64xf32>
    %725 = arith.addf %724, %723 : vector<8x64xf32>
    %726 = arith.divf %724, %725 : vector<8x64xf32>
    %727 = vector.extract_strided_slice %565 {offsets = [0, 128], sizes = [8, 64], strides = [1, 1]} : vector<8x192xf32> to vector<8x64xf32>
    %728 = vector.extract_strided_slice %710 {offsets = [0, 128], sizes = [8, 64], strides = [1, 1]} : vector<8x192xf32> to vector<8x64xf32>
    %729 = vector.broadcast %535 : vector<1x64xf32> to vector<8x64xf32>
    %730 = arith.addf %728, %729 : vector<8x64xf32>
    %731 = arith.mulf %718, %730 : vector<8x64xf32>
    %732 = arith.addf %727, %731 : vector<8x64xf32>
    %733 = math.tanh %732 : vector<8x64xf32>
    %cst_121 = arith.constant 1.000000e+00 : f32
    %734 = vector.broadcast %cst_121 : f32 to vector<8x64xf32>
    %735 = arith.subf %734, %726 : vector<8x64xf32>
    %736 = arith.mulf %735, %733 : vector<8x64xf32>
    %737 = arith.mulf %726, %709 : vector<8x64xf32>
    %738 = arith.addf %736, %737 : vector<8x64xf32>
    %739 = arith.mulf %114, %738 : vector<8x64xf32>
    %740 = arith.mulf %120, %709 : vector<8x64xf32>
    %741 = arith.addf %739, %740 : vector<8x64xf32>
    %cst_122 = arith.constant dense<0.000000e+00> : vector<8x192xf32>
    %742 = tpu.matmul %741, %534, %cst_122 {dimension_numbers = #tpu.dot_dimension_numbers<[1], [0], [0], [1], [0, 0, 1, 1], [], []>} : vector<8x64xf32>, vector<64x192xf32>, vector<8x192xf32> -> vector<8x192xf32>
    %743 = vector.extract_strided_slice %570 {offsets = [0, 0], sizes = [8, 64], strides = [1, 1]} : vector<8x192xf32> to vector<8x64xf32>
    %744 = vector.extract_strided_slice %742 {offsets = [0, 0], sizes = [8, 64], strides = [1, 1]} : vector<8x192xf32> to vector<8x64xf32>
    %745 = arith.addf %743, %744 : vector<8x64xf32>
    %746 = arith.negf %745 : vector<8x64xf32>
    %747 = math.exp %746 : vector<8x64xf32>
    %cst_123 = arith.constant 1.000000e+00 : f32
    %748 = vector.broadcast %cst_123 : f32 to vector<8x64xf32>
    %749 = arith.addf %748, %747 : vector<8x64xf32>
    %750 = arith.divf %748, %749 : vector<8x64xf32>
    %751 = vector.extract_strided_slice %570 {offsets = [0, 64], sizes = [8, 64], strides = [1, 1]} : vector<8x192xf32> to vector<8x64xf32>
    %752 = vector.extract_strided_slice %742 {offsets = [0, 64], sizes = [8, 64], strides = [1, 1]} : vector<8x192xf32> to vector<8x64xf32>
    %753 = arith.addf %751, %752 : vector<8x64xf32>
    %754 = arith.negf %753 : vector<8x64xf32>
    %755 = math.exp %754 : vector<8x64xf32>
    %cst_124 = arith.constant 1.000000e+00 : f32
    %756 = vector.broadcast %cst_124 : f32 to vector<8x64xf32>
    %757 = arith.addf %756, %755 : vector<8x64xf32>
    %758 = arith.divf %756, %757 : vector<8x64xf32>
    %759 = vector.extract_strided_slice %570 {offsets = [0, 128], sizes = [8, 64], strides = [1, 1]} : vector<8x192xf32> to vector<8x64xf32>
    %760 = vector.extract_strided_slice %742 {offsets = [0, 128], sizes = [8, 64], strides = [1, 1]} : vector<8x192xf32> to vector<8x64xf32>
    %761 = vector.broadcast %535 : vector<1x64xf32> to vector<8x64xf32>
    %762 = arith.addf %760, %761 : vector<8x64xf32>
    %763 = arith.mulf %750, %762 : vector<8x64xf32>
    %764 = arith.addf %759, %763 : vector<8x64xf32>
    %765 = math.tanh %764 : vector<8x64xf32>
    %cst_125 = arith.constant 1.000000e+00 : f32
    %766 = vector.broadcast %cst_125 : f32 to vector<8x64xf32>
    %767 = arith.subf %766, %758 : vector<8x64xf32>
    %768 = arith.mulf %767, %765 : vector<8x64xf32>
    %769 = arith.mulf %758, %741 : vector<8x64xf32>
    %770 = arith.addf %768, %769 : vector<8x64xf32>
    %771 = arith.mulf %135, %770 : vector<8x64xf32>
    %772 = arith.mulf %141, %741 : vector<8x64xf32>
    %773 = arith.addf %771, %772 : vector<8x64xf32>
    %cst_126 = arith.constant dense<0.000000e+00> : vector<8x192xf32>
    %774 = tpu.matmul %773, %534, %cst_126 {dimension_numbers = #tpu.dot_dimension_numbers<[1], [0], [0], [1], [0, 0, 1, 1], [], []>} : vector<8x64xf32>, vector<64x192xf32>, vector<8x192xf32> -> vector<8x192xf32>
    %775 = vector.extract_strided_slice %575 {offsets = [0, 0], sizes = [8, 64], strides = [1, 1]} : vector<8x192xf32> to vector<8x64xf32>
    %776 = vector.extract_strided_slice %774 {offsets = [0, 0], sizes = [8, 64], strides = [1, 1]} : vector<8x192xf32> to vector<8x64xf32>
    %777 = arith.addf %775, %776 : vector<8x64xf32>
    %778 = arith.negf %777 : vector<8x64xf32>
    %779 = math.exp %778 : vector<8x64xf32>
    %cst_127 = arith.constant 1.000000e+00 : f32
    %780 = vector.broadcast %cst_127 : f32 to vector<8x64xf32>
    %781 = arith.addf %780, %779 : vector<8x64xf32>
    %782 = arith.divf %780, %781 : vector<8x64xf32>
    %783 = vector.extract_strided_slice %575 {offsets = [0, 64], sizes = [8, 64], strides = [1, 1]} : vector<8x192xf32> to vector<8x64xf32>
    %784 = vector.extract_strided_slice %774 {offsets = [0, 64], sizes = [8, 64], strides = [1, 1]} : vector<8x192xf32> to vector<8x64xf32>
    %785 = arith.addf %783, %784 : vector<8x64xf32>
    %786 = arith.negf %785 : vector<8x64xf32>
    %787 = math.exp %786 : vector<8x64xf32>
    %cst_128 = arith.constant 1.000000e+00 : f32
    %788 = vector.broadcast %cst_128 : f32 to vector<8x64xf32>
    %789 = arith.addf %788, %787 : vector<8x64xf32>
    %790 = arith.divf %788, %789 : vector<8x64xf32>
    %791 = vector.extract_strided_slice %575 {offsets = [0, 128], sizes = [8, 64], strides = [1, 1]} : vector<8x192xf32> to vector<8x64xf32>
    %792 = vector.extract_strided_slice %774 {offsets = [0, 128], sizes = [8, 64], strides = [1, 1]} : vector<8x192xf32> to vector<8x64xf32>
    %793 = vector.broadcast %535 : vector<1x64xf32> to vector<8x64xf32>
    %794 = arith.addf %792, %793 : vector<8x64xf32>
    %795 = arith.mulf %782, %794 : vector<8x64xf32>
    %796 = arith.addf %791, %795 : vector<8x64xf32>
    %797 = math.tanh %796 : vector<8x64xf32>
    %cst_129 = arith.constant 1.000000e+00 : f32
    %798 = vector.broadcast %cst_129 : f32 to vector<8x64xf32>
    %799 = arith.subf %798, %790 : vector<8x64xf32>
    %800 = arith.mulf %799, %797 : vector<8x64xf32>
    %801 = arith.mulf %790, %773 : vector<8x64xf32>
    %802 = arith.addf %800, %801 : vector<8x64xf32>
    %803 = arith.mulf %156, %802 : vector<8x64xf32>
    %804 = arith.mulf %162, %773 : vector<8x64xf32>
    %805 = arith.addf %803, %804 : vector<8x64xf32>
    %cst_130 = arith.constant dense<0.000000e+00> : vector<8x192xf32>
    %806 = tpu.matmul %805, %534, %cst_130 {dimension_numbers = #tpu.dot_dimension_numbers<[1], [0], [0], [1], [0, 0, 1, 1], [], []>} : vector<8x64xf32>, vector<64x192xf32>, vector<8x192xf32> -> vector<8x192xf32>
    %807 = vector.extract_strided_slice %580 {offsets = [0, 0], sizes = [8, 64], strides = [1, 1]} : vector<8x192xf32> to vector<8x64xf32>
    %808 = vector.extract_strided_slice %806 {offsets = [0, 0], sizes = [8, 64], strides = [1, 1]} : vector<8x192xf32> to vector<8x64xf32>
    %809 = arith.addf %807, %808 : vector<8x64xf32>
    %810 = arith.negf %809 : vector<8x64xf32>
    %811 = math.exp %810 : vector<8x64xf32>
    %cst_131 = arith.constant 1.000000e+00 : f32
    %812 = vector.broadcast %cst_131 : f32 to vector<8x64xf32>
    %813 = arith.addf %812, %811 : vector<8x64xf32>
    %814 = arith.divf %812, %813 : vector<8x64xf32>
    %815 = vector.extract_strided_slice %580 {offsets = [0, 64], sizes = [8, 64], strides = [1, 1]} : vector<8x192xf32> to vector<8x64xf32>
    %816 = vector.extract_strided_slice %806 {offsets = [0, 64], sizes = [8, 64], strides = [1, 1]} : vector<8x192xf32> to vector<8x64xf32>
    %817 = arith.addf %815, %816 : vector<8x64xf32>
    %818 = arith.negf %817 : vector<8x64xf32>
    %819 = math.exp %818 : vector<8x64xf32>
    %cst_132 = arith.constant 1.000000e+00 : f32
    %820 = vector.broadcast %cst_132 : f32 to vector<8x64xf32>
    %821 = arith.addf %820, %819 : vector<8x64xf32>
    %822 = arith.divf %820, %821 : vector<8x64xf32>
    %823 = vector.extract_strided_slice %580 {offsets = [0, 128], sizes = [8, 64], strides = [1, 1]} : vector<8x192xf32> to vector<8x64xf32>
    %824 = vector.extract_strided_slice %806 {offsets = [0, 128], sizes = [8, 64], strides = [1, 1]} : vector<8x192xf32> to vector<8x64xf32>
    %825 = vector.broadcast %535 : vector<1x64xf32> to vector<8x64xf32>
    %826 = arith.addf %824, %825 : vector<8x64xf32>
    %827 = arith.mulf %814, %826 : vector<8x64xf32>
    %828 = arith.addf %823, %827 : vector<8x64xf32>
    %829 = math.tanh %828 : vector<8x64xf32>
    %cst_133 = arith.constant 1.000000e+00 : f32
    %830 = vector.broadcast %cst_133 : f32 to vector<8x64xf32>
    %831 = arith.subf %830, %822 : vector<8x64xf32>
    %832 = arith.mulf %831, %829 : vector<8x64xf32>
    %833 = arith.mulf %822, %805 : vector<8x64xf32>
    %834 = arith.addf %832, %833 : vector<8x64xf32>
    %835 = arith.mulf %177, %834 : vector<8x64xf32>
    %836 = arith.mulf %183, %805 : vector<8x64xf32>
    %837 = arith.addf %835, %836 : vector<8x64xf32>
    %838 = vector.extract_strided_slice %837 {offsets = [0, 0], sizes = [8, 32], strides = [1, 1]} : vector<8x64xf32> to vector<8x32xf32>
    %c2 = arith.constant 2 : index
    %c0_134 = arith.constant 0 : index
    %c0_135 = arith.constant 0 : index
    %839 = vector.load %arg15[%c2, %c0_134, %c0_135] : memref<4x8x32xf32, #tpu.memory_space<vmem>>, vector<1x8x32xf32>
    %840 = vector.shape_cast %839 : vector<1x8x32xf32> to vector<8x32xf32>
    %841 = vector.shape_cast %838 : vector<8x32xf32> to vector<1x8x32xf32>
    tpu.vector_store %arg15[%c2, %c0_134, %c0_135], %841 {strides = array<i32>} : memref<4x8x32xf32, #tpu.memory_space<vmem>>, vector<1x8x32xf32>,
    %842 = vector.extract_strided_slice %837 {offsets = [0, 32], sizes = [8, 32], strides = [1, 1]} : vector<8x64xf32> to vector<8x32xf32>
    %c3 = arith.constant 3 : index
    %c0_136 = arith.constant 0 : index
    %c0_137 = arith.constant 0 : index
    %843 = vector.load %arg15[%c3, %c0_136, %c0_137] : memref<4x8x32xf32, #tpu.memory_space<vmem>>, vector<1x8x32xf32>
    %844 = vector.shape_cast %843 : vector<1x8x32xf32> to vector<8x32xf32>
    %845 = vector.shape_cast %842 : vector<8x32xf32> to vector<1x8x32xf32>
    tpu.vector_store %arg15[%c3, %c0_136, %c0_137], %845 {strides = array<i32>} : memref<4x8x32xf32, #tpu.memory_space<vmem>>, vector<1x8x32xf32>,
    %cst_138 = arith.constant 0.000000e+00 : f32
    %846 = vector.broadcast %cst_138 : f32 to vector<8x64xf32>
    %847 = arith.mulf %43, %611 : vector<8x64xf32>
    %848 = arith.addf %846, %847 : vector<8x64xf32>
    %849 = arith.mulf %64, %643 : vector<8x64xf32>
    %850 = arith.addf %848, %849 : vector<8x64xf32>
    %851 = arith.mulf %85, %675 : vector<8x64xf32>
    %852 = arith.addf %850, %851 : vector<8x64xf32>
    %853 = arith.mulf %106, %707 : vector<8x64xf32>
    %854 = arith.addf %852, %853 : vector<8x64xf32>
    %855 = arith.mulf %127, %739 : vector<8x64xf32>
    %856 = arith.addf %854, %855 : vector<8x64xf32>
    %857 = arith.mulf %148, %771 : vector<8x64xf32>
    %858 = arith.addf %856, %857 : vector<8x64xf32>
    %859 = arith.mulf %169, %803 : vector<8x64xf32>
    %860 = arith.addf %858, %859 : vector<8x64xf32>
    %861 = arith.mulf %190, %835 : vector<8x64xf32>
    %862 = arith.addf %860, %861 : vector<8x64xf32>
    %c0_139 = arith.constant 0 : index
    %c0_140 = arith.constant 0 : index
    %863 = vector.load %arg12[%c0_139, %c0_140] : memref<1x64xf32, #tpu.memory_space<vmem>>, vector<1x64xf32>
    %864 = vector.broadcast %863 : vector<1x64xf32> to vector<8x64xf32>
    %865 = arith.mulf %862, %864 : vector<8x64xf32>
    %cst_141 = arith.constant dense<0.000000e+00> : vector<8xf32>
    %866 = vector.multi_reduction <add>, %865, %cst_141 [1] : vector<8x64xf32> to vector<8xf32>
    %867 = vector.shape_cast %866 : vector<8xf32> to vector<8x1xf32>
    %c0_142 = arith.constant 0 : index
    %c0_143 = arith.constant 0 : index
    %868 = vector.load %arg13[%c0_142, %c0_143] : memref<1x1xf32, #tpu.memory_space<vmem>>, vector<1x1xf32>
    %869 = vector.broadcast %868 : vector<1x1xf32> to vector<8x1xf32>
    %870 = arith.addf %867, %869 : vector<8x1xf32>
    %c0_144 = arith.constant 0 : index
    %c0_145 = arith.constant 0 : index
    %871 = vector.load %arg14[%c0_144, %c0_145] : memref<8x1xf32, #tpu.memory_space<vmem>>, vector<8x1xf32>
    tpu.vector_store %arg14[%c0_144, %c0_145], %870 {strides = array<i32>} : memref<8x1xf32, #tpu.memory_space<vmem>>, vector<8x1xf32>,
    return
  }
}

</mosaic_0001>

<llo_original>
// kernel: embedding_gru_forward.1
$region0: #{embedding_gru_forward.1}
  #allocation0 [shape = 'u32[]', space=smem, size = 0x4, offset = 0x4, fixed_abs, tag = 'smem constant byte address 0x4 - core index']
  #allocation1 [shape = 'u32[144,128]{1,0:T(1,128)}', space=vmem, size = 0x12000, scoped, tag = 'internal scratch']
  #allocation2 [shape = 'f32[1,1]{1,0:T(1,128)S(1)}', space=vmem, size = 0x200, scoped, tag = 'scoped memory for embedding_gru_forward.1']
  %s0 = inlined_call_operand.vmem [shape: s32[8,1], index: 0, kind: input, shape index: {}]
  %s1 = inlined_call_operand.vmem [shape: bf16[64,1024], index: 1, kind: input, shape index: {}]
  %s2 = inlined_call_operand.vmem [shape: bf16[1024,128], index: 2, kind: input, shape index: {}]
  %s3 = inlined_call_operand.vmem [shape: f32[1,128], index: 3, kind: input, shape index: {}]
  %s4 = inlined_call_operand.vmem [shape: f32[128,192], index: 4, kind: input, shape index: {}]
  %s5 = inlined_call_operand.vmem [shape: f32[1,192], index: 5, kind: input, shape index: {}]
  %s6 = inlined_call_operand.vmem [shape: f32[64,192], index: 6, kind: input, shape index: {}]
  %s7 = inlined_call_operand.vmem [shape: f32[1,64], index: 7, kind: input, shape index: {}]
  %s8 = inlined_call_operand.vmem [shape: f32[64,192], index: 8, kind: input, shape index: {}]
  %s9 = inlined_call_operand.vmem [shape: f32[1,192], index: 9, kind: input, shape index: {}]
  %s10 = inlined_call_operand.vmem [shape: f32[64,192], index: 10, kind: input, shape index: {}]
  %s11 = inlined_call_operand.vmem [shape: f32[1,64], index: 11, kind: input, shape index: {}]
  %s12 = inlined_call_operand.vmem [shape: f32[1,64], index: 12, kind: input, shape index: {}]
  %s13 = inlined_call_operand.<no memory space> [shape: f32[1,1], index: 13, kind: input, shape index: {}]
  %s14 = inlined_call_operand.vmem [shape: f32[8,1], index: 14, kind: output, shape index: {0}]
  %s15 = inlined_call_operand.vmem [shape: f32[4,8,32], index: 15, kind: output, shape index: {1}]
  %16 = xla_tuple %s14, %s15
  %s17 = sld [smem:[#allocation0]]
  $region74: #{embedding_gru_forward.1} parent=0
    _
  %s19 = ssub.s32 1, %s17
  %s20 = scalar_select 0, %s19, %s17
  %v21 = vstv %s13
  %22 = vst [vmem:[#allocation2] sm:$0x1] %v21
  // Predicated region
  $region2: #{embedding_gru_forward.1} parent=0 // pred_check
    _
  $region3: #{embedding_gru_forward.1} parent=0 // pred_check_branch
    %24 = sbr.rel (0) target = $region5
  $region4: #{embedding_gru_forward.1} parent=0 // pred_region
    _
  $region5: #{embedding_gru_forward.1} parent=0 // pred_fallthru
    _
  // Predicated region
  $region6: #{embedding_gru_forward.1} parent=0 // pred_check
    _
  $region7: #{embedding_gru_forward.1} parent=0 // pred_check_branch
    %26 = sbr.rel (0) target = $region9
  $region8: #{embedding_gru_forward.1} parent=0 // pred_region
    _
  $region9: #{embedding_gru_forward.1} parent=0 // pred_fallthru
    _
  // Predicated region
  $region10: #{embedding_gru_forward.1} parent=0 // pred_check
    _
  $region11: #{embedding_gru_forward.1} parent=0 // pred_check_branch
    %28 = sbr.rel (0) target = $region13
  $region12: #{embedding_gru_forward.1} parent=0 // pred_region
    _
  $region13: #{embedding_gru_forward.1} parent=0 // pred_fallthru
    _
  // Predicated region
  $region14: #{embedding_gru_forward.1} parent=0 // pred_check
    _
  $region15: #{embedding_gru_forward.1} parent=0 // pred_check_branch
    %30 = sbr.rel (0) target = $region17
  $region16: #{embedding_gru_forward.1} parent=0 // pred_region
    _
  $region17: #{embedding_gru_forward.1} parent=0 // pred_fallthru
    _
  // Predicated region
  $region18: #{embedding_gru_forward.1} parent=0 // pred_check
    _
  $region19: #{embedding_gru_forward.1} parent=0 // pred_check_branch
    %32 = sbr.rel (0) target = $region21
  $region20: #{embedding_gru_forward.1} parent=0 // pred_region
    _
  $region21: #{embedding_gru_forward.1} parent=0 // pred_fallthru
    _
  // Predicated region
  $region22: #{embedding_gru_forward.1} parent=0 // pred_check
    _
  $region23: #{embedding_gru_forward.1} parent=0 // pred_check_branch
    %34 = sbr.rel (0) target = $region25
  $region24: #{embedding_gru_forward.1} parent=0 // pred_region
    _
  $region25: #{embedding_gru_forward.1} parent=0 // pred_fallthru
    _
  // Predicated region
  $region26: #{embedding_gru_forward.1} parent=0 // pred_check
    _
  $region27: #{embedding_gru_forward.1} parent=0 // pred_check_branch
    %36 = sbr.rel (0) target = $region29
  $region28: #{embedding_gru_forward.1} parent=0 // pred_region
    _
  $region29: #{embedding_gru_forward.1} parent=0 // pred_fallthru
    _
  // Predicated region
  $region30: #{embedding_gru_forward.1} parent=0 // pred_check
    _
  $region31: #{embedding_gru_forward.1} parent=0 // pred_check_branch
    %38 = sbr.rel (0) target = $region33
  $region32: #{embedding_gru_forward.1} parent=0 // pred_region
    _
  $region33: #{embedding_gru_forward.1} parent=0 // pred_fallthru
    _
  // Predicated region
  $region34: #{embedding_gru_forward.1} parent=0 // pred_check
    _
  $region35: #{embedding_gru_forward.1} parent=0 // pred_check_branch
    %40 = sbr.rel (0) target = $region37
  $region36: #{embedding_gru_forward.1} parent=0 // pred_region
    _
  $region37: #{embedding_gru_forward.1} parent=0 // pred_fallthru
    _
  // Predicated region
  $region38: #{embedding_gru_forward.1} parent=0 // pred_check
    _
  $region39: #{embedding_gru_forward.1} parent=0 // pred_check_branch
    %42 = sbr.rel (0) target = $region41
  $region40: #{embedding_gru_forward.1} parent=0 // pred_region
    _
  $region41: #{embedding_gru_forward.1} parent=0 // pred_fallthru
    _
  // Predicated region
  $region42: #{embedding_gru_forward.1} parent=0 // pred_check
    _
  $region43: #{embedding_gru_forward.1} parent=0 // pred_check_branch
    %44 = sbr.rel (0) target = $region45
  $region44: #{embedding_gru_forward.1} parent=0 // pred_region
    _
  $region45: #{embedding_gru_forward.1} parent=0 // pred_fallthru
    _
  // Predicated region
  $region46: #{embedding_gru_forward.1} parent=0 // pred_check
    _
  $region47: #{embedding_gru_forward.1} parent=0 // pred_check_branch
    %46 = sbr.rel (0) target = $region49
  $region48: #{embedding_gru_forward.1} parent=0 // pred_region
    _
  $region49: #{embedding_gru_forward.1} parent=0 // pred_fallthru
    _
  // Predicated region
  $region50: #{embedding_gru_forward.1} parent=0 // pred_check
    _
  $region51: #{embedding_gru_forward.1} parent=0 // pred_check_branch
    %48 = sbr.rel (0) target = $region53
  $region52: #{embedding_gru_forward.1} parent=0 // pred_region
    _
  $region53: #{embedding_gru_forward.1} parent=0 // pred_fallthru
    _
  // Predicated region
  $region54: #{embedding_gru_forward.1} parent=0 // pred_check
    _
  $region55: #{embedding_gru_forward.1} parent=0 // pred_check_branch
    %50 = sbr.rel (0) target = $region57
  $region56: #{embedding_gru_forward.1} parent=0 // pred_region
    _
  $region57: #{embedding_gru_forward.1} parent=0 // pred_fallthru
    _
  %v52 = vld [vmem:[%s0] sm:$0xff]
  %v53 = vlaneseq
  %v54 = vand.u32 %v53, 127
  %vm55 = vcmp.lt.s32.totalorder %v54, 32
  %v56 = vadd.s32 %v54, 128
  %vm57 = vcmp.lt.s32.totalorder %v54, 0
  %v58 = vsub.s32 0, %v54
  %v59 = vsel %vm57, %v58, %v54
  %v60 = vshrl.u32 %v59, 6
  %v61 = vand.u32 %v59, 63
  %v62 = vsub.s32 0, %v61
  %v63 = vsel %vm57, %v62, %v61
  %vm64 = vcmp.lt.s32.totalorder %v56, 0
  %v65 = vsub.s32 0, %v56
  %v66 = vsel %vm64, %v65, %v56
  %v67 = vshrl.u32 %v66, 6
  %v68 = vand.u32 %v66, 63
  %v69 = vsub.s32 0, %v68
  %v70 = vsel %vm64, %v69, %v68
  %vm71 = vcmp.ne.s32.totalorder %v63, 0
  %vm72 = vcmp.ne.s32.totalorder %v70, 0
  %vm73 = vcmp.lt.s32.totalorder %v63, 0
  %vm74 = vcmp.lt.s32.totalorder %v70, 0
  %vm75 = vmand %vm73, %vm71
  %vm76 = vmand %vm74, %vm72
  %v77 = vadd.s32 %v63, 64
  %v78 = vadd.s32 %v70, 64
  %v79 = vsel %vm75, %v77, %v63
  %v80 = vsel %vm76, %v78, %v70
  %vm81 = vcmp.lt.s32.totalorder %v79, 32
  %vm82 = vcmp.lt.s32.totalorder %v80, 32
  %v83 = vsel %vm55, 0, 7
  %84 = vset.pattern.permute.xlu0 0
  %85 = vperm.xlu0 %84, %v52
  %v86 = vpop.permute.xlu0 %85
  %vm87 = vcmp.gt.s32.totalorder %v86, %v83
  %v88 = vsel %vm87, 1, 0
  %v89 = vcvt.s32.f32 %v88
  %v90 = vsub.f32 1.0, %v89
  %v91 = vsel %vm55, 1, 0
  %vm92 = vcmp.eq.s32.totalorder %v91, 1
  %v93 = vsel %vm92, %v90, 0.0
  %v94 = vadd.s32 %v83, 1
  %vm95 = vcmp.eq.s32.totalorder %v86, %v94
  %v96 = vsel %vm95, 1, 0
  %v97 = vcvt.s32.f32 %v96
  %v98 = vsel %vm55, 1, 6
  %vm99 = vcmp.gt.s32.totalorder %v86, %v98
  %v100 = vsel %vm99, 1, 0
  %v101 = vcvt.s32.f32 %v100
  %v102 = vsub.f32 1.0, %v101
  %v103 = vsel %vm92, %v102, 0.0
  %v104 = vadd.s32 %v98, 1
  %vm105 = vcmp.eq.s32.totalorder %v86, %v104
  %v106 = vsel %vm105, 1, 0
  %v107 = vcvt.s32.f32 %v106
  %v108 = vsel %vm55, 2, 5
  %vm109 = vcmp.gt.s32.totalorder %v86, %v108
  %v110 = vsel %vm109, 1, 0
  %v111 = vcvt.s32.f32 %v110
  %v112 = vsub.f32 1.0, %v111
  %v113 = vsel %vm92, %v112, 0.0
  %v114 = vadd.s32 %v108, 1
  %vm115 = vcmp.eq.s32.totalorder %v86, %v114
  %v116 = vsel %vm115, 1, 0
  %v117 = vcvt.s32.f32 %v116
  %v118 = vsel %vm55, 3, 4
  %vm119 = vcmp.gt.s32.totalorder %v86, %v118
  %v120 = vsel %vm119, 1, 0
  %v121 = vcvt.s32.f32 %v120
  %v122 = vsub.f32 1.0, %v121
  %v123 = vsel %vm92, %v122, 0.0
  %v124 = vadd.s32 %v118, 1
  %vm125 = vcmp.eq.s32.totalorder %v86, %v124
  %v126 = vsel %vm125, 1, 0
  %v127 = vcvt.s32.f32 %v126
  %v128 = vsel %vm55, 4, 3
  %vm129 = vcmp.gt.s32.totalorder %v86, %v128
  %v130 = vsel %vm129, 1, 0
  %v131 = vcvt.s32.f32 %v130
  %v132 = vsub.f32 1.0, %v131
  %v133 = vsel %vm92, %v132, 0.0
  %v134 = vadd.s32 %v128, 1
  %vm135 = vcmp.eq.s32.totalorder %v86, %v134
  %v136 = vsel %vm135, 1, 0
  %v137 = vcvt.s32.f32 %v136
  %v138 = vsel %vm55, 5, 2
  %vm139 = vcmp.gt.s32.totalorder %v86, %v138
  %v140 = vsel %vm139, 1, 0
  %v141 = vcvt.s32.f32 %v140
  %v142 = vsub.f32 1.0, %v141
  %v143 = vsel %vm92, %v142, 0.0
  %v144 = vadd.s32 %v138, 1
  %vm145 = vcmp.eq.s32.totalorder %v86, %v144
  %v146 = vsel %vm145, 1, 0
  %v147 = vcvt.s32.f32 %v146
  %v148 = vsel %vm55, 6, 1
  %vm149 = vcmp.gt.s32.totalorder %v86, %v148
  %v150 = vsel %vm149, 1, 0
  %v151 = vcvt.s32.f32 %v150
  %v152 = vsub.f32 1.0, %v151
  %v153 = vsel %vm92, %v152, 0.0
  %v154 = vadd.s32 %v148, 1
  %vm155 = vcmp.eq.s32.totalorder %v86, %v154
  %v156 = vsel %vm155, 1, 0
  %v157 = vcvt.s32.f32 %v156
  %v158 = vsel %vm55, 7, 0
  %vm159 = vcmp.gt.s32.totalorder %v86, %v158
  %v160 = vsel %vm159, 1, 0
  %v161 = vcvt.s32.f32 %v160
  %v162 = vsub.f32 1.0, %v161
  %v163 = vsel %vm92, %v162, 0.0
  %v164 = vadd.s32 %v158, 1
  %vm165 = vcmp.eq.s32.totalorder %v86, %v164
  %v166 = vsel %vm165, 1, 0
  %v167 = vcvt.s32.f32 %v166
  %v168 = vld [vmem:[%s1] sm:$0xff]
  %v169 = vld [vmem:[%s1 + $0x8] sm:$0xff]
  %v170 = vld [vmem:[%s1 + $0x10] sm:$0xff]
  %v171 = vld [vmem:[%s1 + $0x18] sm:$0xff]
  %v172 = vld [vmem:[%s1 + $0x20] sm:$0xff]
  %v173 = vld [vmem:[%s1 + $0x28] sm:$0xff]
  %v174 = vld [vmem:[%s1 + $0x30] sm:$0xff]
  %v175 = vld [vmem:[%s1 + $0x38] sm:$0xff]
  %v176 = vld [vmem:[%s1 + $0x40] sm:$0xff]
  %v177 = vld [vmem:[%s1 + $0x48] sm:$0xff]
  %v178 = vld [vmem:[%s1 + $0x50] sm:$0xff]
  %v179 = vld [vmem:[%s1 + $0x58] sm:$0xff]
  %v180 = vld [vmem:[%s1 + $0x60] sm:$0xff]
  %v181 = vld [vmem:[%s1 + $0x68] sm:$0xff]
  %v182 = vld [vmem:[%s1 + $0x70] sm:$0xff]
  %v183 = vld [vmem:[%s1 + $0x78] sm:$0xff]
  %v184 = vld [vmem:[%s1 + $0x80] sm:$0xff]
  %v185 = vld [vmem:[%s1 + $0x88] sm:$0xff]
  %v186 = vld [vmem:[%s1 + $0x90] sm:$0xff]
  %v187 = vld [vmem:[%s1 + $0x98] sm:$0xff]
  %v188 = vld [vmem:[%s1 + $0xa0] sm:$0xff]
  %v189 = vld [vmem:[%s1 + $0xa8] sm:$0xff]
  %v190 = vld [vmem:[%s1 + $0xb0] sm:$0xff]
  %v191 = vld [vmem:[%s1 + $0xb8] sm:$0xff]
  %v192 = vld [vmem:[%s1 + $0xc0] sm:$0xff]
  %v193 = vld [vmem:[%s1 + $0xc8] sm:$0xff]
  %v194 = vld [vmem:[%s1 + $0xd0] sm:$0xff]
  %v195 = vld [vmem:[%s1 + $0xd8] sm:$0xff]
  %v196 = vld [vmem:[%s1 + $0xe0] sm:$0xff]
  %v197 = vld [vmem:[%s1 + $0xe8] sm:$0xff]
  %v198 = vld [vmem:[%s1 + $0xf0] sm:$0xff]
  %v199 = vld [vmem:[%s1 + $0xf8] sm:$0xff]
  %v200 = vld [vmem:[%s2] sm:$0xf]
  %v201 = vld [vmem:[%s2 + $0x4] sm:$0xf]
  %v202 = vld [vmem:[%s2 + $0x8] sm:$0xf]
  %v203 = vld [vmem:[%s2 + $0xc] sm:$0xf]
  %v204 = vld [vmem:[%s2 + $0x10] sm:$0xf]
  %v205 = vld [vmem:[%s2 + $0x14] sm:$0xf]
  %v206 = vld [vmem:[%s2 + $0x18] sm:$0xf]
  %v207 = vld [vmem:[%s2 + $0x1c] sm:$0xf]
  %v208 = vld [vmem:[%s2 + $0x20] sm:$0xf]
  %v209 = vld [vmem:[%s2 + $0x24] sm:$0xf]
  %v210 = vld [vmem:[%s2 + $0x28] sm:$0xf]
  %v211 = vld [vmem:[%s2 + $0x2c] sm:$0xf]
  %v212 = vld [vmem:[%s2 + $0x30] sm:$0xf]
  %v213 = vld [vmem:[%s2 + $0x34] sm:$0xf]
  %v214 = vld [vmem:[%s2 + $0x38] sm:$0xf]
  %v215 = vld [vmem:[%s2 + $0x3c] sm:$0xf]
  %v216 = vld [vmem:[%s2 + $0x40] sm:$0xf]
  %v217 = vld [vmem:[%s2 + $0x44] sm:$0xf]
  %v218 = vld [vmem:[%s2 + $0x48] sm:$0xf]
  %v219 = vld [vmem:[%s2 + $0x4c] sm:$0xf]
  %v220 = vld [vmem:[%s2 + $0x50] sm:$0xf]
  %v221 = vld [vmem:[%s2 + $0x54] sm:$0xf]
  %v222 = vld [vmem:[%s2 + $0x58] sm:$0xf]
  %v223 = vld [vmem:[%s2 + $0x5c] sm:$0xf]
  %v224 = vld [vmem:[%s2 + $0x60] sm:$0xf]
  %v225 = vld [vmem:[%s2 + $0x64] sm:$0xf]
  %v226 = vld [vmem:[%s2 + $0x68] sm:$0xf]
  %v227 = vld [vmem:[%s2 + $0x6c] sm:$0xf]
  %v228 = vld [vmem:[%s2 + $0x70] sm:$0xf]
  %v229 = vld [vmem:[%s2 + $0x74] sm:$0xf]
  %v230 = vld [vmem:[%s2 + $0x78] sm:$0xf]
  %v231 = vld [vmem:[%s2 + $0x7c] sm:$0xf]
  %v232 = vld [vmem:[%s2 + $0x80] sm:$0xf]
  %v233 = vld [vmem:[%s2 + $0x84] sm:$0xf]
  %v234 = vld [vmem:[%s2 + $0x88] sm:$0xf]
  %v235 = vld [vmem:[%s2 + $0x8c] sm:$0xf]
  %v236 = vld [vmem:[%s2 + $0x90] sm:$0xf]
  %v237 = vld [vmem:[%s2 + $0x94] sm:$0xf]
  %v238 = vld [vmem:[%s2 + $0x98] sm:$0xf]
  %v239 = vld [vmem:[%s2 + $0x9c] sm:$0xf]
  %v240 = vld [vmem:[%s2 + $0xa0] sm:$0xf]
  %v241 = vld [vmem:[%s2 + $0xa4] sm:$0xf]
  %v242 = vld [vmem:[%s2 + $0xa8] sm:$0xf]
  %v243 = vld [vmem:[%s2 + $0xac] sm:$0xf]
  %v244 = vld [vmem:[%s2 + $0xb0] sm:$0xf]
  %v245 = vld [vmem:[%s2 + $0xb4] sm:$0xf]
  %v246 = vld [vmem:[%s2 + $0xb8] sm:$0xf]
  %v247 = vld [vmem:[%s2 + $0xbc] sm:$0xf]
  %v248 = vld [vmem:[%s2 + $0xc0] sm:$0xf]
  %v249 = vld [vmem:[%s2 + $0xc4] sm:$0xf]
  %v250 = vld [vmem:[%s2 + $0xc8] sm:$0xf]
  %v251 = vld [vmem:[%s2 + $0xcc] sm:$0xf]
  %v252 = vld [vmem:[%s2 + $0xd0] sm:$0xf]
  %v253 = vld [vmem:[%s2 + $0xd4] sm:$0xf]
  %v254 = vld [vmem:[%s2 + $0xd8] sm:$0xf]
  %v255 = vld [vmem:[%s2 + $0xdc] sm:$0xf]
  %v256 = vld [vmem:[%s2 + $0xe0] sm:$0xf]
  %v257 = vld [vmem:[%s2 + $0xe4] sm:$0xf]
  %v258 = vld [vmem:[%s2 + $0xe8] sm:$0xf]
  %v259 = vld [vmem:[%s2 + $0xec] sm:$0xf]
  %v260 = vld [vmem:[%s2 + $0xf0] sm:$0xf]
  %v261 = vld [vmem:[%s2 + $0xf4] sm:$0xf]
  %v262 = vld [vmem:[%s2 + $0xf8] sm:$0xf]
  %v263 = vld [vmem:[%s2 + $0xfc] sm:$0xf]
  %v264 = vld [vmem:[%s2 + $0x100] sm:$0xf]
  %v265 = vld [vmem:[%s2 + $0x104] sm:$0xf]
  %v266 = vld [vmem:[%s2 + $0x108] sm:$0xf]
  %v267 = vld [vmem:[%s2 + $0x10c] sm:$0xf]
  %v268 = vld [vmem:[%s2 + $0x110] sm:$0xf]
  %v269 = vld [vmem:[%s2 + $0x114] sm:$0xf]
  %v270 = vld [vmem:[%s2 + $0x118] sm:$0xf]
  %v271 = vld [vmem:[%s2 + $0x11c] sm:$0xf]
  %v272 = vld [vmem:[%s2 + $0x120] sm:$0xf]
  %v273 = vld [vmem:[%s2 + $0x124] sm:$0xf]
  %v274 = vld [vmem:[%s2 + $0x128] sm:$0xf]
  %v275 = vld [vmem:[%s2 + $0x12c] sm:$0xf]
  %v276 = vld [vmem:[%s2 + $0x130] sm:$0xf]
  %v277 = vld [vmem:[%s2 + $0x134] sm:$0xf]
  %v278 = vld [vmem:[%s2 + $0x138] sm:$0xf]
  %v279 = vld [vmem:[%s2 + $0x13c] sm:$0xf]
  %v280 = vld [vmem:[%s2 + $0x140] sm:$0xf]
  %v281 = vld [vmem:[%s2 + $0x144] sm:$0xf]
  %v282 = vld [vmem:[%s2 + $0x148] sm:$0xf]
  %v283 = vld [vmem:[%s2 + $0x14c] sm:$0xf]
  %v284 = vld [vmem:[%s2 + $0x150] sm:$0xf]
  %v285 = vld [vmem:[%s2 + $0x154] sm:$0xf]
  %v286 = vld [vmem:[%s2 + $0x158] sm:$0xf]
  %v287 = vld [vmem:[%s2 + $0x15c] sm:$0xf]
  %v288 = vld [vmem:[%s2 + $0x160] sm:$0xf]
  %v289 = vld [vmem:[%s2 + $0x164] sm:$0xf]
  %v290 = vld [vmem:[%s2 + $0x168] sm:$0xf]
  %v291 = vld [vmem:[%s2 + $0x16c] sm:$0xf]
  %v292 = vld [vmem:[%s2 + $0x170] sm:$0xf]
  %v293 = vld [vmem:[%s2 + $0x174] sm:$0xf]
  %v294 = vld [vmem:[%s2 + $0x178] sm:$0xf]
  %v295 = vld [vmem:[%s2 + $0x17c] sm:$0xf]
  %v296 = vld [vmem:[%s2 + $0x180] sm:$0xf]
  %v297 = vld [vmem:[%s2 + $0x184] sm:$0xf]
  %v298 = vld [vmem:[%s2 + $0x188] sm:$0xf]
  %v299 = vld [vmem:[%s2 + $0x18c] sm:$0xf]
  %v300 = vld [vmem:[%s2 + $0x190] sm:$0xf]
  %v301 = vld [vmem:[%s2 + $0x194] sm:$0xf]
  %v302 = vld [vmem:[%s2 + $0x198] sm:$0xf]
  %v303 = vld [vmem:[%s2 + $0x19c] sm:$0xf]
  %v304 = vld [vmem:[%s2 + $0x1a0] sm:$0xf]
  %v305 = vld [vmem:[%s2 + $0x1a4] sm:$0xf]
  %v306 = vld [vmem:[%s2 + $0x1a8] sm:$0xf]
  %v307 = vld [vmem:[%s2 + $0x1ac] sm:$0xf]
  %v308 = vld [vmem:[%s2 + $0x1b0] sm:$0xf]
  %v309 = vld [vmem:[%s2 + $0x1b4] sm:$0xf]
  %v310 = vld [vmem:[%s2 + $0x1b8] sm:$0xf]
  %v311 = vld [vmem:[%s2 + $0x1bc] sm:$0xf]
  %v312 = vld [vmem:[%s2 + $0x1c0] sm:$0xf]
  %v313 = vld [vmem:[%s2 + $0x1c4] sm:$0xf]
  %v314 = vld [vmem:[%s2 + $0x1c8] sm:$0xf]
  %v315 = vld [vmem:[%s2 + $0x1cc] sm:$0xf]
  %v316 = vld [vmem:[%s2 + $0x1d0] sm:$0xf]
  %v317 = vld [vmem:[%s2 + $0x1d4] sm:$0xf]
  %v318 = vld [vmem:[%s2 + $0x1d8] sm:$0xf]
  %v319 = vld [vmem:[%s2 + $0x1dc] sm:$0xf]
  %v320 = vld [vmem:[%s2 + $0x1e0] sm:$0xf]
  %v321 = vld [vmem:[%s2 + $0x1e4] sm:$0xf]
  %v322 = vld [vmem:[%s2 + $0x1e8] sm:$0xf]
  %v323 = vld [vmem:[%s2 + $0x1ec] sm:$0xf]
  %v324 = vld [vmem:[%s2 + $0x1f0] sm:$0xf]
  %v325 = vld [vmem:[%s2 + $0x1f4] sm:$0xf]
  %v326 = vld [vmem:[%s2 + $0x1f8] sm:$0xf]
  %v327 = vld [vmem:[%s2 + $0x1fc] sm:$0xf]
  %v328 = vld [vmem:[%s3] sm:$0x1]
  %v330 = vlaneseq
  %v331 = vshrl.u32 %v330, 7
  %v332 = vsub.s32 0, %v331
  %v333 = vrot.slane %v328, %v332
  %v367 = vunpack.c.l.b16 %v168
  %v368 = vunpack.c.h.b16 %v168
  %v369 = vunpack.c.l.b16 %v169
  %v370 = vunpack.c.h.b16 %v169
  %v371 = vunpack.c.l.b16 %v170
  %v372 = vunpack.c.h.b16 %v170
  %v373 = vunpack.c.l.b16 %v171
  %v374 = vunpack.c.h.b16 %v171
  %v375 = vunpack.c.l.b16 %v172
  %v376 = vunpack.c.h.b16 %v172
  %v377 = vunpack.c.l.b16 %v173
  %v378 = vunpack.c.h.b16 %v173
  %v379 = vunpack.c.l.b16 %v174
  %v380 = vunpack.c.h.b16 %v174
  %v381 = vunpack.c.l.b16 %v175
  %v382 = vunpack.c.h.b16 %v175
  %v383 = vunpack.c.l.b16 %v176
  %v384 = vunpack.c.h.b16 %v176
  %v385 = vunpack.c.l.b16 %v177
  %v386 = vunpack.c.h.b16 %v177
  %v387 = vunpack.c.l.b16 %v178
  %v388 = vunpack.c.h.b16 %v178
  %v389 = vunpack.c.l.b16 %v179
  %v390 = vunpack.c.h.b16 %v179
  %v391 = vunpack.c.l.b16 %v180
  %v392 = vunpack.c.h.b16 %v180
  %v393 = vunpack.c.l.b16 %v181
  %v394 = vunpack.c.h.b16 %v181
  %v395 = vunpack.c.l.b16 %v182
  %v396 = vunpack.c.h.b16 %v182
  %v397 = vunpack.c.l.b16 %v183
  %v398 = vunpack.c.h.b16 %v183
  %v399 = vunpack.c.l.b16 %v184
  %v400 = vunpack.c.h.b16 %v184
  %v401 = vunpack.c.l.b16 %v185
  %v402 = vunpack.c.h.b16 %v185
  %v403 = vunpack.c.l.b16 %v186
  %v404 = vunpack.c.h.b16 %v186
  %v405 = vunpack.c.l.b16 %v187
  %v406 = vunpack.c.h.b16 %v187
  %v407 = vunpack.c.l.b16 %v188
  %v408 = vunpack.c.h.b16 %v188
  %v409 = vunpack.c.l.b16 %v189
  %v410 = vunpack.c.h.b16 %v189
  %v411 = vunpack.c.l.b16 %v190
  %v412 = vunpack.c.h.b16 %v190
  %v413 = vunpack.c.l.b16 %v191
  %v414 = vunpack.c.h.b16 %v191
  %v415 = vunpack.c.l.b16 %v192
  %v416 = vunpack.c.h.b16 %v192
  %v417 = vunpack.c.l.b16 %v193
  %v418 = vunpack.c.h.b16 %v193
  %v419 = vunpack.c.l.b16 %v194
  %v420 = vunpack.c.h.b16 %v194
  %v421 = vunpack.c.l.b16 %v195
  %v422 = vunpack.c.h.b16 %v195
  %v423 = vunpack.c.l.b16 %v196
  %v424 = vunpack.c.h.b16 %v196
  %v425 = vunpack.c.l.b16 %v197
  %v426 = vunpack.c.h.b16 %v197
  %v427 = vunpack.c.l.b16 %v198
  %v428 = vunpack.c.h.b16 %v198
  %v429 = vunpack.c.l.b16 %v199
  %v430 = vunpack.c.h.b16 %v199
  %v431 = vpack.c.b16 %v375, %v367
  %v432 = vpack.c.b16 %v376, %v368
  %v433 = vpack.c.b16 %v377, %v369
  %v434 = vpack.c.b16 %v378, %v370
  %v435 = vpack.c.b16 %v379, %v371
  %v436 = vpack.c.b16 %v380, %v372
  %v437 = vpack.c.b16 %v381, %v373
  %v438 = vpack.c.b16 %v382, %v374
  %v439 = vpack.c.b16 %v391, %v383
  %v440 = vpack.c.b16 %v392, %v384
  %v441 = vpack.c.b16 %v393, %v385
  %v442 = vpack.c.b16 %v394, %v386
  %v443 = vpack.c.b16 %v395, %v387
  %v444 = vpack.c.b16 %v396, %v388
  %v445 = vpack.c.b16 %v397, %v389
  %v446 = vpack.c.b16 %v398, %v390
  %v447 = vpack.c.b16 %v407, %v399
  %v448 = vpack.c.b16 %v408, %v400
  %v449 = vpack.c.b16 %v409, %v401
  %v450 = vpack.c.b16 %v410, %v402
  %v451 = vpack.c.b16 %v411, %v403
  %v452 = vpack.c.b16 %v412, %v404
  %v453 = vpack.c.b16 %v413, %v405
  %v454 = vpack.c.b16 %v414, %v406
  %v455 = vpack.c.b16 %v423, %v415
  %v456 = vpack.c.b16 %v424, %v416
  %v457 = vpack.c.b16 %v425, %v417
  %v458 = vpack.c.b16 %v426, %v418
  %v459 = vpack.c.b16 %v427, %v419
  %v460 = vpack.c.b16 %v428, %v420
  %v461 = vpack.c.b16 %v429, %v421
  %v462 = vpack.c.b16 %v430, %v422
  %v623 = vunpack.c.l.b16 %v200
  %v624 = vunpack.c.l.b16 %v201
  %v625 = vunpack.c.l.b16 %v202
  %v626 = vunpack.c.l.b16 %v203
  %v627 = vunpack.c.l.b16 %v204
  %v628 = vunpack.c.l.b16 %v205
  %v629 = vunpack.c.l.b16 %v206
  %v630 = vunpack.c.l.b16 %v207
  %v631 = vunpack.c.l.b16 %v208
  %v632 = vunpack.c.l.b16 %v209
  %v633 = vunpack.c.l.b16 %v210
  %v634 = vunpack.c.l.b16 %v211
  %v635 = vunpack.c.l.b16 %v212
  %v636 = vunpack.c.l.b16 %v213
  %v637 = vunpack.c.l.b16 %v214
  %v638 = vunpack.c.l.b16 %v215
  %v639 = vunpack.c.l.b16 %v216
  %v640 = vunpack.c.l.b16 %v217
  %v641 = vunpack.c.l.b16 %v218
  %v642 = vunpack.c.l.b16 %v219
  %v643 = vunpack.c.l.b16 %v220
  %v644 = vunpack.c.l.b16 %v221
  %v645 = vunpack.c.l.b16 %v222
  %v646 = vunpack.c.l.b16 %v223
  %v647 = vunpack.c.l.b16 %v224
  %v648 = vunpack.c.l.b16 %v225
  %v649 = vunpack.c.l.b16 %v226
  %v650 = vunpack.c.l.b16 %v227
  %v651 = vunpack.c.l.b16 %v228
  %v652 = vunpack.c.l.b16 %v229
  %v653 = vunpack.c.l.b16 %v230
  %v654 = vunpack.c.l.b16 %v231
  %v655 = vunpack.c.l.b16 %v232
  %v656 = vunpack.c.l.b16 %v233
  %v657 = vunpack.c.l.b16 %v234
  %v658 = vunpack.c.l.b16 %v235
  %v659 = vunpack.c.l.b16 %v236
  %v660 = vunpack.c.l.b16 %v237
  %v661 = vunpack.c.l.b16 %v238
  %v662 = vunpack.c.l.b16 %v239
  %v663 = vunpack.c.l.b16 %v240
  %v664 = vunpack.c.l.b16 %v241
  %v665 = vunpack.c.l.b16 %v242
  %v666 = vunpack.c.l.b16 %v243
  %v667 = vunpack.c.l.b16 %v244
  %v668 = vunpack.c.l.b16 %v245
  %v669 = vunpack.c.l.b16 %v246
  %v670 = vunpack.c.l.b16 %v247
  %v671 = vunpack.c.l.b16 %v248
  %v672 = vunpack.c.l.b16 %v249
  %v673 = vunpack.c.l.b16 %v250
  %v674 = vunpack.c.l.b16 %v251
  %v675 = vunpack.c.l.b16 %v252
  %v676 = vunpack.c.l.b16 %v253
  %v677 = vunpack.c.l.b16 %v254
  %v678 = vunpack.c.l.b16 %v255
  %v679 = vunpack.c.l.b16 %v256
  %v680 = vunpack.c.l.b16 %v257
  %v681 = vunpack.c.l.b16 %v258
  %v682 = vunpack.c.l.b16 %v259
  %v683 = vunpack.c.l.b16 %v260
  %v684 = vunpack.c.l.b16 %v261
  %v685 = vunpack.c.l.b16 %v262
  %v686 = vunpack.c.l.b16 %v263
  %v687 = vunpack.c.l.b16 %v264
  %v688 = vunpack.c.l.b16 %v265
  %v689 = vunpack.c.l.b16 %v266
  %v690 = vunpack.c.l.b16 %v267
  %v691 = vunpack.c.l.b16 %v268
  %v692 = vunpack.c.l.b16 %v269
  %v693 = vunpack.c.l.b16 %v270
  %v694 = vunpack.c.l.b16 %v271
  %v695 = vunpack.c.l.b16 %v272
  %v696 = vunpack.c.l.b16 %v273
  %v697 = vunpack.c.l.b16 %v274
  %v698 = vunpack.c.l.b16 %v275
  %v699 = vunpack.c.l.b16 %v276
  %v700 = vunpack.c.l.b16 %v277
  %v701 = vunpack.c.l.b16 %v278
  %v702 = vunpack.c.l.b16 %v279
  %v703 = vunpack.c.l.b16 %v280
  %v704 = vunpack.c.l.b16 %v281
  %v705 = vunpack.c.l.b16 %v282
  %v706 = vunpack.c.l.b16 %v283
  %v707 = vunpack.c.l.b16 %v284
  %v708 = vunpack.c.l.b16 %v285
  %v709 = vunpack.c.l.b16 %v286
  %v710 = vunpack.c.l.b16 %v287
  %v711 = vunpack.c.l.b16 %v288
  %v712 = vunpack.c.l.b16 %v289
  %v713 = vunpack.c.l.b16 %v290
  %v714 = vunpack.c.l.b16 %v291
  %v715 = vunpack.c.l.b16 %v292
  %v716 = vunpack.c.l.b16 %v293
  %v717 = vunpack.c.l.b16 %v294
  %v718 = vunpack.c.l.b16 %v295
  %v719 = vunpack.c.l.b16 %v296
  %v720 = vunpack.c.l.b16 %v297
  %v721 = vunpack.c.l.b16 %v298
  %v722 = vunpack.c.l.b16 %v299
  %v723 = vunpack.c.l.b16 %v300
  %v724 = vunpack.c.l.b16 %v301
  %v725 = vunpack.c.l.b16 %v302
  %v726 = vunpack.c.l.b16 %v303
  %v727 = vunpack.c.l.b16 %v304
  %v728 = vunpack.c.l.b16 %v305
  %v729 = vunpack.c.l.b16 %v306
  %v730 = vunpack.c.l.b16 %v307
  %v731 = vunpack.c.l.b16 %v308
  %v732 = vunpack.c.l.b16 %v309
  %v733 = vunpack.c.l.b16 %v310
  %v734 = vunpack.c.l.b16 %v311
  %v735 = vunpack.c.l.b16 %v312
  %v736 = vunpack.c.l.b16 %v313
  %v737 = vunpack.c.l.b16 %v314
  %v738 = vunpack.c.l.b16 %v315
  %v739 = vunpack.c.l.b16 %v316
  %v740 = vunpack.c.l.b16 %v317
  %v741 = vunpack.c.l.b16 %v318
  %v742 = vunpack.c.l.b16 %v319
  %v743 = vunpack.c.l.b16 %v320
  %v744 = vunpack.c.l.b16 %v321
  %v745 = vunpack.c.l.b16 %v322
  %v746 = vunpack.c.l.b16 %v323
  %v747 = vunpack.c.l.b16 %v324
  %v748 = vunpack.c.l.b16 %v325
  %v749 = vunpack.c.l.b16 %v326
  %v750 = vunpack.c.l.b16 %v327
  %v751 = vpack.c.b16 %v624, %v623
  %v752 = vpack.c.b16 %v626, %v625
  %v753 = vpack.c.b16 %v628, %v627
  %v754 = vpack.c.b16 %v630, %v629
  %v755 = vpack.c.b16 %v632, %v631
  %v756 = vpack.c.b16 %v634, %v633
  %v757 = vpack.c.b16 %v636, %v635
  %v758 = vpack.c.b16 %v638, %v637
  %v759 = vpack.c.b16 %v640, %v639
  %v760 = vpack.c.b16 %v642, %v641
  %v761 = vpack.c.b16 %v644, %v643
  %v762 = vpack.c.b16 %v646, %v645
  %v763 = vpack.c.b16 %v648, %v647
  %v764 = vpack.c.b16 %v650, %v649
  %v765 = vpack.c.b16 %v652, %v651
  %v766 = vpack.c.b16 %v654, %v653
  %v767 = vpack.c.b16 %v656, %v655
  %v768 = vpack.c.b16 %v658, %v657
  %v769 = vpack.c.b16 %v660, %v659
  %v770 = vpack.c.b16 %v662, %v661
  %v771 = vpack.c.b16 %v664, %v663
  %v772 = vpack.c.b16 %v666, %v665
  %v773 = vpack.c.b16 %v668, %v667
  %v774 = vpack.c.b16 %v670, %v669
  %v775 = vpack.c.b16 %v672, %v671
  %v776 = vpack.c.b16 %v674, %v673
  %v777 = vpack.c.b16 %v676, %v675
  %v778 = vpack.c.b16 %v678, %v677
  %v779 = vpack.c.b16 %v680, %v679
  %v780 = vpack.c.b16 %v682, %v681
  %v781 = vpack.c.b16 %v684, %v683
  %v782 = vpack.c.b16 %v686, %v685
  %v783 = vpack.c.b16 %v688, %v687
  %v784 = vpack.c.b16 %v690, %v689
  %v785 = vpack.c.b16 %v692, %v691
  %v786 = vpack.c.b16 %v694, %v693
  %v787 = vpack.c.b16 %v696, %v695
  %v788 = vpack.c.b16 %v698, %v697
  %v789 = vpack.c.b16 %v700, %v699
  %v790 = vpack.c.b16 %v702, %v701
  %v791 = vpack.c.b16 %v704, %v703
  %v792 = vpack.c.b16 %v706, %v705
  %v793 = vpack.c.b16 %v708, %v707
  %v794 = vpack.c.b16 %v710, %v709
  %v795 = vpack.c.b16 %v712, %v711
  %v796 = vpack.c.b16 %v714, %v713
  %v797 = vpack.c.b16 %v716, %v715
  %v798 = vpack.c.b16 %v718, %v717
  %v799 = vpack.c.b16 %v720, %v719
  %v800 = vpack.c.b16 %v722, %v721
  %v801 = vpack.c.b16 %v724, %v723
  %v802 = vpack.c.b16 %v726, %v725
  %v803 = vpack.c.b16 %v728, %v727
  %v804 = vpack.c.b16 %v730, %v729
  %v805 = vpack.c.b16 %v732, %v731
  %v806 = vpack.c.b16 %v734, %v733
  %v807 = vpack.c.b16 %v736, %v735
  %v808 = vpack.c.b16 %v738, %v737
  %v809 = vpack.c.b16 %v740, %v739
  %v810 = vpack.c.b16 %v742, %v741
  %v811 = vpack.c.b16 %v744, %v743
  %v812 = vpack.c.b16 %v746, %v745
  %v813 = vpack.c.b16 %v748, %v747
  %v814 = vpack.c.b16 %v750, %v749
  %879 = vmatprep.subr.bf16.mxu0 0
  %880 = vmatpush1.bf16.msra.mxu0 %v751
  %881 = vmatprep.subr.bf16.mxu0 0
  %882 = vmatpush1.bf16.msra.mxu0 %v752
  %883 = vmatprep.subr.bf16.mxu0 0
  %884 = vmatpush1.bf16.msra.mxu0 %v753
  %885 = vmatprep.subr.bf16.mxu0 0
  %886 = vmatpush1.bf16.msra.mxu0 %v754
  %887 = vmatprep.subr.bf16.mxu0 0
  %888 = vmatpush1.bf16.msra.mxu0 %v755
  %889 = vmatprep.subr.bf16.mxu0 0
  %890 = vmatpush1.bf16.msra.mxu0 %v756
  %891 = vmatprep.subr.bf16.mxu0 0
  %892 = vmatpush1.bf16.msra.mxu0 %v757
  %893 = vmatprep.subr.bf16.mxu0 0
  %894 = vmatpush1.bf16.msra.mxu0 %v758
  %895 = vmatprep.subr.bf16.mxu0 0
  %896 = vmatpush1.bf16.msra.mxu0 %v759
  %897 = vmatprep.subr.bf16.mxu0 0
  %898 = vmatpush1.bf16.msra.mxu0 %v760
  %899 = vmatprep.subr.bf16.mxu0 0
  %900 = vmatpush1.bf16.msra.mxu0 %v761
  %901 = vmatprep.subr.bf16.mxu0 0
  %902 = vmatpush1.bf16.msra.mxu0 %v762
  %903 = vmatprep.subr.bf16.mxu0 0
  %904 = vmatpush1.bf16.msra.mxu0 %v763
  %905 = vmatprep.subr.bf16.mxu0 0
  %906 = vmatpush1.bf16.msra.mxu0 %v764
  %907 = vmatprep.subr.bf16.mxu0 0
  %908 = vmatpush1.bf16.msra.mxu0 %v765
  %909 = vmatprep.subr.bf16.mxu0 0
  %910 = vmatpush1.bf16.msra.mxu0 %v766
  %911 = vmatprep.mubr.bf16.mxu0 %v432
  %912 = vmatmul.mubr.bf16.gmra.mrb[0].mxu0 %v431
  %v913 = vpop.f32.mrb[0].mxu0
  %v914 = vadd.f32 %v333, %v913
  %v915 = vpop.f32.mrb[0].mxu0
  %v916 = vpop.f32.mrb[0].mxu0
  %v917 = vadd.f32 %v333, %v916
  %v918 = vpop.f32.mrb[0].mxu0
  %919 = vmatprep.mubr.bf16.mxu0 %v440
  %920 = vmatmul.mubr.bf16.gmra.mrb[0].mxu0 %v439
  %v921 = vpop.f32.mrb[0].mxu0
  %v922 = vadd.f32 %v333, %v921
  %v923 = vpop.f32.mrb[0].mxu0
  %v924 = vpop.f32.mrb[0].mxu0
  %v925 = vadd.f32 %v333, %v924
  %v926 = vpop.f32.mrb[0].mxu0
  %927 = vmatprep.mubr.bf16.mxu0 %v448
  %928 = vmatmul.mubr.bf16.gmra.mrb[0].mxu0 %v447
  %v929 = vpop.f32.mrb[0].mxu0
  %v930 = vadd.f32 %v333, %v929
  %v931 = vpop.f32.mrb[0].mxu0
  %v932 = vpop.f32.mrb[0].mxu0
  %v933 = vadd.f32 %v333, %v932
  %v934 = vpop.f32.mrb[0].mxu0
  %935 = vmatprep.mubr.bf16.mxu0 %v456
  %936 = vmatmul.mubr.bf16.gmra.mrb[0].mxu0 %v455
  %v937 = vpop.f32.mrb[0].mxu0
  %v938 = vadd.f32 %v333, %v937
  %v939 = vpop.f32.mrb[0].mxu0
  %v940 = vpop.f32.mrb[0].mxu0
  %v941 = vadd.f32 %v333, %v940
  %v942 = vpop.f32.mrb[0].mxu0
  %943 = vdwg.mxu0
  %944 = vmatprep.subr.bf16.mxu0 0
  %945 = vmatpush1.bf16.msra.mxu0 %v767
  %946 = vmatprep.subr.bf16.mxu0 0
  %947 = vmatpush1.bf16.msra.mxu0 %v768
  %948 = vmatprep.subr.bf16.mxu0 0
  %949 = vmatpush1.bf16.msra.mxu0 %v769
  %950 = vmatprep.subr.bf16.mxu0 0
  %951 = vmatpush1.bf16.msra.mxu0 %v770
  %952 = vmatprep.subr.bf16.mxu0 0
  %953 = vmatpush1.bf16.msra.mxu0 %v771
  %954 = vmatprep.subr.bf16.mxu0 0
  %955 = vmatpush1.bf16.msra.mxu0 %v772
  %956 = vmatprep.subr.bf16.mxu0 0
  %957 = vmatpush1.bf16.msra.mxu0 %v773
  %958 = vmatprep.subr.bf16.mxu0 0
  %959 = vmatpush1.bf16.msra.mxu0 %v774
  %960 = vmatprep.subr.bf16.mxu0 0
  %961 = vmatpush1.bf16.msra.mxu0 %v775
  %962 = vmatprep.subr.bf16.mxu0 0
  %963 = vmatpush1.bf16.msra.mxu0 %v776
  %964 = vmatprep.subr.bf16.mxu0 0
  %965 = vmatpush1.bf16.msra.mxu0 %v777
  %966 = vmatprep.subr.bf16.mxu0 0
  %967 = vmatpush1.bf16.msra.mxu0 %v778
  %968 = vmatprep.subr.bf16.mxu0 0
  %969 = vmatpush1.bf16.msra.mxu0 %v779
  %970 = vmatprep.subr.bf16.mxu0 0
  %971 = vmatpush1.bf16.msra.mxu0 %v780
  %972 = vmatprep.subr.bf16.mxu0 0
  %973 = vmatpush1.bf16.msra.mxu0 %v781
  %974 = vmatprep.subr.bf16.mxu0 0
  %975 = vmatpush1.bf16.msra.mxu0 %v782
  %976 = vmatprep.mubr.bf16.mxu0 %v434
  %977 = vmatmul.mubr.bf16.gmra.mrb[0].mxu0 %v433
  %v978 = vpop.f32.mrb[0].mxu0
  %v979 = vadd.f32 %v914, %v978
  %v980 = vpop.f32.mrb[0].mxu0
  %v981 = vpop.f32.mrb[0].mxu0
  %v982 = vadd.f32 %v917, %v981
  %v983 = vpop.f32.mrb[0].mxu0
  %984 = vmatprep.mubr.bf16.mxu0 %v442
  %985 = vmatmul.mubr.bf16.gmra.mrb[0].mxu0 %v441
  %v986 = vpop.f32.mrb[0].mxu0
  %v987 = vadd.f32 %v922, %v986
  %v988 = vpop.f32.mrb[0].mxu0
  %v989 = vpop.f32.mrb[0].mxu0
  %v990 = vadd.f32 %v925, %v989
  %v991 = vpop.f32.mrb[0].mxu0
  %992 = vmatprep.mubr.bf16.mxu0 %v450
  %993 = vmatmul.mubr.bf16.gmra.mrb[0].mxu0 %v449
  %v994 = vpop.f32.mrb[0].mxu0
  %v995 = vadd.f32 %v930, %v994
  %v996 = vpop.f32.mrb[0].mxu0
  %v997 = vpop.f32.mrb[0].mxu0
  %v998 = vadd.f32 %v933, %v997
  %v999 = vpop.f32.mrb[0].mxu0
  %1000 = vmatprep.mubr.bf16.mxu0 %v458
  %1001 = vmatmul.mubr.bf16.gmra.mrb[0].mxu0 %v457
  %v1002 = vpop.f32.mrb[0].mxu0
  %v1003 = vadd.f32 %v938, %v1002
  %v1004 = vpop.f32.mrb[0].mxu0
  %v1005 = vpop.f32.mrb[0].mxu0
  %v1006 = vadd.f32 %v941, %v1005
  %v1007 = vpop.f32.mrb[0].mxu0
  %1008 = vdwg.mxu0
  %1009 = vmatprep.subr.bf16.mxu0 0
  %1010 = vmatpush1.bf16.msra.mxu0 %v783
  %1011 = vmatprep.subr.bf16.mxu0 0
  %1012 = vmatpush1.bf16.msra.mxu0 %v784
  %1013 = vmatprep.subr.bf16.mxu0 0
  %1014 = vmatpush1.bf16.msra.mxu0 %v785
  %1015 = vmatprep.subr.bf16.mxu0 0
  %1016 = vmatpush1.bf16.msra.mxu0 %v786
  %1017 = vmatprep.subr.bf16.mxu0 0
  %1018 = vmatpush1.bf16.msra.mxu0 %v787
  %1019 = vmatprep.subr.bf16.mxu0 0
  %1020 = vmatpush1.bf16.msra.mxu0 %v788
  %1021 = vmatprep.subr.bf16.mxu0 0
  %1022 = vmatpush1.bf16.msra.mxu0 %v789
  %1023 = vmatprep.subr.bf16.mxu0 0
  %1024 = vmatpush1.bf16.msra.mxu0 %v790
  %1025 = vmatprep.subr.bf16.mxu0 0
  %1026 = vmatpush1.bf16.msra.mxu0 %v791
  %1027 = vmatprep.subr.bf16.mxu0 0
  %1028 = vmatpush1.bf16.msra.mxu0 %v792
  %1029 = vmatprep.subr.bf16.mxu0 0
  %1030 = vmatpush1.bf16.msra.mxu0 %v793
  %1031 = vmatprep.subr.bf16.mxu0 0
  %1032 = vmatpush1.bf16.msra.mxu0 %v794
  %1033 = vmatprep.subr.bf16.mxu0 0
  %1034 = vmatpush1.bf16.msra.mxu0 %v795
  %1035 = vmatprep.subr.bf16.mxu0 0
  %1036 = vmatpush1.bf16.msra.mxu0 %v796
  %1037 = vmatprep.subr.bf16.mxu0 0
  %1038 = vmatpush1.bf16.msra.mxu0 %v797
  %1039 = vmatprep.subr.bf16.mxu0 0
  %1040 = vmatpush1.bf16.msra.mxu0 %v798
  %1041 = vmatprep.mubr.bf16.mxu0 %v436
  %1042 = vmatmul.mubr.bf16.gmra.mrb[0].mxu0 %v435
  %v1043 = vpop.f32.mrb[0].mxu0
  %v1044 = vadd.f32 %v979, %v1043
  %v1045 = vpop.f32.mrb[0].mxu0
  %v1046 = vpop.f32.mrb[0].mxu0
  %v1047 = vadd.f32 %v982, %v1046
  %v1048 = vpop.f32.mrb[0].mxu0
  %1049 = vmatprep.mubr.bf16.mxu0 %v444
  %1050 = vmatmul.mubr.bf16.gmra.mrb[0].mxu0 %v443
  %v1051 = vpop.f32.mrb[0].mxu0
  %v1052 = vadd.f32 %v987, %v1051
  %v1053 = vpop.f32.mrb[0].mxu0
  %v1054 = vpop.f32.mrb[0].mxu0
  %v1055 = vadd.f32 %v990, %v1054
  %v1056 = vpop.f32.mrb[0].mxu0
  %1057 = vmatprep.mubr.bf16.mxu0 %v452
  %1058 = vmatmul.mubr.bf16.gmra.mrb[0].mxu0 %v451
  %v1059 = vpop.f32.mrb[0].mxu0
  %v1060 = vadd.f32 %v995, %v1059
  %v1061 = vpop.f32.mrb[0].mxu0
  %v1062 = vpop.f32.mrb[0].mxu0
  %v1063 = vadd.f32 %v998, %v1062
  %v1064 = vpop.f32.mrb[0].mxu0
  %1065 = vmatprep.mubr.bf16.mxu0 %v460
  %1066 = vmatmul.mubr.bf16.gmra.mrb[0].mxu0 %v459
  %v1067 = vpop.f32.mrb[0].mxu0
  %v1068 = vadd.f32 %v1003, %v1067
  %v1069 = vpop.f32.mrb[0].mxu0
  %v1070 = vpop.f32.mrb[0].mxu0
  %v1071 = vadd.f32 %v1006, %v1070
  %v1072 = vpop.f32.mrb[0].mxu0
  %1073 = vdwg.mxu0
  %1074 = vmatprep.subr.bf16.mxu0 0
  %1075 = vmatpush1.bf16.msra.mxu0 %v799
  %1076 = vmatprep.subr.bf16.mxu0 0
  %1077 = vmatpush1.bf16.msra.mxu0 %v800
  %1078 = vmatprep.subr.bf16.mxu0 0
  %1079 = vmatpush1.bf16.msra.mxu0 %v801
  %1080 = vmatprep.subr.bf16.mxu0 0
  %1081 = vmatpush1.bf16.msra.mxu0 %v802
  %1082 = vmatprep.subr.bf16.mxu0 0
  %1083 = vmatpush1.bf16.msra.mxu0 %v803
  %1084 = vmatprep.subr.bf16.mxu0 0
  %1085 = vmatpush1.bf16.msra.mxu0 %v804
  %1086 = vmatprep.subr.bf16.mxu0 0
  %1087 = vmatpush1.bf16.msra.mxu0 %v805
  %1088 = vmatprep.subr.bf16.mxu0 0
  %1089 = vmatpush1.bf16.msra.mxu0 %v806
  %1090 = vmatprep.subr.bf16.mxu0 0
  %1091 = vmatpush1.bf16.msra.mxu0 %v807
  %1092 = vmatprep.subr.bf16.mxu0 0
  %1093 = vmatpush1.bf16.msra.mxu0 %v808
  %1094 = vmatprep.subr.bf16.mxu0 0
  %1095 = vmatpush1.bf16.msra.mxu0 %v809
  %1096 = vmatprep.subr.bf16.mxu0 0
  %1097 = vmatpush1.bf16.msra.mxu0 %v810
  %1098 = vmatprep.subr.bf16.mxu0 0
  %1099 = vmatpush1.bf16.msra.mxu0 %v811
  %1100 = vmatprep.subr.bf16.mxu0 0
  %1101 = vmatpush1.bf16.msra.mxu0 %v812
  %1102 = vmatprep.subr.bf16.mxu0 0
  %1103 = vmatpush1.bf16.msra.mxu0 %v813
  %1104 = vmatprep.subr.bf16.mxu0 0
  %1105 = vmatpush1.bf16.msra.mxu0 %v814
  %1106 = vmatprep.mubr.bf16.mxu0 %v438
  %1107 = vmatmul.mubr.bf16.gmra.mrb[0].mxu0 %v437
  %v1108 = vpop.f32.mrb[0].mxu0
  %v1109 = vadd.f32 %v1044, %v1108
  %v1110 = vpop.f32.mrb[0].mxu0
  %v1111 = vpop.f32.mrb[0].mxu0
  %v1112 = vadd.f32 %v1047, %v1111
  %v1113 = vpop.f32.mrb[0].mxu0
  %1114 = vmatprep.mubr.bf16.mxu0 %v446
  %1115 = vmatmul.mubr.bf16.gmra.mrb[0].mxu0 %v445
  %v1116 = vpop.f32.mrb[0].mxu0
  %v1117 = vadd.f32 %v1052, %v1116
  %v1118 = vpop.f32.mrb[0].mxu0
  %v1119 = vpop.f32.mrb[0].mxu0
  %v1120 = vadd.f32 %v1055, %v1119
  %v1121 = vpop.f32.mrb[0].mxu0
  %1122 = vmatprep.mubr.bf16.mxu0 %v454
  %1123 = vmatmul.mubr.bf16.gmra.mrb[0].mxu0 %v453
  %v1124 = vpop.f32.mrb[0].mxu0
  %v1125 = vadd.f32 %v1060, %v1124
  %v1126 = vpop.f32.mrb[0].mxu0
  %v1127 = vpop.f32.mrb[0].mxu0
  %v1128 = vadd.f32 %v1063, %v1127
  %v1129 = vpop.f32.mrb[0].mxu0
  %1130 = vmatprep.mubr.bf16.mxu0 %v462
  %1131 = vmatmul.mubr.bf16.gmra.mrb[0].mxu0 %v461
  %v1132 = vpop.f32.mrb[0].mxu0
  %v1133 = vadd.f32 %v1068, %v1132
  %v1134 = vpop.f32.mrb[0].mxu0
  %v1135 = vpop.f32.mrb[0].mxu0
  %v1136 = vadd.f32 %v1071, %v1135
  %v1137 = vpop.f32.mrb[0].mxu0
  %1138 = vdwg.mxu0
  %v1139 = vld [vmem:[%s6] sm:$0xff]
  %v1140 = vld [vmem:[%s6 + $0x8] sm:$0xff]
  %v1141 = vld [vmem:[%s6 + $0x10] sm:$0xff]
  %v1142 = vld [vmem:[%s6 + $0x18] sm:$0xff]
  %v1143 = vld [vmem:[%s6 + $0x20] sm:$0xff]
  %v1144 = vld [vmem:[%s6 + $0x28] sm:$0xff]
  %v1145 = vld [vmem:[%s6 + $0x30] sm:$0xff]
  %v1146 = vld [vmem:[%s6 + $0x38] sm:$0xff]
  %v1147 = vld [vmem:[%s6 + $0x40] sm:$0xff]
  %v1148 = vld [vmem:[%s6 + $0x48] sm:$0xff]
  %v1149 = vld [vmem:[%s6 + $0x50] sm:$0xff]
  %v1150 = vld [vmem:[%s6 + $0x58] sm:$0xff]
  %v1151 = vld [vmem:[%s6 + $0x60] sm:$0xff]
  %v1152 = vld [vmem:[%s6 + $0x68] sm:$0xff]
  %v1153 = vld [vmem:[%s6 + $0x70] sm:$0xff]
  %v1154 = vld [vmem:[%s6 + $0x78] sm:$0xff]
  %v1155 = vld [vmem:[%s7] sm:$0x1]
  %v1156 = vld [vmem:[%s4] sm:$0xff]
  %v1157 = vld [vmem:[%s4 + $0x8] sm:$0xff]
  %v1158 = vld [vmem:[%s4 + $0x10] sm:$0xff]
  %v1159 = vld [vmem:[%s4 + $0x18] sm:$0xff]
  %v1160 = vld [vmem:[%s4 + $0x20] sm:$0xff]
  %v1161 = vld [vmem:[%s4 + $0x28] sm:$0xff]
  %v1162 = vld [vmem:[%s4 + $0x30] sm:$0xff]
  %v1163 = vld [vmem:[%s4 + $0x38] sm:$0xff]
  %v1164 = vld [vmem:[%s4 + $0x40] sm:$0xff]
  %v1165 = vld [vmem:[%s4 + $0x48] sm:$0xff]
  %v1166 = vld [vmem:[%s4 + $0x50] sm:$0xff]
  %v1167 = vld [vmem:[%s4 + $0x58] sm:$0xff]
  %v1168 = vld [vmem:[%s4 + $0x60] sm:$0xff]
  %v1169 = vld [vmem:[%s4 + $0x68] sm:$0xff]
  %v1170 = vld [vmem:[%s4 + $0x70] sm:$0xff]
  %v1171 = vld [vmem:[%s4 + $0x78] sm:$0xff]
  %v1172 = vld [vmem:[%s4 + $0x80] sm:$0xff]
  %v1173 = vld [vmem:[%s4 + $0x88] sm:$0xff]
  %v1174 = vld [vmem:[%s4 + $0x90] sm:$0xff]
  %v1175 = vld [vmem:[%s4 + $0x98] sm:$0xff]
  %v1176 = vld [vmem:[%s4 + $0xa0] sm:$0xff]
  %v1177 = vld [vmem:[%s4 + $0xa8] sm:$0xff]
  %v1178 = vld [vmem:[%s4 + $0xb0] sm:$0xff]
  %v1179 = vld [vmem:[%s4 + $0xb8] sm:$0xff]
  %v1180 = vld [vmem:[%s4 + $0xc0] sm:$0xff]
  %v1181 = vld [vmem:[%s4 + $0xc8] sm:$0xff]
  %v1182 = vld [vmem:[%s4 + $0xd0] sm:$0xff]
  %v1183 = vld [vmem:[%s4 + $0xd8] sm:$0xff]
  %v1184 = vld [vmem:[%s4 + $0xe0] sm:$0xff]
  %v1185 = vld [vmem:[%s4 + $0xe8] sm:$0xff]
  %v1186 = vld [vmem:[%s4 + $0xf0] sm:$0xff]
  %v1187 = vld [vmem:[%s4 + $0xf8] sm:$0xff]
  %v1188 = vld [vmem:[%s5] sm:$0x3]
  %v1190 = vlaneseq
  %v1191 = vshrl.u32 %v1190, 7
  %v1192 = vsub.s32 0, %v1191
  %v1193 = vrot.slane %v1188, %v1192
  %v1194 = vlaneseq
  %v1195 = vshrl.u32 %v1194, 7
  %v1196 = vsub.s32 1, %v1195
  %v1197 = vrot.slane %v1188, %v1196
  %1200 = vmatprep.subr.mxu0 %v1157
  %1201 = vmatpush1.msra.mxu0 %v1156
  %1202 = vmatprep.subr.mxu0 %v1159
  %1203 = vmatpush1.msra.mxu0 %v1158
  %1204 = vmatprep.subr.mxu0 %v1161
  %1205 = vmatpush1.msra.mxu0 %v1160
  %1206 = vmatprep.subr.mxu0 %v1163
  %1207 = vmatpush1.msra.mxu0 %v1162
  %1208 = vmatprep.subr.mxu0 %v1165
  %1209 = vmatpush1.msra.mxu0 %v1164
  %1210 = vmatprep.subr.mxu0 %v1167
  %1211 = vmatpush1.msra.mxu0 %v1166
  %1212 = vmatprep.subr.mxu0 %v1169
  %1213 = vmatpush1.msra.mxu0 %v1168
  %1214 = vmatprep.subr.mxu0 %v1171
  %1215 = vmatpush1.msra.mxu0 %v1170
  %1216 = vmatprep.subr.mxu0 %v1173
  %1217 = vmatpush1.msra.mxu0 %v1172
  %1218 = vmatprep.subr.mxu0 %v1175
  %1219 = vmatpush1.msra.mxu0 %v1174
  %1220 = vmatprep.subr.mxu0 %v1177
  %1221 = vmatpush1.msra.mxu0 %v1176
  %1222 = vmatprep.subr.mxu0 %v1179
  %1223 = vmatpush1.msra.mxu0 %v1178
  %1224 = vmatprep.subr.mxu0 %v1181
  %1225 = vmatpush1.msra.mxu0 %v1180
  %1226 = vmatprep.subr.mxu0 %v1183
  %1227 = vmatpush1.msra.mxu0 %v1182
  %1228 = vmatprep.subr.mxu0 %v1185
  %1229 = vmatpush1.msra.mxu0 %v1184
  %1230 = vmatprep.subr.mxu0 %v1187
  %1231 = vmatpush1.msra.mxu0 %v1186
  %1232 = vmatprep.subr.mxu0 0.0
  %1233 = vmatpush1.msra.mxu0 0.0
  %1234 = vmatprep.subr.mxu0 0.0
  %1235 = vmatpush1.msra.mxu0 0.0
  %1236 = vmatprep.subr.mxu0 0.0
  %1237 = vmatpush1.msra.mxu0 0.0
  %1238 = vmatprep.subr.mxu0 0.0
  %1239 = vmatpush1.msra.mxu0 0.0
  %1240 = vmatprep.subr.mxu0 0.0
  %1241 = vmatpush1.msra.mxu0 0.0
  %1242 = vmatprep.subr.mxu0 0.0
  %1243 = vmatpush1.msra.mxu0 0.0
  %1244 = vmatprep.subr.mxu0 0.0
  %1245 = vmatpush1.msra.mxu0 0.0
  %1246 = vmatprep.subr.mxu0 0.0
  %1247 = vmatpush1.msra.mxu0 0.0
  %1248 = vmatprep.subr.mxu0 0.0
  %1249 = vmatpush1.msra.mxu0 0.0
  %1250 = vmatprep.subr.mxu0 0.0
  %1251 = vmatpush1.msra.mxu0 0.0
  %1252 = vmatprep.subr.mxu0 0.0
  %1253 = vmatpush1.msra.mxu0 0.0
  %1254 = vmatprep.subr.mxu0 0.0
  %1255 = vmatpush1.msra.mxu0 0.0
  %1256 = vmatprep.subr.mxu0 0.0
  %1257 = vmatpush1.msra.mxu0 0.0
  %1258 = vmatprep.subr.mxu0 0.0
  %1259 = vmatpush1.msra.mxu0 0.0
  %1260 = vmatprep.subr.mxu0 0.0
  %1261 = vmatpush1.msra.mxu0 0.0
  %1262 = vmatprep.subr.mxu0 0.0
  %1263 = vmatpush1.msra.mxu0 0.0
  %1264 = vmatprep.mubr.f32.mxu0 0.0
  %1265 = vmatmul.mubr.f32.gmra.mrb[0].mxu0 %v1109
  %v1266 = vpop.f32.mrb[0].mxu0
  %v1267 = vadd.f32 %v1193, %v1266
  %v1268 = vpop.f32.mrb[0].mxu0
  %v1269 = vadd.f32 %v1197, %v1268
  %1270 = vmatprep.mubr.f32.mxu0 0.0
  %1271 = vmatmul.mubr.f32.gmra.mrb[0].mxu0 %v1112
  %v1272 = vpop.f32.mrb[0].mxu0
  %v1273 = vadd.f32 %v1193, %v1272
  %v1274 = vpop.f32.mrb[0].mxu0
  %v1275 = vadd.f32 %v1197, %v1274
  %1276 = vmatprep.mubr.f32.mxu0 0.0
  %1277 = vmatmul.mubr.f32.gmra.mrb[0].mxu0 %v1117
  %v1278 = vpop.f32.mrb[0].mxu0
  %v1279 = vadd.f32 %v1193, %v1278
  %v1280 = vpop.f32.mrb[0].mxu0
  %v1281 = vadd.f32 %v1197, %v1280
  %1282 = vmatprep.mubr.f32.mxu0 0.0
  %1283 = vmatmul.mubr.f32.gmra.mrb[0].mxu0 %v1120
  %v1284 = vpop.f32.mrb[0].mxu0
  %v1285 = vadd.f32 %v1193, %v1284
  %v1286 = vpop.f32.mrb[0].mxu0
  %v1287 = vadd.f32 %v1197, %v1286
  %1288 = vmatprep.mubr.f32.mxu0 0.0
  %1289 = vmatmul.mubr.f32.gmra.mrb[0].mxu0 %v1125
  %v1290 = vpop.f32.mrb[0].mxu0
  %v1291 = vadd.f32 %v1193, %v1290
  %v1292 = vpop.f32.mrb[0].mxu0
  %v1293 = vadd.f32 %v1197, %v1292
  %1294 = vmatprep.mubr.f32.mxu0 0.0
  %1295 = vmatmul.mubr.f32.gmra.mrb[0].mxu0 %v1128
  %v1296 = vpop.f32.mrb[0].mxu0
  %v1297 = vadd.f32 %v1193, %v1296
  %v1298 = vpop.f32.mrb[0].mxu0
  %v1299 = vadd.f32 %v1197, %v1298
  %1300 = vmatprep.mubr.f32.mxu0 0.0
  %1301 = vmatmul.mubr.f32.gmra.mrb[0].mxu0 %v1133
  %v1302 = vpop.f32.mrb[0].mxu0
  %v1303 = vadd.f32 %v1193, %v1302
  %v1304 = vpop.f32.mrb[0].mxu0
  %v1305 = vadd.f32 %v1197, %v1304
  %1306 = vmatprep.mubr.f32.mxu0 0.0
  %1307 = vmatmul.mubr.f32.gmra.mrb[0].mxu0 %v1136
  %v1308 = vpop.f32.mrb[0].mxu0
  %v1309 = vadd.f32 %v1193, %v1308
  %v1310 = vpop.f32.mrb[0].mxu0
  %v1311 = vadd.f32 %v1197, %v1310
  %1312 = vdwg.mxu0
  %v1313 = vsel %vm81, 1, 0
  %v1314 = vsel %vm82, 1, 0
  %vm1315 = vcmp.eq.s32.totalorder %v1313, 1
  %vm1316 = vcmp.eq.s32.totalorder %v1314, 1
  %v1317 = vsel %vm1315, %v1267, %v1309
  %v1318 = vsel %vm1316, %v1269, %v1311
  %v1319 = vsel %vm1315, %v1273, %v1303
  %v1320 = vsel %vm1316, %v1275, %v1305
  %v1321 = vsel %vm1315, %v1279, %v1297
  %v1322 = vsel %vm1316, %v1281, %v1299
  %v1323 = vsel %vm1315, %v1285, %v1291
  %v1324 = vsel %vm1316, %v1287, %v1293
  %v1325 = vsel %vm1315, %v1291, %v1285
  %v1326 = vsel %vm1316, %v1293, %v1287
  %v1327 = vsel %vm1315, %v1297, %v1279
  %v1328 = vsel %vm1316, %v1299, %v1281
  %v1329 = vsel %vm1315, %v1303, %v1273
  %v1330 = vsel %vm1316, %v1305, %v1275
  %v1331 = vsel %vm1315, %v1309, %v1267
  %v1332 = vsel %vm1316, %v1311, %v1269
  %vm1333 = vcmask 523264
  %v1335 = vsel %vm1333, 0.0, 0
  %1337 = vmatprep.subr.mxu0 %v1140
  %1338 = vmatpush1.msra.mxu0 %v1139
  %1339 = vmatprep.subr.mxu0 %v1142
  %1340 = vmatpush1.msra.mxu0 %v1141
  %1341 = vmatprep.subr.mxu0 %v1144
  %1342 = vmatpush1.msra.mxu0 %v1143
  %1343 = vmatprep.subr.mxu0 %v1146
  %1344 = vmatpush1.msra.mxu0 %v1145
  %1345 = vmatprep.subr.mxu0 %v1148
  %1346 = vmatpush1.msra.mxu0 %v1147
  %1347 = vmatprep.subr.mxu0 %v1150
  %1348 = vmatpush1.msra.mxu0 %v1149
  %1349 = vmatprep.subr.mxu0 %v1152
  %1350 = vmatpush1.msra.mxu0 %v1151
  %1351 = vmatprep.subr.mxu0 %v1154
  %1352 = vmatpush1.msra.mxu0 %v1153
  %1353 = vmatprep.subr.mxu0 0.0
  %1354 = vmatpush1.msra.mxu0 0.0
  %1355 = vmatprep.subr.mxu0 0.0
  %1356 = vmatpush1.msra.mxu0 0.0
  %1357 = vmatprep.subr.mxu0 0.0
  %1358 = vmatpush1.msra.mxu0 0.0
  %1359 = vmatprep.subr.mxu0 0.0
  %1360 = vmatpush1.msra.mxu0 0.0
  %1361 = vmatprep.subr.mxu0 0.0
  %1362 = vmatpush1.msra.mxu0 0.0
  %1363 = vmatprep.subr.mxu0 0.0
  %1364 = vmatpush1.msra.mxu0 0.0
  %1365 = vmatprep.subr.mxu0 0.0
  %1366 = vmatpush1.msra.mxu0 0.0
  %1367 = vmatprep.subr.mxu0 0.0
  %1368 = vmatpush1.msra.mxu0 0.0
  %1369 = vmatprep.subr.mxu0 0.0
  %1370 = vmatpush1.msra.mxu0 0.0
  %1371 = vmatprep.subr.mxu0 0.0
  %1372 = vmatpush1.msra.mxu0 0.0
  %1373 = vmatprep.subr.mxu0 0.0
  %1374 = vmatpush1.msra.mxu0 0.0
  %1375 = vmatprep.subr.mxu0 0.0
  %1376 = vmatpush1.msra.mxu0 0.0
  %1377 = vmatprep.subr.mxu0 0.0
  %1378 = vmatpush1.msra.mxu0 0.0
  %1379 = vmatprep.subr.mxu0 0.0
  %1380 = vmatpush1.msra.mxu0 0.0
  %1381 = vmatprep.subr.mxu0 0.0
  %1382 = vmatpush1.msra.mxu0 0.0
  %1383 = vmatprep.subr.mxu0 0.0
  %1384 = vmatpush1.msra.mxu0 0.0
  %1385 = vmatprep.subr.mxu0 0.0
  %1386 = vmatpush1.msra.mxu0 0.0
  %1387 = vmatprep.subr.mxu0 0.0
  %1388 = vmatpush1.msra.mxu0 0.0
  %1389 = vmatprep.subr.mxu0 0.0
  %1390 = vmatpush1.msra.mxu0 0.0
  %1391 = vmatprep.subr.mxu0 0.0
  %1392 = vmatpush1.msra.mxu0 0.0
  %1393 = vmatprep.subr.mxu0 0.0
  %1394 = vmatpush1.msra.mxu0 0.0
  %1395 = vmatprep.subr.mxu0 0.0
  %1396 = vmatpush1.msra.mxu0 0.0
  %1397 = vmatprep.subr.mxu0 0.0
  %1398 = vmatpush1.msra.mxu0 0.0
  %1399 = vmatprep.subr.mxu0 0.0
  %1400 = vmatpush1.msra.mxu0 0.0
  %1401 = vmatprep.mubr.f32.mxu0 0.0
  %1402 = vmatmul.mubr.f32.gmra.mrb[0].mxu0 %v1335
  %v1403 = vpop.f32.mrb[0].mxu0
  %v1404 = vadd.f32 0.0, %v1403
  %v1405 = vpop.f32.mrb[0].mxu0
  %v1406 = vadd.f32 0.0, %v1405
  %1407 = vdwg.mxu0
  %v1408 = vadd.f32 %v1317, %v1404
  %v1409 = vxor.u32 %v1408, 2147483648
  %v1410 = vmul.f32 %v1409, 1.442695
  %v1411 = vpow.pop %v1410
  %v1412 = vadd.f32 %v1411, 1.0
  %v1413 = vrcp.pop %v1412
  %v1414 = vmul.f32 1.0, %v1413
  %v1416 = vlaneseq
  %v1417 = vshrl.u32 %v1416, 7
  %v1418 = vsub.s32 0, %v1417
  %v1419 = vrot.slane %v1155, %v1418
  %v1421 = vadd.f32 %v1406, %v1419
  %v1422 = vmul.f32 %v1414, %v1421
  %v1423 = vadd.f32 %v1318, %v1422
  %v1424 = vtanh.pop %v1423
  %v1425 = vsub.f32 1.0, %v1414
  %1427 = vrot.lane.b32.xlu0 %v1424, 64
  %v1428 = vpop.permute.xlu0 %1427
  %v1430 = vmul.f32 %v1425, %v1428
  %v1431 = vmul.f32 %v1414, 0.0
  %v1432 = vadd.f32 %v1430, %v1431
  %1434 = vrot.lane.b32.xlu0 %v1432, 64
  %v1435 = vpop.permute.xlu0 %1434
  %v1437 = vmul.f32 %v89, %v1435
  %v1438 = vmul.f32 %v93, 0.0
  %v1439 = vadd.f32 %v1437, %v1438
  %v1441 = vsel %vm1333, %v1439, 0
  %1443 = vmatprep.subr.mxu0 %v1140
  %1444 = vmatpush1.msra.mxu0 %v1139
  %1445 = vmatprep.subr.mxu0 %v1142
  %1446 = vmatpush1.msra.mxu0 %v1141
  %1447 = vmatprep.subr.mxu0 %v1144
  %1448 = vmatpush1.msra.mxu0 %v1143
  %1449 = vmatprep.subr.mxu0 %v1146
  %1450 = vmatpush1.msra.mxu0 %v1145
  %1451 = vmatprep.subr.mxu0 %v1148
  %1452 = vmatpush1.msra.mxu0 %v1147
  %1453 = vmatprep.subr.mxu0 %v1150
  %1454 = vmatpush1.msra.mxu0 %v1149
  %1455 = vmatprep.subr.mxu0 %v1152
  %1456 = vmatpush1.msra.mxu0 %v1151
  %1457 = vmatprep.subr.mxu0 %v1154
  %1458 = vmatpush1.msra.mxu0 %v1153
  %1459 = vmatprep.subr.mxu0 0.0
  %1460 = vmatpush1.msra.mxu0 0.0
  %1461 = vmatprep.subr.mxu0 0.0
  %1462 = vmatpush1.msra.mxu0 0.0
  %1463 = vmatprep.subr.mxu0 0.0
  %1464 = vmatpush1.msra.mxu0 0.0
  %1465 = vmatprep.subr.mxu0 0.0
  %1466 = vmatpush1.msra.mxu0 0.0
  %1467 = vmatprep.subr.mxu0 0.0
  %1468 = vmatpush1.msra.mxu0 0.0
  %1469 = vmatprep.subr.mxu0 0.0
  %1470 = vmatpush1.msra.mxu0 0.0
  %1471 = vmatprep.subr.mxu0 0.0
  %1472 = vmatpush1.msra.mxu0 0.0
  %1473 = vmatprep.subr.mxu0 0.0
  %1474 = vmatpush1.msra.mxu0 0.0
  %1475 = vmatprep.subr.mxu0 0.0
  %1476 = vmatpush1.msra.mxu0 0.0
  %1477 = vmatprep.subr.mxu0 0.0
  %1478 = vmatpush1.msra.mxu0 0.0
  %1479 = vmatprep.subr.mxu0 0.0
  %1480 = vmatpush1.msra.mxu0 0.0
  %1481 = vmatprep.subr.mxu0 0.0
  %1482 = vmatpush1.msra.mxu0 0.0
  %1483 = vmatprep.subr.mxu0 0.0
  %1484 = vmatpush1.msra.mxu0 0.0
  %1485 = vmatprep.subr.mxu0 0.0
  %1486 = vmatpush1.msra.mxu0 0.0
  %1487 = vmatprep.subr.mxu0 0.0
  %1488 = vmatpush1.msra.mxu0 0.0
  %1489 = vmatprep.subr.mxu0 0.0
  %1490 = vmatpush1.msra.mxu0 0.0
  %1491 = vmatprep.subr.mxu0 0.0
  %1492 = vmatpush1.msra.mxu0 0.0
  %1493 = vmatprep.subr.mxu0 0.0
  %1494 = vmatpush1.msra.mxu0 0.0
  %1495 = vmatprep.subr.mxu0 0.0
  %1496 = vmatpush1.msra.mxu0 0.0
  %1497 = vmatprep.subr.mxu0 0.0
  %1498 = vmatpush1.msra.mxu0 0.0
  %1499 = vmatprep.subr.mxu0 0.0
  %1500 = vmatpush1.msra.mxu0 0.0
  %1501 = vmatprep.subr.mxu0 0.0
  %1502 = vmatpush1.msra.mxu0 0.0
  %1503 = vmatprep.subr.mxu0 0.0
  %1504 = vmatpush1.msra.mxu0 0.0
  %1505 = vmatprep.subr.mxu0 0.0
  %1506 = vmatpush1.msra.mxu0 0.0
  %1507 = vmatprep.mubr.f32.mxu0 0.0
  %1508 = vmatmul.mubr.f32.gmra.mrb[0].mxu0 %v1441
  %v1509 = vpop.f32.mrb[0].mxu0
  %v1510 = vadd.f32 0.0, %v1509
  %v1511 = vpop.f32.mrb[0].mxu0
  %v1512 = vadd.f32 0.0, %v1511
  %1513 = vdwg.mxu0
  %v1514 = vadd.f32 %v1319, %v1510
  %v1515 = vxor.u32 %v1514, 2147483648
  %v1516 = vmul.f32 %v1515, 1.442695
  %v1517 = vpow.pop %v1516
  %v1518 = vadd.f32 %v1517, 1.0
  %v1519 = vrcp.pop %v1518
  %v1520 = vmul.f32 1.0, %v1519
  %v1521 = vadd.f32 %v1512, %v1419
  %v1522 = vmul.f32 %v1520, %v1521
  %v1523 = vadd.f32 %v1320, %v1522
  %v1524 = vtanh.pop %v1523
  %v1525 = vsub.f32 1.0, %v1520
  %1527 = vrot.lane.b32.xlu0 %v1524, 64
  %v1528 = vpop.permute.xlu0 %1527
  %v1530 = vmul.f32 %v1525, %v1528
  %1531 = vrot.lane.b32.xlu0 %v1439, 64
  %v1532 = vpop.permute.xlu0 %1531
  %v1534 = vmul.f32 %v1520, %v1532
  %v1535 = vadd.f32 %v1530, %v1534
  %1537 = vrot.lane.b32.xlu0 %v1535, 64
  %v1538 = vpop.permute.xlu0 %1537
  %v1540 = vmul.f32 %v101, %v1538
  %v1541 = vmul.f32 %v103, %v1439
  %v1542 = vadd.f32 %v1540, %v1541
  %v1544 = vsel %vm1333, %v1542, 0
  %1546 = vmatprep.subr.mxu0 %v1140
  %1547 = vmatpush1.msra.mxu0 %v1139
  %1548 = vmatprep.subr.mxu0 %v1142
  %1549 = vmatpush1.msra.mxu0 %v1141
  %1550 = vmatprep.subr.mxu0 %v1144
  %1551 = vmatpush1.msra.mxu0 %v1143
  %1552 = vmatprep.subr.mxu0 %v1146
  %1553 = vmatpush1.msra.mxu0 %v1145
  %1554 = vmatprep.subr.mxu0 %v1148
  %1555 = vmatpush1.msra.mxu0 %v1147
  %1556 = vmatprep.subr.mxu0 %v1150
  %1557 = vmatpush1.msra.mxu0 %v1149
  %1558 = vmatprep.subr.mxu0 %v1152
  %1559 = vmatpush1.msra.mxu0 %v1151
  %1560 = vmatprep.subr.mxu0 %v1154
  %1561 = vmatpush1.msra.mxu0 %v1153
  %1562 = vmatprep.subr.mxu0 0.0
  %1563 = vmatpush1.msra.mxu0 0.0
  %1564 = vmatprep.subr.mxu0 0.0
  %1565 = vmatpush1.msra.mxu0 0.0
  %1566 = vmatprep.subr.mxu0 0.0
  %1567 = vmatpush1.msra.mxu0 0.0
  %1568 = vmatprep.subr.mxu0 0.0
  %1569 = vmatpush1.msra.mxu0 0.0
  %1570 = vmatprep.subr.mxu0 0.0
  %1571 = vmatpush1.msra.mxu0 0.0
  %1572 = vmatprep.subr.mxu0 0.0
  %1573 = vmatpush1.msra.mxu0 0.0
  %1574 = vmatprep.subr.mxu0 0.0
  %1575 = vmatpush1.msra.mxu0 0.0
  %1576 = vmatprep.subr.mxu0 0.0
  %1577 = vmatpush1.msra.mxu0 0.0
  %1578 = vmatprep.subr.mxu0 0.0
  %1579 = vmatpush1.msra.mxu0 0.0
  %1580 = vmatprep.subr.mxu0 0.0
  %1581 = vmatpush1.msra.mxu0 0.0
  %1582 = vmatprep.subr.mxu0 0.0
  %1583 = vmatpush1.msra.mxu0 0.0
  %1584 = vmatprep.subr.mxu0 0.0
  %1585 = vmatpush1.msra.mxu0 0.0
  %1586 = vmatprep.subr.mxu0 0.0
  %1587 = vmatpush1.msra.mxu0 0.0
  %1588 = vmatprep.subr.mxu0 0.0
  %1589 = vmatpush1.msra.mxu0 0.0
  %1590 = vmatprep.subr.mxu0 0.0
  %1591 = vmatpush1.msra.mxu0 0.0
  %1592 = vmatprep.subr.mxu0 0.0
  %1593 = vmatpush1.msra.mxu0 0.0
  %1594 = vmatprep.subr.mxu0 0.0
  %1595 = vmatpush1.msra.mxu0 0.0
  %1596 = vmatprep.subr.mxu0 0.0
  %1597 = vmatpush1.msra.mxu0 0.0
  %1598 = vmatprep.subr.mxu0 0.0
  %1599 = vmatpush1.msra.mxu0 0.0
  %1600 = vmatprep.subr.mxu0 0.0
  %1601 = vmatpush1.msra.mxu0 0.0
  %1602 = vmatprep.subr.mxu0 0.0
  %1603 = vmatpush1.msra.mxu0 0.0
  %1604 = vmatprep.subr.mxu0 0.0
  %1605 = vmatpush1.msra.mxu0 0.0
  %1606 = vmatprep.subr.mxu0 0.0
  %1607 = vmatpush1.msra.mxu0 0.0
  %1608 = vmatprep.subr.mxu0 0.0
  %1609 = vmatpush1.msra.mxu0 0.0
  %1610 = vmatprep.mubr.f32.mxu0 0.0
  %1611 = vmatmul.mubr.f32.gmra.mrb[0].mxu0 %v1544
  %v1612 = vpop.f32.mrb[0].mxu0
  %v1613 = vadd.f32 0.0, %v1612
  %v1614 = vpop.f32.mrb[0].mxu0
  %v1615 = vadd.f32 0.0, %v1614
  %1616 = vdwg.mxu0
  %v1617 = vadd.f32 %v1321, %v1613
  %v1618 = vxor.u32 %v1617, 2147483648
  %v1619 = vmul.f32 %v1618, 1.442695
  %v1620 = vpow.pop %v1619
  %v1621 = vadd.f32 %v1620, 1.0
  %v1622 = vrcp.pop %v1621
  %v1623 = vmul.f32 1.0, %v1622
  %v1624 = vadd.f32 %v1615, %v1419
  %v1625 = vmul.f32 %v1623, %v1624
  %v1626 = vadd.f32 %v1322, %v1625
  %v1627 = vtanh.pop %v1626
  %v1628 = vsub.f32 1.0, %v1623
  %1630 = vrot.lane.b32.xlu0 %v1627, 64
  %v1631 = vpop.permute.xlu0 %1630
  %v1633 = vmul.f32 %v1628, %v1631
  %1634 = vrot.lane.b32.xlu0 %v1542, 64
  %v1635 = vpop.permute.xlu0 %1634
  %v1637 = vmul.f32 %v1623, %v1635
  %v1638 = vadd.f32 %v1633, %v1637
  %1640 = vrot.lane.b32.xlu0 %v1638, 64
  %v1641 = vpop.permute.xlu0 %1640
  %v1643 = vmul.f32 %v111, %v1641
  %v1644 = vmul.f32 %v113, %v1542
  %v1645 = vadd.f32 %v1643, %v1644
  %v1647 = vsel %vm1333, %v1645, 0
  %1649 = vmatprep.subr.mxu0 %v1140
  %1650 = vmatpush1.msra.mxu0 %v1139
  %1651 = vmatprep.subr.mxu0 %v1142
  %1652 = vmatpush1.msra.mxu0 %v1141
  %1653 = vmatprep.subr.mxu0 %v1144
  %1654 = vmatpush1.msra.mxu0 %v1143
  %1655 = vmatprep.subr.mxu0 %v1146
  %1656 = vmatpush1.msra.mxu0 %v1145
  %1657 = vmatprep.subr.mxu0 %v1148
  %1658 = vmatpush1.msra.mxu0 %v1147
  %1659 = vmatprep.subr.mxu0 %v1150
  %1660 = vmatpush1.msra.mxu0 %v1149
  %1661 = vmatprep.subr.mxu0 %v1152
  %1662 = vmatpush1.msra.mxu0 %v1151
  %1663 = vmatprep.subr.mxu0 %v1154
  %1664 = vmatpush1.msra.mxu0 %v1153
  %1665 = vmatprep.subr.mxu0 0.0
  %1666 = vmatpush1.msra.mxu0 0.0
  %1667 = vmatprep.subr.mxu0 0.0
  %1668 = vmatpush1.msra.mxu0 0.0
  %1669 = vmatprep.subr.mxu0 0.0
  %1670 = vmatpush1.msra.mxu0 0.0
  %1671 = vmatprep.subr.mxu0 0.0
  %1672 = vmatpush1.msra.mxu0 0.0
  %1673 = vmatprep.subr.mxu0 0.0
  %1674 = vmatpush1.msra.mxu0 0.0
  %1675 = vmatprep.subr.mxu0 0.0
  %1676 = vmatpush1.msra.mxu0 0.0
  %1677 = vmatprep.subr.mxu0 0.0
  %1678 = vmatpush1.msra.mxu0 0.0
  %1679 = vmatprep.subr.mxu0 0.0
  %1680 = vmatpush1.msra.mxu0 0.0
  %1681 = vmatprep.subr.mxu0 0.0
  %1682 = vmatpush1.msra.mxu0 0.0
  %1683 = vmatprep.subr.mxu0 0.0
  %1684 = vmatpush1.msra.mxu0 0.0
  %1685 = vmatprep.subr.mxu0 0.0
  %1686 = vmatpush1.msra.mxu0 0.0
  %1687 = vmatprep.subr.mxu0 0.0
  %1688 = vmatpush1.msra.mxu0 0.0
  %1689 = vmatprep.subr.mxu0 0.0
  %1690 = vmatpush1.msra.mxu0 0.0
  %1691 = vmatprep.subr.mxu0 0.0
  %1692 = vmatpush1.msra.mxu0 0.0
  %1693 = vmatprep.subr.mxu0 0.0
  %1694 = vmatpush1.msra.mxu0 0.0
  %1695 = vmatprep.subr.mxu0 0.0
  %1696 = vmatpush1.msra.mxu0 0.0
  %1697 = vmatprep.subr.mxu0 0.0
  %1698 = vmatpush1.msra.mxu0 0.0
  %1699 = vmatprep.subr.mxu0 0.0
  %1700 = vmatpush1.msra.mxu0 0.0
  %1701 = vmatprep.subr.mxu0 0.0
  %1702 = vmatpush1.msra.mxu0 0.0
  %1703 = vmatprep.subr.mxu0 0.0
  %1704 = vmatpush1.msra.mxu0 0.0
  %1705 = vmatprep.subr.mxu0 0.0
  %1706 = vmatpush1.msra.mxu0 0.0
  %1707 = vmatprep.subr.mxu0 0.0
  %1708 = vmatpush1.msra.mxu0 0.0
  %1709 = vmatprep.subr.mxu0 0.0
  %1710 = vmatpush1.msra.mxu0 0.0
  %1711 = vmatprep.subr.mxu0 0.0
  %1712 = vmatpush1.msra.mxu0 0.0
  %1713 = vmatprep.mubr.f32.mxu0 0.0
  %1714 = vmatmul.mubr.f32.gmra.mrb[0].mxu0 %v1647
  %v1715 = vpop.f32.mrb[0].mxu0
  %v1716 = vadd.f32 0.0, %v1715
  %v1717 = vpop.f32.mrb[0].mxu0
  %v1718 = vadd.f32 0.0, %v1717
  %1719 = vdwg.mxu0
  %v1720 = vadd.f32 %v1323, %v1716
  %v1721 = vxor.u32 %v1720, 2147483648
  %v1722 = vmul.f32 %v1721, 1.442695
  %v1723 = vpow.pop %v1722
  %v1724 = vadd.f32 %v1723, 1.0
  %v1725 = vrcp.pop %v1724
  %v1726 = vmul.f32 1.0, %v1725
  %v1727 = vadd.f32 %v1718, %v1419
  %v1728 = vmul.f32 %v1726, %v1727
  %v1729 = vadd.f32 %v1324, %v1728
  %v1730 = vtanh.pop %v1729
  %v1731 = vsub.f32 1.0, %v1726
  %1733 = vrot.lane.b32.xlu0 %v1730, 64
  %v1734 = vpop.permute.xlu0 %1733
  %v1736 = vmul.f32 %v1731, %v1734
  %1737 = vrot.lane.b32.xlu0 %v1645, 64
  %v1738 = vpop.permute.xlu0 %1737
  %v1740 = vmul.f32 %v1726, %v1738
  %v1741 = vadd.f32 %v1736, %v1740
  %1743 = vrot.lane.b32.xlu0 %v1741, 64
  %v1744 = vpop.permute.xlu0 %1743
  %v1746 = vmul.f32 %v121, %v1744
  %v1747 = vmul.f32 %v123, %v1645
  %v1748 = vadd.f32 %v1746, %v1747
  %v1750 = vsel %vm1333, %v1748, 0
  %1752 = vmatprep.subr.mxu0 %v1140
  %1753 = vmatpush1.msra.mxu0 %v1139
  %1754 = vmatprep.subr.mxu0 %v1142
  %1755 = vmatpush1.msra.mxu0 %v1141
  %1756 = vmatprep.subr.mxu0 %v1144
  %1757 = vmatpush1.msra.mxu0 %v1143
  %1758 = vmatprep.subr.mxu0 %v1146
  %1759 = vmatpush1.msra.mxu0 %v1145
  %1760 = vmatprep.subr.mxu0 %v1148
  %1761 = vmatpush1.msra.mxu0 %v1147
  %1762 = vmatprep.subr.mxu0 %v1150
  %1763 = vmatpush1.msra.mxu0 %v1149
  %1764 = vmatprep.subr.mxu0 %v1152
  %1765 = vmatpush1.msra.mxu0 %v1151
  %1766 = vmatprep.subr.mxu0 %v1154
  %1767 = vmatpush1.msra.mxu0 %v1153
  %1768 = vmatprep.subr.mxu0 0.0
  %1769 = vmatpush1.msra.mxu0 0.0
  %1770 = vmatprep.subr.mxu0 0.0
  %1771 = vmatpush1.msra.mxu0 0.0
  %1772 = vmatprep.subr.mxu0 0.0
  %1773 = vmatpush1.msra.mxu0 0.0
  %1774 = vmatprep.subr.mxu0 0.0
  %1775 = vmatpush1.msra.mxu0 0.0
  %1776 = vmatprep.subr.mxu0 0.0
  %1777 = vmatpush1.msra.mxu0 0.0
  %1778 = vmatprep.subr.mxu0 0.0
  %1779 = vmatpush1.msra.mxu0 0.0
  %1780 = vmatprep.subr.mxu0 0.0
  %1781 = vmatpush1.msra.mxu0 0.0
  %1782 = vmatprep.subr.mxu0 0.0
  %1783 = vmatpush1.msra.mxu0 0.0
  %1784 = vmatprep.subr.mxu0 0.0
  %1785 = vmatpush1.msra.mxu0 0.0
  %1786 = vmatprep.subr.mxu0 0.0
  %1787 = vmatpush1.msra.mxu0 0.0
  %1788 = vmatprep.subr.mxu0 0.0
  %1789 = vmatpush1.msra.mxu0 0.0
  %1790 = vmatprep.subr.mxu0 0.0
  %1791 = vmatpush1.msra.mxu0 0.0
  %1792 = vmatprep.subr.mxu0 0.0
  %1793 = vmatpush1.msra.mxu0 0.0
  %1794 = vmatprep.subr.mxu0 0.0
  %1795 = vmatpush1.msra.mxu0 0.0
  %1796 = vmatprep.subr.mxu0 0.0
  %1797 = vmatpush1.msra.mxu0 0.0
  %1798 = vmatprep.subr.mxu0 0.0
  %1799 = vmatpush1.msra.mxu0 0.0
  %1800 = vmatprep.subr.mxu0 0.0
  %1801 = vmatpush1.msra.mxu0 0.0
  %1802 = vmatprep.subr.mxu0 0.0
  %1803 = vmatpush1.msra.mxu0 0.0
  %1804 = vmatprep.subr.mxu0 0.0
  %1805 = vmatpush1.msra.mxu0 0.0
  %1806 = vmatprep.subr.mxu0 0.0
  %1807 = vmatpush1.msra.mxu0 0.0
  %1808 = vmatprep.subr.mxu0 0.0
  %1809 = vmatpush1.msra.mxu0 0.0
  %1810 = vmatprep.subr.mxu0 0.0
  %1811 = vmatpush1.msra.mxu0 0.0
  %1812 = vmatprep.subr.mxu0 0.0
  %1813 = vmatpush1.msra.mxu0 0.0
  %1814 = vmatprep.subr.mxu0 0.0
  %1815 = vmatpush1.msra.mxu0 0.0
  %1816 = vmatprep.mubr.f32.mxu0 0.0
  %1817 = vmatmul.mubr.f32.gmra.mrb[0].mxu0 %v1750
  %v1818 = vpop.f32.mrb[0].mxu0
  %v1819 = vadd.f32 0.0, %v1818
  %v1820 = vpop.f32.mrb[0].mxu0
  %v1821 = vadd.f32 0.0, %v1820
  %1822 = vdwg.mxu0
  %v1823 = vadd.f32 %v1325, %v1819
  %v1824 = vxor.u32 %v1823, 2147483648
  %v1825 = vmul.f32 %v1824, 1.442695
  %v1826 = vpow.pop %v1825
  %v1827 = vadd.f32 %v1826, 1.0
  %v1828 = vrcp.pop %v1827
  %v1829 = vmul.f32 1.0, %v1828
  %v1830 = vadd.f32 %v1821, %v1419
  %v1831 = vmul.f32 %v1829, %v1830
  %v1832 = vadd.f32 %v1326, %v1831
  %v1833 = vtanh.pop %v1832
  %v1834 = vsub.f32 1.0, %v1829
  %1836 = vrot.lane.b32.xlu0 %v1833, 64
  %v1837 = vpop.permute.xlu0 %1836
  %v1839 = vmul.f32 %v1834, %v1837
  %1840 = vrot.lane.b32.xlu0 %v1748, 64
  %v1841 = vpop.permute.xlu0 %1840
  %v1843 = vmul.f32 %v1829, %v1841
  %v1844 = vadd.f32 %v1839, %v1843
  %1846 = vrot.lane.b32.xlu0 %v1844, 64
  %v1847 = vpop.permute.xlu0 %1846
  %v1849 = vmul.f32 %v131, %v1847
  %v1850 = vmul.f32 %v133, %v1748
  %v1851 = vadd.f32 %v1849, %v1850
  %v1853 = vsel %vm1333, %v1851, 0
  %1855 = vmatprep.subr.mxu0 %v1140
  %1856 = vmatpush1.msra.mxu0 %v1139
  %1857 = vmatprep.subr.mxu0 %v1142
  %1858 = vmatpush1.msra.mxu0 %v1141
  %1859 = vmatprep.subr.mxu0 %v1144
  %1860 = vmatpush1.msra.mxu0 %v1143
  %1861 = vmatprep.subr.mxu0 %v1146
  %1862 = vmatpush1.msra.mxu0 %v1145
  %1863 = vmatprep.subr.mxu0 %v1148
  %1864 = vmatpush1.msra.mxu0 %v1147
  %1865 = vmatprep.subr.mxu0 %v1150
  %1866 = vmatpush1.msra.mxu0 %v1149
  %1867 = vmatprep.subr.mxu0 %v1152
  %1868 = vmatpush1.msra.mxu0 %v1151
  %1869 = vmatprep.subr.mxu0 %v1154
  %1870 = vmatpush1.msra.mxu0 %v1153
  %1871 = vmatprep.subr.mxu0 0.0
  %1872 = vmatpush1.msra.mxu0 0.0
  %1873 = vmatprep.subr.mxu0 0.0
  %1874 = vmatpush1.msra.mxu0 0.0
  %1875 = vmatprep.subr.mxu0 0.0
  %1876 = vmatpush1.msra.mxu0 0.0
  %1877 = vmatprep.subr.mxu0 0.0
  %1878 = vmatpush1.msra.mxu0 0.0
  %1879 = vmatprep.subr.mxu0 0.0
  %1880 = vmatpush1.msra.mxu0 0.0
  %1881 = vmatprep.subr.mxu0 0.0
  %1882 = vmatpush1.msra.mxu0 0.0
  %1883 = vmatprep.subr.mxu0 0.0
  %1884 = vmatpush1.msra.mxu0 0.0
  %1885 = vmatprep.subr.mxu0 0.0
  %1886 = vmatpush1.msra.mxu0 0.0
  %1887 = vmatprep.subr.mxu0 0.0
  %1888 = vmatpush1.msra.mxu0 0.0
  %1889 = vmatprep.subr.mxu0 0.0
  %1890 = vmatpush1.msra.mxu0 0.0
  %1891 = vmatprep.subr.mxu0 0.0
  %1892 = vmatpush1.msra.mxu0 0.0
  %1893 = vmatprep.subr.mxu0 0.0
  %1894 = vmatpush1.msra.mxu0 0.0
  %1895 = vmatprep.subr.mxu0 0.0
  %1896 = vmatpush1.msra.mxu0 0.0
  %1897 = vmatprep.subr.mxu0 0.0
  %1898 = vmatpush1.msra.mxu0 0.0
  %1899 = vmatprep.subr.mxu0 0.0
  %1900 = vmatpush1.msra.mxu0 0.0
  %1901 = vmatprep.subr.mxu0 0.0
  %1902 = vmatpush1.msra.mxu0 0.0
  %1903 = vmatprep.subr.mxu0 0.0
  %1904 = vmatpush1.msra.mxu0 0.0
  %1905 = vmatprep.subr.mxu0 0.0
  %1906 = vmatpush1.msra.mxu0 0.0
  %1907 = vmatprep.subr.mxu0 0.0
  %1908 = vmatpush1.msra.mxu0 0.0
  %1909 = vmatprep.subr.mxu0 0.0
  %1910 = vmatpush1.msra.mxu0 0.0
  %1911 = vmatprep.subr.mxu0 0.0
  %1912 = vmatpush1.msra.mxu0 0.0
  %1913 = vmatprep.subr.mxu0 0.0
  %1914 = vmatpush1.msra.mxu0 0.0
  %1915 = vmatprep.subr.mxu0 0.0
  %1916 = vmatpush1.msra.mxu0 0.0
  %1917 = vmatprep.subr.mxu0 0.0
  %1918 = vmatpush1.msra.mxu0 0.0
  %1919 = vmatprep.mubr.f32.mxu0 0.0
  %1920 = vmatmul.mubr.f32.gmra.mrb[0].mxu0 %v1853
  %v1921 = vpop.f32.mrb[0].mxu0
  %v1922 = vadd.f32 0.0, %v1921
  %v1923 = vpop.f32.mrb[0].mxu0
  %v1924 = vadd.f32 0.0, %v1923
  %1925 = vdwg.mxu0
  %v1926 = vadd.f32 %v1327, %v1922
  %v1927 = vxor.u32 %v1926, 2147483648
  %v1928 = vmul.f32 %v1927, 1.442695
  %v1929 = vpow.pop %v1928
  %v1930 = vadd.f32 %v1929, 1.0
  %v1931 = vrcp.pop %v1930
  %v1932 = vmul.f32 1.0, %v1931
  %v1933 = vadd.f32 %v1924, %v1419
  %v1934 = vmul.f32 %v1932, %v1933
  %v1935 = vadd.f32 %v1328, %v1934
  %v1936 = vtanh.pop %v1935
  %v1937 = vsub.f32 1.0, %v1932
  %1939 = vrot.lane.b32.xlu0 %v1936, 64
  %v1940 = vpop.permute.xlu0 %1939
  %v1942 = vmul.f32 %v1937, %v1940
  %1943 = vrot.lane.b32.xlu0 %v1851, 64
  %v1944 = vpop.permute.xlu0 %1943
  %v1946 = vmul.f32 %v1932, %v1944
  %v1947 = vadd.f32 %v1942, %v1946
  %1949 = vrot.lane.b32.xlu0 %v1947, 64
  %v1950 = vpop.permute.xlu0 %1949
  %v1952 = vmul.f32 %v141, %v1950
  %v1953 = vmul.f32 %v143, %v1851
  %v1954 = vadd.f32 %v1952, %v1953
  %v1956 = vsel %vm1333, %v1954, 0
  %1958 = vmatprep.subr.mxu0 %v1140
  %1959 = vmatpush1.msra.mxu0 %v1139
  %1960 = vmatprep.subr.mxu0 %v1142
  %1961 = vmatpush1.msra.mxu0 %v1141
  %1962 = vmatprep.subr.mxu0 %v1144
  %1963 = vmatpush1.msra.mxu0 %v1143
  %1964 = vmatprep.subr.mxu0 %v1146
  %1965 = vmatpush1.msra.mxu0 %v1145
  %1966 = vmatprep.subr.mxu0 %v1148
  %1967 = vmatpush1.msra.mxu0 %v1147
  %1968 = vmatprep.subr.mxu0 %v1150
  %1969 = vmatpush1.msra.mxu0 %v1149
  %1970 = vmatprep.subr.mxu0 %v1152
  %1971 = vmatpush1.msra.mxu0 %v1151
  %1972 = vmatprep.subr.mxu0 %v1154
  %1973 = vmatpush1.msra.mxu0 %v1153
  %1974 = vmatprep.subr.mxu0 0.0
  %1975 = vmatpush1.msra.mxu0 0.0
  %1976 = vmatprep.subr.mxu0 0.0
  %1977 = vmatpush1.msra.mxu0 0.0
  %1978 = vmatprep.subr.mxu0 0.0
  %1979 = vmatpush1.msra.mxu0 0.0
  %1980 = vmatprep.subr.mxu0 0.0
  %1981 = vmatpush1.msra.mxu0 0.0
  %1982 = vmatprep.subr.mxu0 0.0
  %1983 = vmatpush1.msra.mxu0 0.0
  %1984 = vmatprep.subr.mxu0 0.0
  %1985 = vmatpush1.msra.mxu0 0.0
  %1986 = vmatprep.subr.mxu0 0.0
  %1987 = vmatpush1.msra.mxu0 0.0
  %1988 = vmatprep.subr.mxu0 0.0
  %1989 = vmatpush1.msra.mxu0 0.0
  %1990 = vmatprep.subr.mxu0 0.0
  %1991 = vmatpush1.msra.mxu0 0.0
  %1992 = vmatprep.subr.mxu0 0.0
  %1993 = vmatpush1.msra.mxu0 0.0
  %1994 = vmatprep.subr.mxu0 0.0
  %1995 = vmatpush1.msra.mxu0 0.0
  %1996 = vmatprep.subr.mxu0 0.0
  %1997 = vmatpush1.msra.mxu0 0.0
  %1998 = vmatprep.subr.mxu0 0.0
  %1999 = vmatpush1.msra.mxu0 0.0
  %2000 = vmatprep.subr.mxu0 0.0
  %2001 = vmatpush1.msra.mxu0 0.0
  %2002 = vmatprep.subr.mxu0 0.0
  %2003 = vmatpush1.msra.mxu0 0.0
  %2004 = vmatprep.subr.mxu0 0.0
  %2005 = vmatpush1.msra.mxu0 0.0
  %2006 = vmatprep.subr.mxu0 0.0
  %2007 = vmatpush1.msra.mxu0 0.0
  %2008 = vmatprep.subr.mxu0 0.0
  %2009 = vmatpush1.msra.mxu0 0.0
  %2010 = vmatprep.subr.mxu0 0.0
  %2011 = vmatpush1.msra.mxu0 0.0
  %2012 = vmatprep.subr.mxu0 0.0
  %2013 = vmatpush1.msra.mxu0 0.0
  %2014 = vmatprep.subr.mxu0 0.0
  %2015 = vmatpush1.msra.mxu0 0.0
  %2016 = vmatprep.subr.mxu0 0.0
  %2017 = vmatpush1.msra.mxu0 0.0
  %2018 = vmatprep.subr.mxu0 0.0
  %2019 = vmatpush1.msra.mxu0 0.0
  %2020 = vmatprep.subr.mxu0 0.0
  %2021 = vmatpush1.msra.mxu0 0.0
  %2022 = vmatprep.mubr.f32.mxu0 0.0
  %2023 = vmatmul.mubr.f32.gmra.mrb[0].mxu0 %v1956
  %v2024 = vpop.f32.mrb[0].mxu0
  %v2025 = vadd.f32 0.0, %v2024
  %v2026 = vpop.f32.mrb[0].mxu0
  %v2027 = vadd.f32 0.0, %v2026
  %2028 = vdwg.mxu0
  %v2029 = vadd.f32 %v1329, %v2025
  %v2030 = vxor.u32 %v2029, 2147483648
  %v2031 = vmul.f32 %v2030, 1.442695
  %v2032 = vpow.pop %v2031
  %v2033 = vadd.f32 %v2032, 1.0
  %v2034 = vrcp.pop %v2033
  %v2035 = vmul.f32 1.0, %v2034
  %v2036 = vadd.f32 %v2027, %v1419
  %v2037 = vmul.f32 %v2035, %v2036
  %v2038 = vadd.f32 %v1330, %v2037
  %v2039 = vtanh.pop %v2038
  %v2040 = vsub.f32 1.0, %v2035
  %2042 = vrot.lane.b32.xlu0 %v2039, 64
  %v2043 = vpop.permute.xlu0 %2042
  %v2045 = vmul.f32 %v2040, %v2043
  %2046 = vrot.lane.b32.xlu0 %v1954, 64
  %v2047 = vpop.permute.xlu0 %2046
  %v2049 = vmul.f32 %v2035, %v2047
  %v2050 = vadd.f32 %v2045, %v2049
  %2052 = vrot.lane.b32.xlu0 %v2050, 64
  %v2053 = vpop.permute.xlu0 %2052
  %v2055 = vmul.f32 %v151, %v2053
  %v2056 = vmul.f32 %v153, %v1954
  %v2057 = vadd.f32 %v2055, %v2056
  %v2059 = vsel %vm1333, %v2057, 0
  %2061 = vmatprep.subr.mxu0 %v1140
  %2062 = vmatpush1.msra.mxu0 %v1139
  %2063 = vmatprep.subr.mxu0 %v1142
  %2064 = vmatpush1.msra.mxu0 %v1141
  %2065 = vmatprep.subr.mxu0 %v1144
  %2066 = vmatpush1.msra.mxu0 %v1143
  %2067 = vmatprep.subr.mxu0 %v1146
  %2068 = vmatpush1.msra.mxu0 %v1145
  %2069 = vmatprep.subr.mxu0 %v1148
  %2070 = vmatpush1.msra.mxu0 %v1147
  %2071 = vmatprep.subr.mxu0 %v1150
  %2072 = vmatpush1.msra.mxu0 %v1149
  %2073 = vmatprep.subr.mxu0 %v1152
  %2074 = vmatpush1.msra.mxu0 %v1151
  %2075 = vmatprep.subr.mxu0 %v1154
  %2076 = vmatpush1.msra.mxu0 %v1153
  %2077 = vmatprep.subr.mxu0 0.0
  %2078 = vmatpush1.msra.mxu0 0.0
  %2079 = vmatprep.subr.mxu0 0.0
  %2080 = vmatpush1.msra.mxu0 0.0
  %2081 = vmatprep.subr.mxu0 0.0
  %2082 = vmatpush1.msra.mxu0 0.0
  %2083 = vmatprep.subr.mxu0 0.0
  %2084 = vmatpush1.msra.mxu0 0.0
  %2085 = vmatprep.subr.mxu0 0.0
  %2086 = vmatpush1.msra.mxu0 0.0
  %2087 = vmatprep.subr.mxu0 0.0
  %2088 = vmatpush1.msra.mxu0 0.0
  %2089 = vmatprep.subr.mxu0 0.0
  %2090 = vmatpush1.msra.mxu0 0.0
  %2091 = vmatprep.subr.mxu0 0.0
  %2092 = vmatpush1.msra.mxu0 0.0
  %2093 = vmatprep.subr.mxu0 0.0
  %2094 = vmatpush1.msra.mxu0 0.0
  %2095 = vmatprep.subr.mxu0 0.0
  %2096 = vmatpush1.msra.mxu0 0.0
  %2097 = vmatprep.subr.mxu0 0.0
  %2098 = vmatpush1.msra.mxu0 0.0
  %2099 = vmatprep.subr.mxu0 0.0
  %2100 = vmatpush1.msra.mxu0 0.0
  %2101 = vmatprep.subr.mxu0 0.0
  %2102 = vmatpush1.msra.mxu0 0.0
  %2103 = vmatprep.subr.mxu0 0.0
  %2104 = vmatpush1.msra.mxu0 0.0
  %2105 = vmatprep.subr.mxu0 0.0
  %2106 = vmatpush1.msra.mxu0 0.0
  %2107 = vmatprep.subr.mxu0 0.0
  %2108 = vmatpush1.msra.mxu0 0.0
  %2109 = vmatprep.subr.mxu0 0.0
  %2110 = vmatpush1.msra.mxu0 0.0
  %2111 = vmatprep.subr.mxu0 0.0
  %2112 = vmatpush1.msra.mxu0 0.0
  %2113 = vmatprep.subr.mxu0 0.0
  %2114 = vmatpush1.msra.mxu0 0.0
  %2115 = vmatprep.subr.mxu0 0.0
  %2116 = vmatpush1.msra.mxu0 0.0
  %2117 = vmatprep.subr.mxu0 0.0
  %2118 = vmatpush1.msra.mxu0 0.0
  %2119 = vmatprep.subr.mxu0 0.0
  %2120 = vmatpush1.msra.mxu0 0.0
  %2121 = vmatprep.subr.mxu0 0.0
  %2122 = vmatpush1.msra.mxu0 0.0
  %2123 = vmatprep.subr.mxu0 0.0
  %2124 = vmatpush1.msra.mxu0 0.0
  %2125 = vmatprep.mubr.f32.mxu0 0.0
  %2126 = vmatmul.mubr.f32.gmra.mrb[0].mxu0 %v2059
  %v2127 = vpop.f32.mrb[0].mxu0
  %v2128 = vadd.f32 0.0, %v2127
  %v2129 = vpop.f32.mrb[0].mxu0
  %v2130 = vadd.f32 0.0, %v2129
  %2131 = vdwg.mxu0
  %v2132 = vadd.f32 %v1331, %v2128
  %v2133 = vxor.u32 %v2132, 2147483648
  %v2134 = vmul.f32 %v2133, 1.442695
  %v2135 = vpow.pop %v2134
  %v2136 = vadd.f32 %v2135, 1.0
  %v2137 = vrcp.pop %v2136
  %v2138 = vmul.f32 1.0, %v2137
  %v2139 = vadd.f32 %v2130, %v1419
  %v2140 = vmul.f32 %v2138, %v2139
  %v2141 = vadd.f32 %v1332, %v2140
  %v2142 = vtanh.pop %v2141
  %v2143 = vsub.f32 1.0, %v2138
  %2145 = vrot.lane.b32.xlu0 %v2142, 64
  %v2146 = vpop.permute.xlu0 %2145
  %v2148 = vmul.f32 %v2143, %v2146
  %2149 = vrot.lane.b32.xlu0 %v2057, 64
  %v2150 = vpop.permute.xlu0 %2149
  %v2152 = vmul.f32 %v2138, %v2150
  %v2153 = vadd.f32 %v2148, %v2152
  %2155 = vrot.lane.b32.xlu0 %v2153, 64
  %v2156 = vpop.permute.xlu0 %2155
  %v2158 = vmul.f32 %v161, %v2156
  %v2159 = vmul.f32 %v163, %v2057
  %v2160 = vadd.f32 %v2158, %v2159
  %vm2161 = vcmask 261120
  %2162 = vst.msk [vmem:[%s15] sm:$0xff] %vm2161, %v2160
  %2164 = vrot.lane.b32.xlu0 %v2160, 96
  %v2165 = vpop.permute.xlu0 %2164
  %s2167 = scalar_lea.vmem %s15, 8
  %2168 = vst.msk [vmem:[%s2167] sm:$0xff] %vm2161, %v2165
  %v2169 = vsel %vm92, %v1437, %v2158
  %v2170 = vsel %vm92, %v1540, %v2055
  %v2171 = vsel %vm92, %v1643, %v1952
  %v2172 = vsel %vm92, %v1746, %v1849
  %v2173 = vsel %vm92, %v1849, %v1746
  %v2174 = vsel %vm92, %v1952, %v1643
  %v2175 = vsel %vm92, %v2055, %v1540
  %v2176 = vsel %vm92, %v2158, %v1437
  %v2177 = vld [vmem:[%s10] sm:$0xff]
  %v2178 = vld [vmem:[%s10 + $0x8] sm:$0xff]
  %v2179 = vld [vmem:[%s10 + $0x10] sm:$0xff]
  %v2180 = vld [vmem:[%s10 + $0x18] sm:$0xff]
  %v2181 = vld [vmem:[%s10 + $0x20] sm:$0xff]
  %v2182 = vld [vmem:[%s10 + $0x28] sm:$0xff]
  %v2183 = vld [vmem:[%s10 + $0x30] sm:$0xff]
  %v2184 = vld [vmem:[%s10 + $0x38] sm:$0xff]
  %v2185 = vld [vmem:[%s10 + $0x40] sm:$0xff]
  %v2186 = vld [vmem:[%s10 + $0x48] sm:$0xff]
  %v2187 = vld [vmem:[%s10 + $0x50] sm:$0xff]
  %v2188 = vld [vmem:[%s10 + $0x58] sm:$0xff]
  %v2189 = vld [vmem:[%s10 + $0x60] sm:$0xff]
  %v2190 = vld [vmem:[%s10 + $0x68] sm:$0xff]
  %v2191 = vld [vmem:[%s10 + $0x70] sm:$0xff]
  %v2192 = vld [vmem:[%s10 + $0x78] sm:$0xff]
  %v2193 = vld [vmem:[%s11] sm:$0x1]
  %v2194 = vld [vmem:[%s8] sm:$0xff]
  %v2195 = vld [vmem:[%s8 + $0x8] sm:$0xff]
  %v2196 = vld [vmem:[%s8 + $0x10] sm:$0xff]
  %v2197 = vld [vmem:[%s8 + $0x18] sm:$0xff]
  %v2198 = vld [vmem:[%s8 + $0x20] sm:$0xff]
  %v2199 = vld [vmem:[%s8 + $0x28] sm:$0xff]
  %v2200 = vld [vmem:[%s8 + $0x30] sm:$0xff]
  %v2201 = vld [vmem:[%s8 + $0x38] sm:$0xff]
  %v2202 = vld [vmem:[%s8 + $0x40] sm:$0xff]
  %v2203 = vld [vmem:[%s8 + $0x48] sm:$0xff]
  %v2204 = vld [vmem:[%s8 + $0x50] sm:$0xff]
  %v2205 = vld [vmem:[%s8 + $0x58] sm:$0xff]
  %v2206 = vld [vmem:[%s8 + $0x60] sm:$0xff]
  %v2207 = vld [vmem:[%s8 + $0x68] sm:$0xff]
  %v2208 = vld [vmem:[%s8 + $0x70] sm:$0xff]
  %v2209 = vld [vmem:[%s8 + $0x78] sm:$0xff]
  %v2210 = vld [vmem:[%s9] sm:$0x3]
  %v2212 = vlaneseq
  %v2213 = vshrl.u32 %v2212, 7
  %v2214 = vsub.s32 0, %v2213
  %v2215 = vrot.slane %v2210, %v2214
  %v2216 = vlaneseq
  %v2217 = vshrl.u32 %v2216, 7
  %v2218 = vsub.s32 1, %v2217
  %v2219 = vrot.slane %v2210, %v2218
  %v2223 = vsel %vm1333, %v2169, 0
  %v2226 = vsel %vm1333, %v2170, 0
  %v2229 = vsel %vm1333, %v2171, 0
  %v2232 = vsel %vm1333, %v2172, 0
  %v2235 = vsel %vm1333, %v2173, 0
  %v2238 = vsel %vm1333, %v2174, 0
  %v2241 = vsel %vm1333, %v2175, 0
  %v2244 = vsel %vm1333, %v2176, 0
  %2246 = vmatprep.subr.mxu0 %v2195
  %2247 = vmatpush1.msra.mxu0 %v2194
  %2248 = vmatprep.subr.mxu0 %v2197
  %2249 = vmatpush1.msra.mxu0 %v2196
  %2250 = vmatprep.subr.mxu0 %v2199
  %2251 = vmatpush1.msra.mxu0 %v2198
  %2252 = vmatprep.subr.mxu0 %v2201
  %2253 = vmatpush1.msra.mxu0 %v2200
  %2254 = vmatprep.subr.mxu0 %v2203
  %2255 = vmatpush1.msra.mxu0 %v2202
  %2256 = vmatprep.subr.mxu0 %v2205
  %2257 = vmatpush1.msra.mxu0 %v2204
  %2258 = vmatprep.subr.mxu0 %v2207
  %2259 = vmatpush1.msra.mxu0 %v2206
  %2260 = vmatprep.subr.mxu0 %v2209
  %2261 = vmatpush1.msra.mxu0 %v2208
  %2262 = vmatprep.subr.mxu0 0.0
  %2263 = vmatpush1.msra.mxu0 0.0
  %2264 = vmatprep.subr.mxu0 0.0
  %2265 = vmatpush1.msra.mxu0 0.0
  %2266 = vmatprep.subr.mxu0 0.0
  %2267 = vmatpush1.msra.mxu0 0.0
  %2268 = vmatprep.subr.mxu0 0.0
  %2269 = vmatpush1.msra.mxu0 0.0
  %2270 = vmatprep.subr.mxu0 0.0
  %2271 = vmatpush1.msra.mxu0 0.0
  %2272 = vmatprep.subr.mxu0 0.0
  %2273 = vmatpush1.msra.mxu0 0.0
  %2274 = vmatprep.subr.mxu0 0.0
  %2275 = vmatpush1.msra.mxu0 0.0
  %2276 = vmatprep.subr.mxu0 0.0
  %2277 = vmatpush1.msra.mxu0 0.0
  %2278 = vmatprep.subr.mxu0 0.0
  %2279 = vmatpush1.msra.mxu0 0.0
  %2280 = vmatprep.subr.mxu0 0.0
  %2281 = vmatpush1.msra.mxu0 0.0
  %2282 = vmatprep.subr.mxu0 0.0
  %2283 = vmatpush1.msra.mxu0 0.0
  %2284 = vmatprep.subr.mxu0 0.0
  %2285 = vmatpush1.msra.mxu0 0.0
  %2286 = vmatprep.subr.mxu0 0.0
  %2287 = vmatpush1.msra.mxu0 0.0
  %2288 = vmatprep.subr.mxu0 0.0
  %2289 = vmatpush1.msra.mxu0 0.0
  %2290 = vmatprep.subr.mxu0 0.0
  %2291 = vmatpush1.msra.mxu0 0.0
  %2292 = vmatprep.subr.mxu0 0.0
  %2293 = vmatpush1.msra.mxu0 0.0
  %2294 = vmatprep.subr.mxu0 0.0
  %2295 = vmatpush1.msra.mxu0 0.0
  %2296 = vmatprep.subr.mxu0 0.0
  %2297 = vmatpush1.msra.mxu0 0.0
  %2298 = vmatprep.subr.mxu0 0.0
  %2299 = vmatpush1.msra.mxu0 0.0
  %2300 = vmatprep.subr.mxu0 0.0
  %2301 = vmatpush1.msra.mxu0 0.0
  %2302 = vmatprep.subr.mxu0 0.0
  %2303 = vmatpush1.msra.mxu0 0.0
  %2304 = vmatprep.subr.mxu0 0.0
  %2305 = vmatpush1.msra.mxu0 0.0
  %2306 = vmatprep.subr.mxu0 0.0
  %2307 = vmatpush1.msra.mxu0 0.0
  %2308 = vmatprep.subr.mxu0 0.0
  %2309 = vmatpush1.msra.mxu0 0.0
  %2310 = vmatprep.mubr.f32.mxu0 0.0
  %2311 = vmatmul.mubr.f32.gmra.mrb[0].mxu0 %v2223
  %v2312 = vpop.f32.mrb[0].mxu0
  %v2313 = vadd.f32 %v2215, %v2312
  %v2314 = vpop.f32.mrb[0].mxu0
  %v2315 = vadd.f32 %v2219, %v2314
  %2316 = vmatprep.mubr.f32.mxu0 0.0
  %2317 = vmatmul.mubr.f32.gmra.mrb[0].mxu0 %v2226
  %v2318 = vpop.f32.mrb[0].mxu0
  %v2319 = vadd.f32 %v2215, %v2318
  %v2320 = vpop.f32.mrb[0].mxu0
  %v2321 = vadd.f32 %v2219, %v2320
  %2322 = vmatprep.mubr.f32.mxu0 0.0
  %2323 = vmatmul.mubr.f32.gmra.mrb[0].mxu0 %v2229
  %v2324 = vpop.f32.mrb[0].mxu0
  %v2325 = vadd.f32 %v2215, %v2324
  %v2326 = vpop.f32.mrb[0].mxu0
  %v2327 = vadd.f32 %v2219, %v2326
  %2328 = vmatprep.mubr.f32.mxu0 0.0
  %2329 = vmatmul.mubr.f32.gmra.mrb[0].mxu0 %v2232
  %v2330 = vpop.f32.mrb[0].mxu0
  %v2331 = vadd.f32 %v2215, %v2330
  %v2332 = vpop.f32.mrb[0].mxu0
  %v2333 = vadd.f32 %v2219, %v2332
  %2334 = vmatprep.mubr.f32.mxu0 0.0
  %2335 = vmatmul.mubr.f32.gmra.mrb[0].mxu0 %v2235
  %v2336 = vpop.f32.mrb[0].mxu0
  %v2337 = vadd.f32 %v2215, %v2336
  %v2338 = vpop.f32.mrb[0].mxu0
  %v2339 = vadd.f32 %v2219, %v2338
  %2340 = vmatprep.mubr.f32.mxu0 0.0
  %2341 = vmatmul.mubr.f32.gmra.mrb[0].mxu0 %v2238
  %v2342 = vpop.f32.mrb[0].mxu0
  %v2343 = vadd.f32 %v2215, %v2342
  %v2344 = vpop.f32.mrb[0].mxu0
  %v2345 = vadd.f32 %v2219, %v2344
  %2346 = vmatprep.mubr.f32.mxu0 0.0
  %2347 = vmatmul.mubr.f32.gmra.mrb[0].mxu0 %v2241
  %v2348 = vpop.f32.mrb[0].mxu0
  %v2349 = vadd.f32 %v2215, %v2348
  %v2350 = vpop.f32.mrb[0].mxu0
  %v2351 = vadd.f32 %v2219, %v2350
  %2352 = vmatprep.mubr.f32.mxu0 0.0
  %2353 = vmatmul.mubr.f32.gmra.mrb[0].mxu0 %v2244
  %v2354 = vpop.f32.mrb[0].mxu0
  %v2355 = vadd.f32 %v2215, %v2354
  %v2356 = vpop.f32.mrb[0].mxu0
  %v2357 = vadd.f32 %v2219, %v2356
  %2358 = vdwg.mxu0
  %v2359 = vsel %vm1315, %v2313, %v2355
  %v2360 = vsel %vm1316, %v2315, %v2357
  %v2361 = vsel %vm1315, %v2319, %v2349
  %v2362 = vsel %vm1316, %v2321, %v2351
  %v2363 = vsel %vm1315, %v2325, %v2343
  %v2364 = vsel %vm1316, %v2327, %v2345
  %v2365 = vsel %vm1315, %v2331, %v2337
  %v2366 = vsel %vm1316, %v2333, %v2339
  %v2367 = vsel %vm1315, %v2337, %v2331
  %v2368 = vsel %vm1316, %v2339, %v2333
  %v2369 = vsel %vm1315, %v2343, %v2325
  %v2370 = vsel %vm1316, %v2345, %v2327
  %v2371 = vsel %vm1315, %v2349, %v2319
  %v2372 = vsel %vm1316, %v2351, %v2321
  %v2373 = vsel %vm1315, %v2355, %v2313
  %v2374 = vsel %vm1316, %v2357, %v2315
  %2375 = vmatprep.subr.mxu0 %v2178
  %2376 = vmatpush1.msra.mxu0 %v2177
  %2377 = vmatprep.subr.mxu0 %v2180
  %2378 = vmatpush1.msra.mxu0 %v2179
  %2379 = vmatprep.subr.mxu0 %v2182
  %2380 = vmatpush1.msra.mxu0 %v2181
  %2381 = vmatprep.subr.mxu0 %v2184
  %2382 = vmatpush1.msra.mxu0 %v2183
  %2383 = vmatprep.subr.mxu0 %v2186
  %2384 = vmatpush1.msra.mxu0 %v2185
  %2385 = vmatprep.subr.mxu0 %v2188
  %2386 = vmatpush1.msra.mxu0 %v2187
  %2387 = vmatprep.subr.mxu0 %v2190
  %2388 = vmatpush1.msra.mxu0 %v2189
  %2389 = vmatprep.subr.mxu0 %v2192
  %2390 = vmatpush1.msra.mxu0 %v2191
  %2391 = vmatprep.subr.mxu0 0.0
  %2392 = vmatpush1.msra.mxu0 0.0
  %2393 = vmatprep.subr.mxu0 0.0
  %2394 = vmatpush1.msra.mxu0 0.0
  %2395 = vmatprep.subr.mxu0 0.0
  %2396 = vmatpush1.msra.mxu0 0.0
  %2397 = vmatprep.subr.mxu0 0.0
  %2398 = vmatpush1.msra.mxu0 0.0
  %2399 = vmatprep.subr.mxu0 0.0
  %2400 = vmatpush1.msra.mxu0 0.0
  %2401 = vmatprep.subr.mxu0 0.0
  %2402 = vmatpush1.msra.mxu0 0.0
  %2403 = vmatprep.subr.mxu0 0.0
  %2404 = vmatpush1.msra.mxu0 0.0
  %2405 = vmatprep.subr.mxu0 0.0
  %2406 = vmatpush1.msra.mxu0 0.0
  %2407 = vmatprep.subr.mxu0 0.0
  %2408 = vmatpush1.msra.mxu0 0.0
  %2409 = vmatprep.subr.mxu0 0.0
  %2410 = vmatpush1.msra.mxu0 0.0
  %2411 = vmatprep.subr.mxu0 0.0
  %2412 = vmatpush1.msra.mxu0 0.0
  %2413 = vmatprep.subr.mxu0 0.0
  %2414 = vmatpush1.msra.mxu0 0.0
  %2415 = vmatprep.subr.mxu0 0.0
  %2416 = vmatpush1.msra.mxu0 0.0
  %2417 = vmatprep.subr.mxu0 0.0
  %2418 = vmatpush1.msra.mxu0 0.0
  %2419 = vmatprep.subr.mxu0 0.0
  %2420 = vmatpush1.msra.mxu0 0.0
  %2421 = vmatprep.subr.mxu0 0.0
  %2422 = vmatpush1.msra.mxu0 0.0
  %2423 = vmatprep.subr.mxu0 0.0
  %2424 = vmatpush1.msra.mxu0 0.0
  %2425 = vmatprep.subr.mxu0 0.0
  %2426 = vmatpush1.msra.mxu0 0.0
  %2427 = vmatprep.subr.mxu0 0.0
  %2428 = vmatpush1.msra.mxu0 0.0
  %2429 = vmatprep.subr.mxu0 0.0
  %2430 = vmatpush1.msra.mxu0 0.0
  %2431 = vmatprep.subr.mxu0 0.0
  %2432 = vmatpush1.msra.mxu0 0.0
  %2433 = vmatprep.subr.mxu0 0.0
  %2434 = vmatpush1.msra.mxu0 0.0
  %2435 = vmatprep.subr.mxu0 0.0
  %2436 = vmatpush1.msra.mxu0 0.0
  %2437 = vmatprep.subr.mxu0 0.0
  %2438 = vmatpush1.msra.mxu0 0.0
  %2439 = vmatprep.mubr.f32.mxu0 0.0
  %2440 = vmatmul.mubr.f32.gmra.mrb[0].mxu0 %v1335
  %v2441 = vpop.f32.mrb[0].mxu0
  %v2442 = vadd.f32 0.0, %v2441
  %v2443 = vpop.f32.mrb[0].mxu0
  %v2444 = vadd.f32 0.0, %v2443
  %2445 = vdwg.mxu0
  %v2446 = vadd.f32 %v2359, %v2442
  %v2447 = vxor.u32 %v2446, 2147483648
  %v2448 = vmul.f32 %v2447, 1.442695
  %v2449 = vpow.pop %v2448
  %v2450 = vadd.f32 %v2449, 1.0
  %v2451 = vrcp.pop %v2450
  %v2452 = vmul.f32 1.0, %v2451
  %v2454 = vlaneseq
  %v2455 = vshrl.u32 %v2454, 7
  %v2456 = vsub.s32 0, %v2455
  %v2457 = vrot.slane %v2193, %v2456
  %v2459 = vadd.f32 %v2444, %v2457
  %v2460 = vmul.f32 %v2452, %v2459
  %v2461 = vadd.f32 %v2360, %v2460
  %v2462 = vtanh.pop %v2461
  %v2463 = vsub.f32 1.0, %v2452
  %2465 = vrot.lane.b32.xlu0 %v2462, 64
  %v2466 = vpop.permute.xlu0 %2465
  %v2468 = vmul.f32 %v2463, %v2466
  %v2469 = vmul.f32 %v2452, 0.0
  %v2470 = vadd.f32 %v2468, %v2469
  %2472 = vrot.lane.b32.xlu0 %v2470, 64
  %v2473 = vpop.permute.xlu0 %2472
  %v2475 = vmul.f32 %v89, %v2473
  %v2476 = vadd.f32 %v2475, %v1438
  %v2478 = vsel %vm1333, %v2476, 0
  %2480 = vmatprep.subr.mxu0 %v2178
  %2481 = vmatpush1.msra.mxu0 %v2177
  %2482 = vmatprep.subr.mxu0 %v2180
  %2483 = vmatpush1.msra.mxu0 %v2179
  %2484 = vmatprep.subr.mxu0 %v2182
  %2485 = vmatpush1.msra.mxu0 %v2181
  %2486 = vmatprep.subr.mxu0 %v2184
  %2487 = vmatpush1.msra.mxu0 %v2183
  %2488 = vmatprep.subr.mxu0 %v2186
  %2489 = vmatpush1.msra.mxu0 %v2185
  %2490 = vmatprep.subr.mxu0 %v2188
  %2491 = vmatpush1.msra.mxu0 %v2187
  %2492 = vmatprep.subr.mxu0 %v2190
  %2493 = vmatpush1.msra.mxu0 %v2189
  %2494 = vmatprep.subr.mxu0 %v2192
  %2495 = vmatpush1.msra.mxu0 %v2191
  %2496 = vmatprep.subr.mxu0 0.0
  %2497 = vmatpush1.msra.mxu0 0.0
  %2498 = vmatprep.subr.mxu0 0.0
  %2499 = vmatpush1.msra.mxu0 0.0
  %2500 = vmatprep.subr.mxu0 0.0
  %2501 = vmatpush1.msra.mxu0 0.0
  %2502 = vmatprep.subr.mxu0 0.0
  %2503 = vmatpush1.msra.mxu0 0.0
  %2504 = vmatprep.subr.mxu0 0.0
  %2505 = vmatpush1.msra.mxu0 0.0
  %2506 = vmatprep.subr.mxu0 0.0
  %2507 = vmatpush1.msra.mxu0 0.0
  %2508 = vmatprep.subr.mxu0 0.0
  %2509 = vmatpush1.msra.mxu0 0.0
  %2510 = vmatprep.subr.mxu0 0.0
  %2511 = vmatpush1.msra.mxu0 0.0
  %2512 = vmatprep.subr.mxu0 0.0
  %2513 = vmatpush1.msra.mxu0 0.0
  %2514 = vmatprep.subr.mxu0 0.0
  %2515 = vmatpush1.msra.mxu0 0.0
  %2516 = vmatprep.subr.mxu0 0.0
  %2517 = vmatpush1.msra.mxu0 0.0
  %2518 = vmatprep.subr.mxu0 0.0
  %2519 = vmatpush1.msra.mxu0 0.0
  %2520 = vmatprep.subr.mxu0 0.0
  %2521 = vmatpush1.msra.mxu0 0.0
  %2522 = vmatprep.subr.mxu0 0.0
  %2523 = vmatpush1.msra.mxu0 0.0
  %2524 = vmatprep.subr.mxu0 0.0
  %2525 = vmatpush1.msra.mxu0 0.0
  %2526 = vmatprep.subr.mxu0 0.0
  %2527 = vmatpush1.msra.mxu0 0.0
  %2528 = vmatprep.subr.mxu0 0.0
  %2529 = vmatpush1.msra.mxu0 0.0
  %2530 = vmatprep.subr.mxu0 0.0
  %2531 = vmatpush1.msra.mxu0 0.0
  %2532 = vmatprep.subr.mxu0 0.0
  %2533 = vmatpush1.msra.mxu0 0.0
  %2534 = vmatprep.subr.mxu0 0.0
  %2535 = vmatpush1.msra.mxu0 0.0
  %2536 = vmatprep.subr.mxu0 0.0
  %2537 = vmatpush1.msra.mxu0 0.0
  %2538 = vmatprep.subr.mxu0 0.0
  %2539 = vmatpush1.msra.mxu0 0.0
  %2540 = vmatprep.subr.mxu0 0.0
  %2541 = vmatpush1.msra.mxu0 0.0
  %2542 = vmatprep.subr.mxu0 0.0
  %2543 = vmatpush1.msra.mxu0 0.0
  %2544 = vmatprep.mubr.f32.mxu0 0.0
  %2545 = vmatmul.mubr.f32.gmra.mrb[0].mxu0 %v2478
  %v2546 = vpop.f32.mrb[0].mxu0
  %v2547 = vadd.f32 0.0, %v2546
  %v2548 = vpop.f32.mrb[0].mxu0
  %v2549 = vadd.f32 0.0, %v2548
  %2550 = vdwg.mxu0
  %v2551 = vadd.f32 %v2361, %v2547
  %v2552 = vxor.u32 %v2551, 2147483648
  %v2553 = vmul.f32 %v2552, 1.442695
  %v2554 = vpow.pop %v2553
  %v2555 = vadd.f32 %v2554, 1.0
  %v2556 = vrcp.pop %v2555
  %v2557 = vmul.f32 1.0, %v2556
  %v2558 = vadd.f32 %v2549, %v2457
  %v2559 = vmul.f32 %v2557, %v2558
  %v2560 = vadd.f32 %v2362, %v2559
  %v2561 = vtanh.pop %v2560
  %v2562 = vsub.f32 1.0, %v2557
  %2564 = vrot.lane.b32.xlu0 %v2561, 64
  %v2565 = vpop.permute.xlu0 %2564
  %v2567 = vmul.f32 %v2562, %v2565
  %2568 = vrot.lane.b32.xlu0 %v2476, 64
  %v2569 = vpop.permute.xlu0 %2568
  %v2571 = vmul.f32 %v2557, %v2569
  %v2572 = vadd.f32 %v2567, %v2571
  %2574 = vrot.lane.b32.xlu0 %v2572, 64
  %v2575 = vpop.permute.xlu0 %2574
  %v2577 = vmul.f32 %v101, %v2575
  %v2578 = vmul.f32 %v103, %v2476
  %v2579 = vadd.f32 %v2577, %v2578
  %v2581 = vsel %vm1333, %v2579, 0
  %2583 = vmatprep.subr.mxu0 %v2178
  %2584 = vmatpush1.msra.mxu0 %v2177
  %2585 = vmatprep.subr.mxu0 %v2180
  %2586 = vmatpush1.msra.mxu0 %v2179
  %2587 = vmatprep.subr.mxu0 %v2182
  %2588 = vmatpush1.msra.mxu0 %v2181
  %2589 = vmatprep.subr.mxu0 %v2184
  %2590 = vmatpush1.msra.mxu0 %v2183
  %2591 = vmatprep.subr.mxu0 %v2186
  %2592 = vmatpush1.msra.mxu0 %v2185
  %2593 = vmatprep.subr.mxu0 %v2188
  %2594 = vmatpush1.msra.mxu0 %v2187
  %2595 = vmatprep.subr.mxu0 %v2190
  %2596 = vmatpush1.msra.mxu0 %v2189
  %2597 = vmatprep.subr.mxu0 %v2192
  %2598 = vmatpush1.msra.mxu0 %v2191
  %2599 = vmatprep.subr.mxu0 0.0
  %2600 = vmatpush1.msra.mxu0 0.0
  %2601 = vmatprep.subr.mxu0 0.0
  %2602 = vmatpush1.msra.mxu0 0.0
  %2603 = vmatprep.subr.mxu0 0.0
  %2604 = vmatpush1.msra.mxu0 0.0
  %2605 = vmatprep.subr.mxu0 0.0
  %2606 = vmatpush1.msra.mxu0 0.0
  %2607 = vmatprep.subr.mxu0 0.0
  %2608 = vmatpush1.msra.mxu0 0.0
  %2609 = vmatprep.subr.mxu0 0.0
  %2610 = vmatpush1.msra.mxu0 0.0
  %2611 = vmatprep.subr.mxu0 0.0
  %2612 = vmatpush1.msra.mxu0 0.0
  %2613 = vmatprep.subr.mxu0 0.0
  %2614 = vmatpush1.msra.mxu0 0.0
  %2615 = vmatprep.subr.mxu0 0.0
  %2616 = vmatpush1.msra.mxu0 0.0
  %2617 = vmatprep.subr.mxu0 0.0
  %2618 = vmatpush1.msra.mxu0 0.0
  %2619 = vmatprep.subr.mxu0 0.0
  %2620 = vmatpush1.msra.mxu0 0.0
  %2621 = vmatprep.subr.mxu0 0.0
  %2622 = vmatpush1.msra.mxu0 0.0
  %2623 = vmatprep.subr.mxu0 0.0
  %2624 = vmatpush1.msra.mxu0 0.0
  %2625 = vmatprep.subr.mxu0 0.0
  %2626 = vmatpush1.msra.mxu0 0.0
  %2627 = vmatprep.subr.mxu0 0.0
  %2628 = vmatpush1.msra.mxu0 0.0
  %2629 = vmatprep.subr.mxu0 0.0
  %2630 = vmatpush1.msra.mxu0 0.0
  %2631 = vmatprep.subr.mxu0 0.0
  %2632 = vmatpush1.msra.mxu0 0.0
  %2633 = vmatprep.subr.mxu0 0.0
  %2634 = vmatpush1.msra.mxu0 0.0
  %2635 = vmatprep.subr.mxu0 0.0
  %2636 = vmatpush1.msra.mxu0 0.0
  %2637 = vmatprep.subr.mxu0 0.0
  %2638 = vmatpush1.msra.mxu0 0.0
  %2639 = vmatprep.subr.mxu0 0.0
  %2640 = vmatpush1.msra.mxu0 0.0
  %2641 = vmatprep.subr.mxu0 0.0
  %2642 = vmatpush1.msra.mxu0 0.0
  %2643 = vmatprep.subr.mxu0 0.0
  %2644 = vmatpush1.msra.mxu0 0.0
  %2645 = vmatprep.subr.mxu0 0.0
  %2646 = vmatpush1.msra.mxu0 0.0
  %2647 = vmatprep.mubr.f32.mxu0 0.0
  %2648 = vmatmul.mubr.f32.gmra.mrb[0].mxu0 %v2581
  %v2649 = vpop.f32.mrb[0].mxu0
  %v2650 = vadd.f32 0.0, %v2649
  %v2651 = vpop.f32.mrb[0].mxu0
  %v2652 = vadd.f32 0.0, %v2651
  %2653 = vdwg.mxu0
  %v2654 = vadd.f32 %v2363, %v2650
  %v2655 = vxor.u32 %v2654, 2147483648
  %v2656 = vmul.f32 %v2655, 1.442695
  %v2657 = vpow.pop %v2656
  %v2658 = vadd.f32 %v2657, 1.0
  %v2659 = vrcp.pop %v2658
  %v2660 = vmul.f32 1.0, %v2659
  %v2661 = vadd.f32 %v2652, %v2457
  %v2662 = vmul.f32 %v2660, %v2661
  %v2663 = vadd.f32 %v2364, %v2662
  %v2664 = vtanh.pop %v2663
  %v2665 = vsub.f32 1.0, %v2660
  %2667 = vrot.lane.b32.xlu0 %v2664, 64
  %v2668 = vpop.permute.xlu0 %2667
  %v2670 = vmul.f32 %v2665, %v2668
  %2671 = vrot.lane.b32.xlu0 %v2579, 64
  %v2672 = vpop.permute.xlu0 %2671
  %v2674 = vmul.f32 %v2660, %v2672
  %v2675 = vadd.f32 %v2670, %v2674
  %2677 = vrot.lane.b32.xlu0 %v2675, 64
  %v2678 = vpop.permute.xlu0 %2677
  %v2680 = vmul.f32 %v111, %v2678
  %v2681 = vmul.f32 %v113, %v2579
  %v2682 = vadd.f32 %v2680, %v2681
  %v2684 = vsel %vm1333, %v2682, 0
  %2686 = vmatprep.subr.mxu0 %v2178
  %2687 = vmatpush1.msra.mxu0 %v2177
  %2688 = vmatprep.subr.mxu0 %v2180
  %2689 = vmatpush1.msra.mxu0 %v2179
  %2690 = vmatprep.subr.mxu0 %v2182
  %2691 = vmatpush1.msra.mxu0 %v2181
  %2692 = vmatprep.subr.mxu0 %v2184
  %2693 = vmatpush1.msra.mxu0 %v2183
  %2694 = vmatprep.subr.mxu0 %v2186
  %2695 = vmatpush1.msra.mxu0 %v2185
  %2696 = vmatprep.subr.mxu0 %v2188
  %2697 = vmatpush1.msra.mxu0 %v2187
  %2698 = vmatprep.subr.mxu0 %v2190
  %2699 = vmatpush1.msra.mxu0 %v2189
  %2700 = vmatprep.subr.mxu0 %v2192
  %2701 = vmatpush1.msra.mxu0 %v2191
  %2702 = vmatprep.subr.mxu0 0.0
  %2703 = vmatpush1.msra.mxu0 0.0
  %2704 = vmatprep.subr.mxu0 0.0
  %2705 = vmatpush1.msra.mxu0 0.0
  %2706 = vmatprep.subr.mxu0 0.0
  %2707 = vmatpush1.msra.mxu0 0.0
  %2708 = vmatprep.subr.mxu0 0.0
  %2709 = vmatpush1.msra.mxu0 0.0
  %2710 = vmatprep.subr.mxu0 0.0
  %2711 = vmatpush1.msra.mxu0 0.0
  %2712 = vmatprep.subr.mxu0 0.0
  %2713 = vmatpush1.msra.mxu0 0.0
  %2714 = vmatprep.subr.mxu0 0.0
  %2715 = vmatpush1.msra.mxu0 0.0
  %2716 = vmatprep.subr.mxu0 0.0
  %2717 = vmatpush1.msra.mxu0 0.0
  %2718 = vmatprep.subr.mxu0 0.0
  %2719 = vmatpush1.msra.mxu0 0.0
  %2720 = vmatprep.subr.mxu0 0.0
  %2721 = vmatpush1.msra.mxu0 0.0
  %2722 = vmatprep.subr.mxu0 0.0
  %2723 = vmatpush1.msra.mxu0 0.0
  %2724 = vmatprep.subr.mxu0 0.0
  %2725 = vmatpush1.msra.mxu0 0.0
  %2726 = vmatprep.subr.mxu0 0.0
  %2727 = vmatpush1.msra.mxu0 0.0
  %2728 = vmatprep.subr.mxu0 0.0
  %2729 = vmatpush1.msra.mxu0 0.0
  %2730 = vmatprep.subr.mxu0 0.0
  %2731 = vmatpush1.msra.mxu0 0.0
  %2732 = vmatprep.subr.mxu0 0.0
  %2733 = vmatpush1.msra.mxu0 0.0
  %2734 = vmatprep.subr.mxu0 0.0
  %2735 = vmatpush1.msra.mxu0 0.0
  %2736 = vmatprep.subr.mxu0 0.0
  %2737 = vmatpush1.msra.mxu0 0.0
  %2738 = vmatprep.subr.mxu0 0.0
  %2739 = vmatpush1.msra.mxu0 0.0
  %2740 = vmatprep.subr.mxu0 0.0
  %2741 = vmatpush1.msra.mxu0 0.0
  %2742 = vmatprep.subr.mxu0 0.0
  %2743 = vmatpush1.msra.mxu0 0.0
  %2744 = vmatprep.subr.mxu0 0.0
  %2745 = vmatpush1.msra.mxu0 0.0
  %2746 = vmatprep.subr.mxu0 0.0
  %2747 = vmatpush1.msra.mxu0 0.0
  %2748 = vmatprep.subr.mxu0 0.0
  %2749 = vmatpush1.msra.mxu0 0.0
  %2750 = vmatprep.mubr.f32.mxu0 0.0
  %2751 = vmatmul.mubr.f32.gmra.mrb[0].mxu0 %v2684
  %v2752 = vpop.f32.mrb[0].mxu0
  %v2753 = vadd.f32 0.0, %v2752
  %v2754 = vpop.f32.mrb[0].mxu0
  %v2755 = vadd.f32 0.0, %v2754
  %2756 = vdwg.mxu0
  %v2757 = vadd.f32 %v2365, %v2753
  %v2758 = vxor.u32 %v2757, 2147483648
  %v2759 = vmul.f32 %v2758, 1.442695
  %v2760 = vpow.pop %v2759
  %v2761 = vadd.f32 %v2760, 1.0
  %v2762 = vrcp.pop %v2761
  %v2763 = vmul.f32 1.0, %v2762
  %v2764 = vadd.f32 %v2755, %v2457
  %v2765 = vmul.f32 %v2763, %v2764
  %v2766 = vadd.f32 %v2366, %v2765
  %v2767 = vtanh.pop %v2766
  %v2768 = vsub.f32 1.0, %v2763
  %2770 = vrot.lane.b32.xlu0 %v2767, 64
  %v2771 = vpop.permute.xlu0 %2770
  %v2773 = vmul.f32 %v2768, %v2771
  %2774 = vrot.lane.b32.xlu0 %v2682, 64
  %v2775 = vpop.permute.xlu0 %2774
  %v2777 = vmul.f32 %v2763, %v2775
  %v2778 = vadd.f32 %v2773, %v2777
  %2780 = vrot.lane.b32.xlu0 %v2778, 64
  %v2781 = vpop.permute.xlu0 %2780
  %v2783 = vmul.f32 %v121, %v2781
  %v2784 = vmul.f32 %v123, %v2682
  %v2785 = vadd.f32 %v2783, %v2784
  %v2787 = vsel %vm1333, %v2785, 0
  %2789 = vmatprep.subr.mxu0 %v2178
  %2790 = vmatpush1.msra.mxu0 %v2177
  %2791 = vmatprep.subr.mxu0 %v2180
  %2792 = vmatpush1.msra.mxu0 %v2179
  %2793 = vmatprep.subr.mxu0 %v2182
  %2794 = vmatpush1.msra.mxu0 %v2181
  %2795 = vmatprep.subr.mxu0 %v2184
  %2796 = vmatpush1.msra.mxu0 %v2183
  %2797 = vmatprep.subr.mxu0 %v2186
  %2798 = vmatpush1.msra.mxu0 %v2185
  %2799 = vmatprep.subr.mxu0 %v2188
  %2800 = vmatpush1.msra.mxu0 %v2187
  %2801 = vmatprep.subr.mxu0 %v2190
  %2802 = vmatpush1.msra.mxu0 %v2189
  %2803 = vmatprep.subr.mxu0 %v2192
  %2804 = vmatpush1.msra.mxu0 %v2191
  %2805 = vmatprep.subr.mxu0 0.0
  %2806 = vmatpush1.msra.mxu0 0.0
  %2807 = vmatprep.subr.mxu0 0.0
  %2808 = vmatpush1.msra.mxu0 0.0
  %2809 = vmatprep.subr.mxu0 0.0
  %2810 = vmatpush1.msra.mxu0 0.0
  %2811 = vmatprep.subr.mxu0 0.0
  %2812 = vmatpush1.msra.mxu0 0.0
  %2813 = vmatprep.subr.mxu0 0.0
  %2814 = vmatpush1.msra.mxu0 0.0
  %2815 = vmatprep.subr.mxu0 0.0
  %2816 = vmatpush1.msra.mxu0 0.0
  %2817 = vmatprep.subr.mxu0 0.0
  %2818 = vmatpush1.msra.mxu0 0.0
  %2819 = vmatprep.subr.mxu0 0.0
  %2820 = vmatpush1.msra.mxu0 0.0
  %2821 = vmatprep.subr.mxu0 0.0
  %2822 = vmatpush1.msra.mxu0 0.0
  %2823 = vmatprep.subr.mxu0 0.0
  %2824 = vmatpush1.msra.mxu0 0.0
  %2825 = vmatprep.subr.mxu0 0.0
  %2826 = vmatpush1.msra.mxu0 0.0
  %2827 = vmatprep.subr.mxu0 0.0
  %2828 = vmatpush1.msra.mxu0 0.0
  %2829 = vmatprep.subr.mxu0 0.0
  %2830 = vmatpush1.msra.mxu0 0.0
  %2831 = vmatprep.subr.mxu0 0.0
  %2832 = vmatpush1.msra.mxu0 0.0
  %2833 = vmatprep.subr.mxu0 0.0
  %2834 = vmatpush1.msra.mxu0 0.0
  %2835 = vmatprep.subr.mxu0 0.0
  %2836 = vmatpush1.msra.mxu0 0.0
  %2837 = vmatprep.subr.mxu0 0.0
  %2838 = vmatpush1.msra.mxu0 0.0
  %2839 = vmatprep.subr.mxu0 0.0
  %2840 = vmatpush1.msra.mxu0 0.0
  %2841 = vmatprep.subr.mxu0 0.0
  %2842 = vmatpush1.msra.mxu0 0.0
  %2843 = vmatprep.subr.mxu0 0.0
  %2844 = vmatpush1.msra.mxu0 0.0
  %2845 = vmatprep.subr.mxu0 0.0
  %2846 = vmatpush1.msra.mxu0 0.0
  %2847 = vmatprep.subr.mxu0 0.0
  %2848 = vmatpush1.msra.mxu0 0.0
  %2849 = vmatprep.subr.mxu0 0.0
  %2850 = vmatpush1.msra.mxu0 0.0
  %2851 = vmatprep.subr.mxu0 0.0
  %2852 = vmatpush1.msra.mxu0 0.0
  %2853 = vmatprep.mubr.f32.mxu0 0.0
  %2854 = vmatmul.mubr.f32.gmra.mrb[0].mxu0 %v2787
  %v2855 = vpop.f32.mrb[0].mxu0
  %v2856 = vadd.f32 0.0, %v2855
  %v2857 = vpop.f32.mrb[0].mxu0
  %v2858 = vadd.f32 0.0, %v2857
  %2859 = vdwg.mxu0
  %v2860 = vadd.f32 %v2367, %v2856
  %v2861 = vxor.u32 %v2860, 2147483648
  %v2862 = vmul.f32 %v2861, 1.442695
  %v2863 = vpow.pop %v2862
  %v2864 = vadd.f32 %v2863, 1.0
  %v2865 = vrcp.pop %v2864
  %v2866 = vmul.f32 1.0, %v2865
  %v2867 = vadd.f32 %v2858, %v2457
  %v2868 = vmul.f32 %v2866, %v2867
  %v2869 = vadd.f32 %v2368, %v2868
  %v2870 = vtanh.pop %v2869
  %v2871 = vsub.f32 1.0, %v2866
  %2873 = vrot.lane.b32.xlu0 %v2870, 64
  %v2874 = vpop.permute.xlu0 %2873
  %v2876 = vmul.f32 %v2871, %v2874
  %2877 = vrot.lane.b32.xlu0 %v2785, 64
  %v2878 = vpop.permute.xlu0 %2877
  %v2880 = vmul.f32 %v2866, %v2878
  %v2881 = vadd.f32 %v2876, %v2880
  %2883 = vrot.lane.b32.xlu0 %v2881, 64
  %v2884 = vpop.permute.xlu0 %2883
  %v2886 = vmul.f32 %v131, %v2884
  %v2887 = vmul.f32 %v133, %v2785
  %v2888 = vadd.f32 %v2886, %v2887
  %v2890 = vsel %vm1333, %v2888, 0
  %2892 = vmatprep.subr.mxu0 %v2178
  %2893 = vmatpush1.msra.mxu0 %v2177
  %2894 = vmatprep.subr.mxu0 %v2180
  %2895 = vmatpush1.msra.mxu0 %v2179
  %2896 = vmatprep.subr.mxu0 %v2182
  %2897 = vmatpush1.msra.mxu0 %v2181
  %2898 = vmatprep.subr.mxu0 %v2184
  %2899 = vmatpush1.msra.mxu0 %v2183
  %2900 = vmatprep.subr.mxu0 %v2186
  %2901 = vmatpush1.msra.mxu0 %v2185
  %2902 = vmatprep.subr.mxu0 %v2188
  %2903 = vmatpush1.msra.mxu0 %v2187
  %2904 = vmatprep.subr.mxu0 %v2190
  %2905 = vmatpush1.msra.mxu0 %v2189
  %2906 = vmatprep.subr.mxu0 %v2192
  %2907 = vmatpush1.msra.mxu0 %v2191
  %2908 = vmatprep.subr.mxu0 0.0
  %2909 = vmatpush1.msra.mxu0 0.0
  %2910 = vmatprep.subr.mxu0 0.0
  %2911 = vmatpush1.msra.mxu0 0.0
  %2912 = vmatprep.subr.mxu0 0.0
  %2913 = vmatpush1.msra.mxu0 0.0
  %2914 = vmatprep.subr.mxu0 0.0
  %2915 = vmatpush1.msra.mxu0 0.0
  %2916 = vmatprep.subr.mxu0 0.0
  %2917 = vmatpush1.msra.mxu0 0.0
  %2918 = vmatprep.subr.mxu0 0.0
  %2919 = vmatpush1.msra.mxu0 0.0
  %2920 = vmatprep.subr.mxu0 0.0
  %2921 = vmatpush1.msra.mxu0 0.0
  %2922 = vmatprep.subr.mxu0 0.0
  %2923 = vmatpush1.msra.mxu0 0.0
  %2924 = vmatprep.subr.mxu0 0.0
  %2925 = vmatpush1.msra.mxu0 0.0
  %2926 = vmatprep.subr.mxu0 0.0
  %2927 = vmatpush1.msra.mxu0 0.0
  %2928 = vmatprep.subr.mxu0 0.0
  %2929 = vmatpush1.msra.mxu0 0.0
  %2930 = vmatprep.subr.mxu0 0.0
  %2931 = vmatpush1.msra.mxu0 0.0
  %2932 = vmatprep.subr.mxu0 0.0
  %2933 = vmatpush1.msra.mxu0 0.0
  %2934 = vmatprep.subr.mxu0 0.0
  %2935 = vmatpush1.msra.mxu0 0.0
  %2936 = vmatprep.subr.mxu0 0.0
  %2937 = vmatpush1.msra.mxu0 0.0
  %2938 = vmatprep.subr.mxu0 0.0
  %2939 = vmatpush1.msra.mxu0 0.0
  %2940 = vmatprep.subr.mxu0 0.0
  %2941 = vmatpush1.msra.mxu0 0.0
  %2942 = vmatprep.subr.mxu0 0.0
  %2943 = vmatpush1.msra.mxu0 0.0
  %2944 = vmatprep.subr.mxu0 0.0
  %2945 = vmatpush1.msra.mxu0 0.0
  %2946 = vmatprep.subr.mxu0 0.0
  %2947 = vmatpush1.msra.mxu0 0.0
  %2948 = vmatprep.subr.mxu0 0.0
  %2949 = vmatpush1.msra.mxu0 0.0
  %2950 = vmatprep.subr.mxu0 0.0
  %2951 = vmatpush1.msra.mxu0 0.0
  %2952 = vmatprep.subr.mxu0 0.0
  %2953 = vmatpush1.msra.mxu0 0.0
  %2954 = vmatprep.subr.mxu0 0.0
  %2955 = vmatpush1.msra.mxu0 0.0
  %2956 = vmatprep.mubr.f32.mxu0 0.0
  %2957 = vmatmul.mubr.f32.gmra.mrb[0].mxu0 %v2890
  %v2958 = vpop.f32.mrb[0].mxu0
  %v2959 = vadd.f32 0.0, %v2958
  %v2960 = vpop.f32.mrb[0].mxu0
  %v2961 = vadd.f32 0.0, %v2960
  %2962 = vdwg.mxu0
  %v2963 = vadd.f32 %v2369, %v2959
  %v2964 = vxor.u32 %v2963, 2147483648
  %v2965 = vmul.f32 %v2964, 1.442695
  %v2966 = vpow.pop %v2965
  %v2967 = vadd.f32 %v2966, 1.0
  %v2968 = vrcp.pop %v2967
  %v2969 = vmul.f32 1.0, %v2968
  %v2970 = vadd.f32 %v2961, %v2457
  %v2971 = vmul.f32 %v2969, %v2970
  %v2972 = vadd.f32 %v2370, %v2971
  %v2973 = vtanh.pop %v2972
  %v2974 = vsub.f32 1.0, %v2969
  %2976 = vrot.lane.b32.xlu0 %v2973, 64
  %v2977 = vpop.permute.xlu0 %2976
  %v2979 = vmul.f32 %v2974, %v2977
  %2980 = vrot.lane.b32.xlu0 %v2888, 64
  %v2981 = vpop.permute.xlu0 %2980
  %v2983 = vmul.f32 %v2969, %v2981
  %v2984 = vadd.f32 %v2979, %v2983
  %2986 = vrot.lane.b32.xlu0 %v2984, 64
  %v2987 = vpop.permute.xlu0 %2986
  %v2989 = vmul.f32 %v141, %v2987
  %v2990 = vmul.f32 %v143, %v2888
  %v2991 = vadd.f32 %v2989, %v2990
  %v2993 = vsel %vm1333, %v2991, 0
  %2995 = vmatprep.subr.mxu0 %v2178
  %2996 = vmatpush1.msra.mxu0 %v2177
  %2997 = vmatprep.subr.mxu0 %v2180
  %2998 = vmatpush1.msra.mxu0 %v2179
  %2999 = vmatprep.subr.mxu0 %v2182
  %3000 = vmatpush1.msra.mxu0 %v2181
  %3001 = vmatprep.subr.mxu0 %v2184
  %3002 = vmatpush1.msra.mxu0 %v2183
  %3003 = vmatprep.subr.mxu0 %v2186
  %3004 = vmatpush1.msra.mxu0 %v2185
  %3005 = vmatprep.subr.mxu0 %v2188
  %3006 = vmatpush1.msra.mxu0 %v2187
  %3007 = vmatprep.subr.mxu0 %v2190
  %3008 = vmatpush1.msra.mxu0 %v2189
  %3009 = vmatprep.subr.mxu0 %v2192
  %3010 = vmatpush1.msra.mxu0 %v2191
  %3011 = vmatprep.subr.mxu0 0.0
  %3012 = vmatpush1.msra.mxu0 0.0
  %3013 = vmatprep.subr.mxu0 0.0
  %3014 = vmatpush1.msra.mxu0 0.0
  %3015 = vmatprep.subr.mxu0 0.0
  %3016 = vmatpush1.msra.mxu0 0.0
  %3017 = vmatprep.subr.mxu0 0.0
  %3018 = vmatpush1.msra.mxu0 0.0
  %3019 = vmatprep.subr.mxu0 0.0
  %3020 = vmatpush1.msra.mxu0 0.0
  %3021 = vmatprep.subr.mxu0 0.0
  %3022 = vmatpush1.msra.mxu0 0.0
  %3023 = vmatprep.subr.mxu0 0.0
  %3024 = vmatpush1.msra.mxu0 0.0
  %3025 = vmatprep.subr.mxu0 0.0
  %3026 = vmatpush1.msra.mxu0 0.0
  %3027 = vmatprep.subr.mxu0 0.0
  %3028 = vmatpush1.msra.mxu0 0.0
  %3029 = vmatprep.subr.mxu0 0.0
  %3030 = vmatpush1.msra.mxu0 0.0
  %3031 = vmatprep.subr.mxu0 0.0
  %3032 = vmatpush1.msra.mxu0 0.0
  %3033 = vmatprep.subr.mxu0 0.0
  %3034 = vmatpush1.msra.mxu0 0.0
  %3035 = vmatprep.subr.mxu0 0.0
  %3036 = vmatpush1.msra.mxu0 0.0
  %3037 = vmatprep.subr.mxu0 0.0
  %3038 = vmatpush1.msra.mxu0 0.0
  %3039 = vmatprep.subr.mxu0 0.0
  %3040 = vmatpush1.msra.mxu0 0.0
  %3041 = vmatprep.subr.mxu0 0.0
  %3042 = vmatpush1.msra.mxu0 0.0
  %3043 = vmatprep.subr.mxu0 0.0
  %3044 = vmatpush1.msra.mxu0 0.0
  %3045 = vmatprep.subr.mxu0 0.0
  %3046 = vmatpush1.msra.mxu0 0.0
  %3047 = vmatprep.subr.mxu0 0.0
  %3048 = vmatpush1.msra.mxu0 0.0
  %3049 = vmatprep.subr.mxu0 0.0
  %3050 = vmatpush1.msra.mxu0 0.0
  %3051 = vmatprep.subr.mxu0 0.0
  %3052 = vmatpush1.msra.mxu0 0.0
  %3053 = vmatprep.subr.mxu0 0.0
  %3054 = vmatpush1.msra.mxu0 0.0
  %3055 = vmatprep.subr.mxu0 0.0
  %3056 = vmatpush1.msra.mxu0 0.0
  %3057 = vmatprep.subr.mxu0 0.0
  %3058 = vmatpush1.msra.mxu0 0.0
  %3059 = vmatprep.mubr.f32.mxu0 0.0
  %3060 = vmatmul.mubr.f32.gmra.mrb[0].mxu0 %v2993
  %v3061 = vpop.f32.mrb[0].mxu0
  %v3062 = vadd.f32 0.0, %v3061
  %v3063 = vpop.f32.mrb[0].mxu0
  %v3064 = vadd.f32 0.0, %v3063
  %3065 = vdwg.mxu0
  %v3066 = vadd.f32 %v2371, %v3062
  %v3067 = vxor.u32 %v3066, 2147483648
  %v3068 = vmul.f32 %v3067, 1.442695
  %v3069 = vpow.pop %v3068
  %v3070 = vadd.f32 %v3069, 1.0
  %v3071 = vrcp.pop %v3070
  %v3072 = vmul.f32 1.0, %v3071
  %v3073 = vadd.f32 %v3064, %v2457
  %v3074 = vmul.f32 %v3072, %v3073
  %v3075 = vadd.f32 %v2372, %v3074
  %v3076 = vtanh.pop %v3075
  %v3077 = vsub.f32 1.0, %v3072
  %3079 = vrot.lane.b32.xlu0 %v3076, 64
  %v3080 = vpop.permute.xlu0 %3079
  %v3082 = vmul.f32 %v3077, %v3080
  %3083 = vrot.lane.b32.xlu0 %v2991, 64
  %v3084 = vpop.permute.xlu0 %3083
  %v3086 = vmul.f32 %v3072, %v3084
  %v3087 = vadd.f32 %v3082, %v3086
  %3089 = vrot.lane.b32.xlu0 %v3087, 64
  %v3090 = vpop.permute.xlu0 %3089
  %v3092 = vmul.f32 %v151, %v3090
  %v3093 = vmul.f32 %v153, %v2991
  %v3094 = vadd.f32 %v3092, %v3093
  %v3096 = vsel %vm1333, %v3094, 0
  %3098 = vmatprep.subr.mxu0 %v2178
  %3099 = vmatpush1.msra.mxu0 %v2177
  %3100 = vmatprep.subr.mxu0 %v2180
  %3101 = vmatpush1.msra.mxu0 %v2179
  %3102 = vmatprep.subr.mxu0 %v2182
  %3103 = vmatpush1.msra.mxu0 %v2181
  %3104 = vmatprep.subr.mxu0 %v2184
  %3105 = vmatpush1.msra.mxu0 %v2183
  %3106 = vmatprep.subr.mxu0 %v2186
  %3107 = vmatpush1.msra.mxu0 %v2185
  %3108 = vmatprep.subr.mxu0 %v2188
  %3109 = vmatpush1.msra.mxu0 %v2187
  %3110 = vmatprep.subr.mxu0 %v2190
  %3111 = vmatpush1.msra.mxu0 %v2189
  %3112 = vmatprep.subr.mxu0 %v2192
  %3113 = vmatpush1.msra.mxu0 %v2191
  %3114 = vmatprep.subr.mxu0 0.0
  %3115 = vmatpush1.msra.mxu0 0.0
  %3116 = vmatprep.subr.mxu0 0.0
  %3117 = vmatpush1.msra.mxu0 0.0
  %3118 = vmatprep.subr.mxu0 0.0
  %3119 = vmatpush1.msra.mxu0 0.0
  %3120 = vmatprep.subr.mxu0 0.0
  %3121 = vmatpush1.msra.mxu0 0.0
  %3122 = vmatprep.subr.mxu0 0.0
  %3123 = vmatpush1.msra.mxu0 0.0
  %3124 = vmatprep.subr.mxu0 0.0
  %3125 = vmatpush1.msra.mxu0 0.0
  %3126 = vmatprep.subr.mxu0 0.0
  %3127 = vmatpush1.msra.mxu0 0.0
  %3128 = vmatprep.subr.mxu0 0.0
  %3129 = vmatpush1.msra.mxu0 0.0
  %3130 = vmatprep.subr.mxu0 0.0
  %3131 = vmatpush1.msra.mxu0 0.0
  %3132 = vmatprep.subr.mxu0 0.0
  %3133 = vmatpush1.msra.mxu0 0.0
  %3134 = vmatprep.subr.mxu0 0.0
  %3135 = vmatpush1.msra.mxu0 0.0
  %3136 = vmatprep.subr.mxu0 0.0
  %3137 = vmatpush1.msra.mxu0 0.0
  %3138 = vmatprep.subr.mxu0 0.0
  %3139 = vmatpush1.msra.mxu0 0.0
  %3140 = vmatprep.subr.mxu0 0.0
  %3141 = vmatpush1.msra.mxu0 0.0
  %3142 = vmatprep.subr.mxu0 0.0
  %3143 = vmatpush1.msra.mxu0 0.0
  %3144 = vmatprep.subr.mxu0 0.0
  %3145 = vmatpush1.msra.mxu0 0.0
  %3146 = vmatprep.subr.mxu0 0.0
  %3147 = vmatpush1.msra.mxu0 0.0
  %3148 = vmatprep.subr.mxu0 0.0
  %3149 = vmatpush1.msra.mxu0 0.0
  %3150 = vmatprep.subr.mxu0 0.0
  %3151 = vmatpush1.msra.mxu0 0.0
  %3152 = vmatprep.subr.mxu0 0.0
  %3153 = vmatpush1.msra.mxu0 0.0
  %3154 = vmatprep.subr.mxu0 0.0
  %3155 = vmatpush1.msra.mxu0 0.0
  %3156 = vmatprep.subr.mxu0 0.0
  %3157 = vmatpush1.msra.mxu0 0.0
  %3158 = vmatprep.subr.mxu0 0.0
  %3159 = vmatpush1.msra.mxu0 0.0
  %3160 = vmatprep.subr.mxu0 0.0
  %3161 = vmatpush1.msra.mxu0 0.0
  %3162 = vmatprep.mubr.f32.mxu0 0.0
  %3163 = vmatmul.mubr.f32.gmra.mrb[0].mxu0 %v3096
  %v3164 = vpop.f32.mrb[0].mxu0
  %v3165 = vadd.f32 0.0, %v3164
  %v3166 = vpop.f32.mrb[0].mxu0
  %v3167 = vadd.f32 0.0, %v3166
  %3168 = vdwg.mxu0
  %v3169 = vadd.f32 %v2373, %v3165
  %v3170 = vxor.u32 %v3169, 2147483648
  %v3171 = vmul.f32 %v3170, 1.442695
  %v3172 = vpow.pop %v3171
  %v3173 = vadd.f32 %v3172, 1.0
  %v3174 = vrcp.pop %v3173
  %v3175 = vmul.f32 1.0, %v3174
  %v3176 = vadd.f32 %v3167, %v2457
  %v3177 = vmul.f32 %v3175, %v3176
  %v3178 = vadd.f32 %v2374, %v3177
  %v3179 = vtanh.pop %v3178
  %v3180 = vsub.f32 1.0, %v3175
  %3182 = vrot.lane.b32.xlu0 %v3179, 64
  %v3183 = vpop.permute.xlu0 %3182
  %v3185 = vmul.f32 %v3180, %v3183
  %3186 = vrot.lane.b32.xlu0 %v3094, 64
  %v3187 = vpop.permute.xlu0 %3186
  %v3189 = vmul.f32 %v3175, %v3187
  %v3190 = vadd.f32 %v3185, %v3189
  %3192 = vrot.lane.b32.xlu0 %v3190, 64
  %v3193 = vpop.permute.xlu0 %3192
  %v3195 = vmul.f32 %v161, %v3193
  %v3196 = vmul.f32 %v163, %v3094
  %v3197 = vadd.f32 %v3195, %v3196
  %s3198 = scalar_lea.vmem %s15, 16
  %3199 = vst.msk [vmem:[%s3198] sm:$0xff] %vm2161, %v3197
  %3201 = vrot.lane.b32.xlu0 %v3197, 96
  %v3202 = vpop.permute.xlu0 %3201
  %s3204 = scalar_lea.vmem %s15, 24
  %3205 = vst.msk [vmem:[%s3204] sm:$0xff] %vm2161, %v3202
  %v3206 = vmul.f32 %v97, %v2475
  %v3207 = vadd.f32 %v3206, 0.0
  %v3208 = vmul.f32 %v107, %v2577
  %v3209 = vadd.f32 %v3207, %v3208
  %v3210 = vmul.f32 %v117, %v2680
  %v3211 = vadd.f32 %v3209, %v3210
  %v3212 = vmul.f32 %v127, %v2783
  %v3213 = vadd.f32 %v3211, %v3212
  %v3214 = vmul.f32 %v137, %v2886
  %v3215 = vadd.f32 %v3213, %v3214
  %v3216 = vmul.f32 %v147, %v2989
  %v3217 = vadd.f32 %v3215, %v3216
  %v3218 = vmul.f32 %v157, %v3092
  %v3219 = vadd.f32 %v3217, %v3218
  %v3220 = vmul.f32 %v167, %v3195
  %v3221 = vadd.f32 %v3219, %v3220
  %v3222 = vld [vmem:[%s12] sm:$0x1]
  %v3224 = vlaneseq
  %v3225 = vshrl.u32 %v3224, 7
  %v3226 = vsub.s32 0, %v3225
  %v3227 = vrot.slane %v3222, %v3226
  %v3229 = vmul.f32 %v3221, %v3227
  %v3230 = vsel %vm1333, %v3229, 0.0
  %3231 = vadd.xlane.f32.xlu0 %v3230
  %v3232 = vpop.xlane.xlu0 %3231
  %v3233 = vld [vmem:[#allocation2] sm:$0x1]
  %v3235 = vlaneseq
  %v3236 = vshrl.u32 %v3235, 7
  %v3237 = vsub.s32 0, %v3236
  %v3238 = vrot.slane %v3233, %v3237
  %v3240 = vadd.f32 %v3232, %v3238
  %vm3241 = vcmask 7168
  %3242 = vst.msk [vmem:[%s14] sm:$0xff] %vm3241, %v3240
  // Predicated region
  $region58: #{embedding_gru_forward.1} parent=0 // pred_check
    _
  $region59: #{embedding_gru_forward.1} parent=0 // pred_check_branch
    %3244 = sbr.rel (0) target = $region61
  $region60: #{embedding_gru_forward.1} parent=0 // pred_region
    _
  $region61: #{embedding_gru_forward.1} parent=0 // pred_fallthru
    _
  // Predicated region
  $region62: #{embedding_gru_forward.1} parent=0 // pred_check
    _
  $region63: #{embedding_gru_forward.1} parent=0 // pred_check_branch
    %3246 = sbr.rel (0) target = $region65
  $region64: #{embedding_gru_forward.1} parent=0 // pred_region
    _
  $region65: #{embedding_gru_forward.1} parent=0 // pred_fallthru
    _
  // Predicated region
  $region66: #{embedding_gru_forward.1} parent=0 // pred_check
    _
  $region67: #{embedding_gru_forward.1} parent=0 // pred_check_branch
    %3248 = sbr.rel (0) target = $region69
  $region68: #{embedding_gru_forward.1} parent=0 // pred_region
    _
  $region69: #{embedding_gru_forward.1} parent=0 // pred_fallthru
    _
  // Predicated region
  $region70: #{embedding_gru_forward.1} parent=0 // pred_check
    _
  $region71: #{embedding_gru_forward.1} parent=0 // pred_check_branch
    %3250 = sbr.rel (0) target = $region73
  $region72: #{embedding_gru_forward.1} parent=0 // pred_region
    _
  $region73: #{embedding_gru_forward.1} parent=0 // pred_fallthru
    _

</llo_original>
